<compile_context>
chip_gen: v5e
topology: v5e:2x2
jax: 0.10.0
libtpu: 0.0.40
codegen_flags: <defaults>
</compile_context>

<pallas_src>
import functools

import numpy as np

import jax
import jax.numpy as jnp
from jax.experimental import pallas as pl
from jax.experimental.pallas import tpu as pltpu


def _round_up(x, m):
    return ((x + m - 1) // m) * m


# ----------------------------------------------------------------------------
# Fused kernel: masked aggregation (MXU selection matmuls) + MLP head +
# NeuS alpha / eikonal epilogue.
# ----------------------------------------------------------------------------
def _agg_mlp_alpha_kernel(scal_ref, slab_ref, me_ref, sel_ref,
                          w1_ref, b1_ref, w2_ref, b2_ref, out_ref, *, c_raw):
    inv_s = scal_ref[0]                       # SMEM scalars: [inv_s, ratio]
    ratio = scal_ref[1]

    slab = slab_ref[...]                      # (TN, CS) bf16
    cs = slab.shape[-1]
    qdir = slab[:, cs - 4:cs - 1].astype(jnp.float32)   # (TN, 3)
    dists = slab[:, cs - 1:cs].astype(jnp.float32)      # (TN, 1)

    # --- masked aggregation over reference views, on the MXU -----------------
    # mask_exp[:, v*47 + j] = mask_v ; tail (qdir/dists) columns -> 0.
    mask_exp = jnp.dot(slab, me_ref[...],
                       preferred_element_type=jnp.float32).astype(jnp.bfloat16)
    slab_masked = slab * mask_exp             # exact: mask is 0/1
    # agg = [sum_v m*raw (c_raw) | sum_v m*dir (3) | 0 (dot slot) | sum_v m (1)]
    agg = jnp.dot(slab_masked, sel_ref[...], preferred_element_type=jnp.float32)

    agg_dir = agg[:, c_raw:c_raw + 3]
    msum = agg[:, c_raw + 4:c_raw + 5]
    dir_diff = agg_dir - msum * qdir                          # sum m*(dir-qdir)
    dir_dot = jnp.sum(agg_dir * qdir, axis=-1, keepdims=True)  # sum m*(dir.qdir)
    denom = 1.0 / jnp.maximum(msum, 1.0)      # exact masked-mean denominator
    a = jnp.concatenate([agg[:, :c_raw], dir_diff, dir_dot, msum],
                        axis=-1) * denom      # (TN, 48)

    # --- 2-layer MLP head -----------------------------------------------------
    h = jnp.maximum(
        jnp.dot(a, w1_ref[...], preferred_element_type=jnp.float32)
        + b1_ref[...], 0.0)
    out8 = (jnp.dot(h, w2_ref[...], preferred_element_type=jnp.float32)
            + b2_ref[...])                    # [r, g, b, sdf, gx, gy, gz, pad]

    # --- NeuS alpha + eikonal epilogue (pointwise, fused) ---------------------
    sdf = out8[:, 3:4]
    grad = out8[:, 4:7]
    true_cos = -jnp.sum(qdir * grad, axis=-1, keepdims=True)
    iter_cos = -(jnp.maximum(-true_cos * 0.5 + 0.5, 0.0) * (1.0 - ratio)
                 + jnp.maximum(-true_cos, 0.0) * ratio)
    half = iter_cos * dists * 0.5
    prev_cdf = jax.nn.sigmoid((sdf - half) * inv_s)
    next_cdf = jax.nn.sigmoid((sdf + half) * inv_s)
    p = prev_cdf - next_cdf
    alpha = jnp.clip((p + 1e-5) / (prev_cdf + 1e-5), 0.0, 1.0)
    gnorm = jnp.sqrt(jnp.sum(grad * grad, axis=-1, keepdims=True))
    eik = (gnorm - 1.0) ** 2                  # per-sample eikonal term

    # [r, g, b, sdf, alpha, eik]
    out_ref[...] = jnp.concatenate([out8[:, :4], alpha, eik], axis=-1)


def agg_mlp_alpha_call(params, scalars, slab, me, sel, *, c_raw, tile_n=2048):
    n, c_slab = slab.shape
    c_agg, hidden = params['w1'].shape

    tile_n = min(tile_n, _round_up(n, 8))
    n_pad = _round_up(n, tile_n)
    if n_pad != n:
        slab = jnp.pad(slab, ((0, n_pad - n), (0, 0)))        # mask=0 rows

    kernel = functools.partial(_agg_mlp_alpha_kernel, c_raw=c_raw)
    out = pl.pallas_call(
        kernel,
        out_shape=jax.ShapeDtypeStruct((n_pad, 6), jnp.float32),
        grid=(n_pad // tile_n,),
        in_specs=[
            pl.BlockSpec(memory_space=pltpu.MemorySpace.SMEM),  # [inv_s, ratio]
            pl.BlockSpec((tile_n, c_slab), lambda i: (i, 0)),   # bf16 slab
            pl.BlockSpec((c_slab, c_slab), lambda i: (0, 0)),   # mask expansion
            pl.BlockSpec((c_slab, c_agg), lambda i: (0, 0)),    # channel select
            pl.BlockSpec((c_agg, hidden), lambda i: (0, 0)),    # w1
            pl.BlockSpec((1, hidden), lambda i: (0, 0)),        # b1
            pl.BlockSpec((hidden, 8), lambda i: (0, 0)),        # w2
            pl.BlockSpec((1, 8), lambda i: (0, 0)),             # b2
        ],
        out_specs=pl.BlockSpec((tile_n, 6), lambda i: (i, 0)),
        compiler_params=pltpu.CompilerParams(
            dimension_semantics=("parallel",)),
    )(scalars, slab, me, sel,
      params['w1'], params['b1'], params['w2'], params['b2'])
    return out[:n]


# ----------------------------------------------------------------------------
# Constant 0/1 selection matrices (built once per shape in the wrapper).
# ----------------------------------------------------------------------------
def _build_selection_matrices(rfn, c_raw):
    c_view = c_raw + 4                    # raw | dir(3) | mask(1)
    c_slab = rfn * c_view + 4             # + que_dir(3) + que_dists(1)
    c_agg = c_raw + 5                     # raw | dir_diff(3) | dot(1) | msum(1)
    me = np.zeros((c_slab, c_slab), np.float32)
    sel = np.zeros((c_slab, c_agg), np.float32)
    for v in range(rfn):
        o = v * c_view
        m = o + c_view - 1                # mask column of view v
        me[m, o:o + c_view] = 1.0         # broadcast mask over view's channels
        for j in range(c_raw):
            sel[o + j, j] = 1.0           # raw channels -> cols [0, c_raw)
        for j in range(3):
            sel[o + c_raw + j, c_raw + j] = 1.0   # dir channels -> cols c_raw..+2
        sel[m, c_agg - 1] = 1.0           # mask -> msum column (mask^2 == mask)
    return (jnp.asarray(me, jnp.bfloat16), jnp.asarray(sel, jnp.bfloat16),
            c_slab, c_agg)


# ----------------------------------------------------------------------------
# Parameter init (deterministic, synthetic, pre-packed) + forward pass.
# ----------------------------------------------------------------------------
def init_params(key, *, c_img=32, c_res=8, hidden=32, init_s=0.3):
    k1, k2 = jax.random.split(key, 2)
    c_in = 3 + c_img + c_res + 3 + 1 + 1  # rgb, img, res, dir_diff, dot, msum
    w1 = (jax.random.normal(k1, (c_in, hidden), jnp.float32)
          * (1.0 / jnp.sqrt(jnp.float32(c_in))))
    w2 = (jax.random.normal(k2, (hidden, 8), jnp.float32)
          * (1.0 / jnp.sqrt(jnp.float32(hidden))))
    w2 = w2.at[:, 7].set(0.0)             # padded output channel is dead
    return {
        'w1': w1,                                    # (48, hidden)
        'b1': jnp.zeros((1, hidden), jnp.float32),
        'w2': w2,                                    # (hidden, 8): rgb|sdf|grad|pad
        'b2': jnp.zeros((1, 8), jnp.float32),
        # SingleVarianceNetwork parameter (init_s = 0.3, fix_s default)
        'variance': jnp.asarray(init_s, jnp.float32),
    }


def neus_aggregation_forward(params, prj_dict, que_dir, que_pts, que_dists,
                             feature_volume, residual_volume,
                             is_train=False, cos_anneal_ratio=1.0):
    del que_pts, feature_volume, residual_volume, is_train  # unused by stand-in
    f32 = jnp.float32
    rfn, qn, rn, dn, _ = prj_dict['rgb'].shape
    c_img = prj_dict['img_feats'].shape[-1]
    c_res = prj_dict['residual_feats'].shape[-1]
    c_raw = 3 + c_img + c_res
    n = qn * rn * dn

    def to_nrf(x):  # (rfn, qn, rn, dn, C) -> (N, rfn, C), mirrors _get_embedding
        c = x.shape[-1]
        x = x.reshape(rfn, qn * rn, dn, c)
        x = jnp.transpose(x, (1, 2, 0, 3))
        return x.reshape(n, rfn, c)

    # TODO(synk): this repack materializes the full (N, rfn*47+4) slab in HBM;
    # if the upstream producer could emit this layout (or a pre-aggregated
    # 48-wide slab) directly, a full HBM read+write would be saved.
    per_view = jnp.concatenate(
        [to_nrf(prj_dict['rgb'].astype(f32)),
         to_nrf(prj_dict['img_feats'].astype(f32)),
         to_nrf(prj_dict['residual_feats'].astype(f32)),
         to_nrf(prj_dict['dir'].astype(f32)),
         to_nrf(prj_dict['mask'].astype(f32))], axis=-1)      # (N, rfn, 47)
    qdir_flat = que_dir.reshape(n, 3).astype(f32)
    if que_dists is None:
        dists_flat = jnp.zeros((n, 1), f32)
    else:
        dists_flat = que_dists.reshape(n, 1).astype(f32)      # per-sample dists
    slab = jnp.concatenate(
        [per_view.reshape(n, -1), qdir_flat, dists_flat],
        axis=-1).astype(jnp.bfloat16)                          # (N, rfn*47 + 4)

    me, sel, c_slab, c_agg = _build_selection_matrices(rfn, c_raw)
    assert slab.shape[-1] == c_slab and params['w1'].shape[0] == c_agg

    # deviation network: inv_s = exp(variance * 10), clipped as in the module
    inv_s = jnp.clip(jnp.exp(params['variance'] * 10.0), 1e-6, 1e6)
    scalars = jnp.stack(
        [inv_s.astype(f32), jnp.asarray(cos_anneal_ratio, f32)])  # (2,) SMEM

    out6 = agg_mlp_alpha_call(params, scalars, slab, me, sel, c_raw=c_raw)
    colors = out6[:, :3].reshape(qn, rn, dn, 3)
    sdf = out6[:, 3].reshape(qn, rn, dn)

    if que_dists is None:
        return None, sdf, colors, None, None

    alpha = out6[:, 4].reshape(qn, rn, dn)
    grad_error = jnp.mean(out6[:, 5]).reshape(1, 1)            # mean eikonal
    return alpha, sdf, colors, grad_error, params['variance'].reshape(1, 1)


if __name__ == "__main__":
    key = jax.random.PRNGKey(0)
    rfn, qn, rn, dn = 3, 1, 8, 16          # small shapes; sample_num stand-in dn=16
    c_img, c_res, hidden = 32, 8, 32       # neuray_dim = 32

    kp, *kd = jax.random.split(key, 12)
    params = init_params(kp, c_img=c_img, c_res=c_res, hidden=hidden, init_s=0.3)

    def unit(v):
        return v / jnp.linalg.norm(v, axis=-1, keepdims=True)

    prj_dict = {
        'rgb': jax.random.uniform(kd[0], (rfn, qn, rn, dn, 3), jnp.float32),
        'dir': unit(jax.random.normal(kd[1], (rfn, qn, rn, dn, 3), jnp.float32)),
        'mask': jax.random.uniform(kd[2], (rfn, qn, rn, dn, 1)) > 0.3,
        'img_feats': jax.random.normal(kd[3], (rfn, qn, rn, dn, c_img), jnp.float32),
        'residual_feats': jax.random.normal(kd[4], (rfn, qn, rn, dn, c_res), jnp.float32),
    }
    que_dir = unit(jax.random.normal(kd[5], (qn, rn, dn, 3), jnp.float32))
    que_pts = jax.random.normal(kd[6], (qn, rn, dn, 3), jnp.float32)
    que_dists = 0.01 + 0.05 * jax.random.uniform(kd[7], (qn, rn, dn), jnp.float32)
    feature_volume = jax.random.normal(kd[8], (1, 8, 8, 8, 8), jnp.float32)
    residual_volume = jax.random.normal(kd[9], (1, 8, 8, 8, 8), jnp.float32)

    fwd = jax.jit(functools.partial(neus_aggregation_forward,
                                    is_train=False, cos_anneal_ratio=1.0))
    alpha, sdf_o, colors_o, grad_error, variance = fwd(
        params, prj_dict, que_dir, que_pts, que_dists,
        feature_volume, residual_volume)

    jax.block_until_ready((alpha, sdf_o, colors_o, grad_error, variance))
    assert alpha.shape == (qn, rn, dn)
    assert sdf_o.shape == (qn, rn, dn)
    assert colors_o.shape == (qn, rn, dn, 3)
    assert grad_error.shape == (1, 1)
    assert variance.shape == (1, 1)
    assert bool(jnp.all(jnp.isfinite(alpha)))
    assert bool(jnp.all(alpha >= 0.0) and jnp.all(alpha <= 1.0))
    assert bool(jnp.isfinite(grad_error[0, 0]))
    print("KERNEL_OK")
</pallas_src>

<mosaic_0001>
module attributes {stable_mosaic.version = 11 : i64} {
  func.func @_agg_mlp_alpha_kernel(%arg0: i32, %arg1: memref<2xf32, #tpu.memory_space<smem>>, %arg2: memref<128x145xbf16, #tpu.memory_space<vmem>>, %arg3: memref<145x145xbf16, #tpu.memory_space<vmem>>, %arg4: memref<145x48xbf16, #tpu.memory_space<vmem>>, %arg5: memref<48x32xf32, #tpu.memory_space<vmem>>, %arg6: memref<1x32xf32, #tpu.memory_space<vmem>>, %arg7: memref<32x8xf32, #tpu.memory_space<vmem>>, %arg8: memref<1x8xf32, #tpu.memory_space<vmem>>, %arg9: memref<128x6xf32, #tpu.memory_space<vmem>>) attributes {dimension_semantics = [#tpu.dimension_semantics<parallel>], iteration_bounds = array<i64: 1>, scalar_prefetch = 0 : i64, scratch_operands = 0 : i64, tpu.core_type = #tpu.core_type<tc>, window_params = [{transform_indices = @transform_0, window_bounds = array<i64: 2>}, {transform_indices = @transform_1, window_bounds = array<i64: 128, 145>}, {pipeline_mode = #tpu.pipeline_mode<synchronous>, transform_indices = @transform_2, window_bounds = array<i64: 145, 145>}, {pipeline_mode = #tpu.pipeline_mode<synchronous>, transform_indices = @transform_3, window_bounds = array<i64: 145, 48>}, {pipeline_mode = #tpu.pipeline_mode<synchronous>, transform_indices = @transform_4, window_bounds = array<i64: 48, 32>}, {pipeline_mode = #tpu.pipeline_mode<synchronous>, transform_indices = @transform_5, window_bounds = array<i64: 1, 32>}, {pipeline_mode = #tpu.pipeline_mode<synchronous>, transform_indices = @transform_6, window_bounds = array<i64: 32, 8>}, {pipeline_mode = #tpu.pipeline_mode<synchronous>, transform_indices = @transform_7, window_bounds = array<i64: 1, 8>}, {transform_indices = @transform_8, window_bounds = array<i64: 128, 6>}]} {
    %c0 = arith.constant 0 : index
    %0 = memref.load %arg1[%c0] : memref<2xf32, #tpu.memory_space<smem>>
    %c1 = arith.constant 1 : index
    %1 = memref.load %arg1[%c1] : memref<2xf32, #tpu.memory_space<smem>>
    %c0_0 = arith.constant 0 : index
    %c0_1 = arith.constant 0 : index
    %2 = vector.load %arg2[%c0_0, %c0_1] : memref<128x145xbf16, #tpu.memory_space<vmem>>, vector<128x145xbf16>
    %3 = vector.extract_strided_slice %2 {offsets = [0, 141], sizes = [128, 3], strides = [1, 1]} : vector<128x145xbf16> to vector<128x3xbf16>
    %4 = arith.extf %3 : vector<128x3xbf16> to vector<128x3xf32>
    %5 = vector.extract_strided_slice %2 {offsets = [0, 144], sizes = [128, 1], strides = [1, 1]} : vector<128x145xbf16> to vector<128x1xbf16>
    %6 = arith.extf %5 : vector<128x1xbf16> to vector<128x1xf32>
    %c0_2 = arith.constant 0 : index
    %c0_3 = arith.constant 0 : index
    %7 = vector.load %arg3[%c0_2, %c0_3] : memref<145x145xbf16, #tpu.memory_space<vmem>>, vector<145x145xbf16>
    %cst = arith.constant dense<0.000000e+00> : vector<128x145xf32>
    %8 = tpu.matmul %2, %7, %cst {dimension_numbers = #tpu.dot_dimension_numbers<[1], [0], [0], [1], [0, 0, 1, 1], [], []>} : vector<128x145xbf16>, vector<145x145xbf16>, vector<128x145xf32> -> vector<128x145xf32>
    %9 = arith.truncf %8 : vector<128x145xf32> to vector<128x145xbf16>
    %10 = arith.mulf %2, %9 : vector<128x145xbf16>
    %c0_4 = arith.constant 0 : index
    %c0_5 = arith.constant 0 : index
    %11 = vector.load %arg4[%c0_4, %c0_5] : memref<145x48xbf16, #tpu.memory_space<vmem>>, vector<145x48xbf16>
    %cst_6 = arith.constant dense<0.000000e+00> : vector<128x48xf32>
    %12 = tpu.matmul %10, %11, %cst_6 {dimension_numbers = #tpu.dot_dimension_numbers<[1], [0], [0], [1], [0, 0, 1, 1], [], []>} : vector<128x145xbf16>, vector<145x48xbf16>, vector<128x48xf32> -> vector<128x48xf32>
    %13 = vector.extract_strided_slice %12 {offsets = [0, 43], sizes = [128, 3], strides = [1, 1]} : vector<128x48xf32> to vector<128x3xf32>
    %14 = vector.extract_strided_slice %12 {offsets = [0, 47], sizes = [128, 1], strides = [1, 1]} : vector<128x48xf32> to vector<128x1xf32>
    %15 = vector.broadcast %14 : vector<128x1xf32> to vector<128x3xf32>
    %16 = arith.mulf %15, %4 : vector<128x3xf32>
    %17 = arith.subf %13, %16 : vector<128x3xf32>
    %18 = arith.mulf %13, %4 : vector<128x3xf32>
    %cst_7 = arith.constant dense<0.000000e+00> : vector<128xf32>
    %19 = vector.multi_reduction <add>, %18, %cst_7 [1] : vector<128x3xf32> to vector<128xf32>
    %20 = vector.shape_cast %19 : vector<128xf32> to vector<128x1xf32>
    %cst_8 = arith.constant 1.000000e+00 : f32
    %21 = vector.broadcast %cst_8 : f32 to vector<128x1xf32>
    %22 = arith.maximumf %14, %21 : vector<128x1xf32>
    %cst_9 = arith.constant 1.000000e+00 : f32
    %23 = vector.broadcast %cst_9 : f32 to vector<128x1xf32>
    %24 = arith.divf %23, %22 : vector<128x1xf32>
    %25 = vector.extract_strided_slice %12 {offsets = [0, 0], sizes = [128, 43], strides = [1, 1]} : vector<128x48xf32> to vector<128x43xf32>
    %26 = tpu.concatenate %25, %17, %20, %14 in 1 : vector<128x43xf32>, vector<128x3xf32>, vector<128x1xf32>, vector<128x1xf32> -> vector<128x48xf32>
    %27 = vector.broadcast %24 : vector<128x1xf32> to vector<128x48xf32>
    %28 = arith.mulf %26, %27 : vector<128x48xf32>
    %c0_10 = arith.constant 0 : index
    %c0_11 = arith.constant 0 : index
    %29 = vector.load %arg5[%c0_10, %c0_11] : memref<48x32xf32, #tpu.memory_space<vmem>>, vector<48x32xf32>
    %cst_12 = arith.constant dense<0.000000e+00> : vector<128x32xf32>
    %30 = tpu.matmul %28, %29, %cst_12 {dimension_numbers = #tpu.dot_dimension_numbers<[1], [0], [0], [1], [0, 0, 1, 1], [], []>} : vector<128x48xf32>, vector<48x32xf32>, vector<128x32xf32> -> vector<128x32xf32>
    %c0_13 = arith.constant 0 : index
    %c0_14 = arith.constant 0 : index
    %31 = vector.load %arg6[%c0_13, %c0_14] : memref<1x32xf32, #tpu.memory_space<vmem>>, vector<1x32xf32>
    %32 = vector.broadcast %31 : vector<1x32xf32> to vector<128x32xf32>
    %33 = arith.addf %30, %32 : vector<128x32xf32>
    %cst_15 = arith.constant 0.000000e+00 : f32
    %34 = vector.broadcast %cst_15 : f32 to vector<128x32xf32>
    %35 = arith.maximumf %33, %34 : vector<128x32xf32>
    %c0_16 = arith.constant 0 : index
    %c0_17 = arith.constant 0 : index
    %36 = vector.load %arg7[%c0_16, %c0_17] : memref<32x8xf32, #tpu.memory_space<vmem>>, vector<32x8xf32>
    %cst_18 = arith.constant dense<0.000000e+00> : vector<128x8xf32>
    %37 = tpu.matmul %35, %36, %cst_18 {dimension_numbers = #tpu.dot_dimension_numbers<[1], [0], [0], [1], [0, 0, 1, 1], [], []>} : vector<128x32xf32>, vector<32x8xf32>, vector<128x8xf32> -> vector<128x8xf32>
    %c0_19 = arith.constant 0 : index
    %c0_20 = arith.constant 0 : index
    %38 = vector.load %arg8[%c0_19, %c0_20] : memref<1x8xf32, #tpu.memory_space<vmem>>, vector<1x8xf32>
    %39 = vector.broadcast %38 : vector<1x8xf32> to vector<128x8xf32>
    %40 = arith.addf %37, %39 : vector<128x8xf32>
    %41 = vector.extract_strided_slice %40 {offsets = [0, 3], sizes = [128, 1], strides = [1, 1]} : vector<128x8xf32> to vector<128x1xf32>
    %42 = vector.extract_strided_slice %40 {offsets = [0, 4], sizes = [128, 3], strides = [1, 1]} : vector<128x8xf32> to vector<128x3xf32>
    %43 = arith.mulf %4, %42 : vector<128x3xf32>
    %cst_21 = arith.constant dense<0.000000e+00> : vector<128xf32>
    %44 = vector.multi_reduction <add>, %43, %cst_21 [1] : vector<128x3xf32> to vector<128xf32>
    %45 = vector.shape_cast %44 : vector<128xf32> to vector<128x1xf32>
    %cst_22 = arith.constant 0.000000e+00 : f32
    %46 = vector.broadcast %cst_22 : f32 to vector<128x1xf32>
    %47 = arith.subf %46, %45 : vector<128x1xf32>
    %cst_23 = arith.constant 0.000000e+00 : f32
    %48 = vector.broadcast %cst_23 : f32 to vector<128x1xf32>
    %49 = arith.subf %48, %47 : vector<128x1xf32>
    %cst_24 = arith.constant 5.000000e-01 : f32
    %50 = vector.broadcast %cst_24 : f32 to vector<128x1xf32>
    %51 = arith.mulf %49, %50 : vector<128x1xf32>
    %cst_25 = arith.constant 5.000000e-01 : f32
    %52 = vector.broadcast %cst_25 : f32 to vector<128x1xf32>
    %53 = arith.addf %51, %52 : vector<128x1xf32>
    %cst_26 = arith.constant 0.000000e+00 : f32
    %54 = vector.broadcast %cst_26 : f32 to vector<128x1xf32>
    %55 = arith.maximumf %53, %54 : vector<128x1xf32>
    %cst_27 = arith.constant 1.000000e+00 : f32
    %56 = arith.subf %cst_27, %1 : f32
    %57 = vector.broadcast %56 : f32 to vector<128x1xf32>
    %58 = arith.mulf %55, %57 : vector<128x1xf32>
    %cst_28 = arith.constant 0.000000e+00 : f32
    %59 = vector.broadcast %cst_28 : f32 to vector<128x1xf32>
    %60 = arith.subf %59, %47 : vector<128x1xf32>
    %cst_29 = arith.constant 0.000000e+00 : f32
    %61 = vector.broadcast %cst_29 : f32 to vector<128x1xf32>
    %62 = arith.maximumf %60, %61 : vector<128x1xf32>
    %63 = vector.broadcast %1 : f32 to vector<128x1xf32>
    %64 = arith.mulf %62, %63 : vector<128x1xf32>
    %65 = arith.addf %58, %64 : vector<128x1xf32>
    %cst_30 = arith.constant 0.000000e+00 : f32
    %66 = vector.broadcast %cst_30 : f32 to vector<128x1xf32>
    %67 = arith.subf %66, %65 : vector<128x1xf32>
    %68 = arith.mulf %67, %6 : vector<128x1xf32>
    %cst_31 = arith.constant 5.000000e-01 : f32
    %69 = vector.broadcast %cst_31 : f32 to vector<128x1xf32>
    %70 = arith.mulf %68, %69 : vector<128x1xf32>
    %71 = arith.subf %41, %70 : vector<128x1xf32>
    %72 = vector.broadcast %0 : f32 to vector<128x1xf32>
    %73 = arith.mulf %71, %72 : vector<128x1xf32>
    %74 = arith.negf %73 : vector<128x1xf32>
    %75 = math.exp %74 : vector<128x1xf32>
    %cst_32 = arith.constant 1.000000e+00 : f32
    %76 = vector.broadcast %cst_32 : f32 to vector<128x1xf32>
    %77 = arith.addf %76, %75 : vector<128x1xf32>
    %78 = arith.divf %76, %77 : vector<128x1xf32>
    %79 = arith.addf %41, %70 : vector<128x1xf32>
    %80 = vector.broadcast %0 : f32 to vector<128x1xf32>
    %81 = arith.mulf %79, %80 : vector<128x1xf32>
    %82 = arith.negf %81 : vector<128x1xf32>
    %83 = math.exp %82 : vector<128x1xf32>
    %cst_33 = arith.constant 1.000000e+00 : f32
    %84 = vector.broadcast %cst_33 : f32 to vector<128x1xf32>
    %85 = arith.addf %84, %83 : vector<128x1xf32>
    %86 = arith.divf %84, %85 : vector<128x1xf32>
    %87 = arith.subf %78, %86 : vector<128x1xf32>
    %cst_34 = arith.constant 9.99999974E-6 : f32
    %88 = vector.broadcast %cst_34 : f32 to vector<128x1xf32>
    %89 = arith.addf %87, %88 : vector<128x1xf32>
    %cst_35 = arith.constant 9.99999974E-6 : f32
    %90 = vector.broadcast %cst_35 : f32 to vector<128x1xf32>
    %91 = arith.addf %78, %90 : vector<128x1xf32>
    %92 = arith.divf %89, %91 : vector<128x1xf32>
    %cst_36 = arith.constant 0.000000e+00 : f32
    %cst_37 = arith.constant 1.000000e+00 : f32
    %93 = vector.broadcast %cst_36 : f32 to vector<128x1xf32>
    %94 = arith.maximumf %93, %92 : vector<128x1xf32>
    %95 = vector.broadcast %cst_37 : f32 to vector<128x1xf32>
    %96 = arith.minimumf %95, %94 : vector<128x1xf32>
    %97 = arith.mulf %42, %42 : vector<128x3xf32>
    %cst_38 = arith.constant dense<0.000000e+00> : vector<128xf32>
    %98 = vector.multi_reduction <add>, %97, %cst_38 [1] : vector<128x3xf32> to vector<128xf32>
    %99 = vector.shape_cast %98 : vector<128xf32> to vector<128x1xf32>
    %100 = math.sqrt %99 : vector<128x1xf32>
    %cst_39 = arith.constant 1.000000e+00 : f32
    %101 = vector.broadcast %cst_39 : f32 to vector<128x1xf32>
    %102 = arith.subf %100, %101 : vector<128x1xf32>
    %103 = arith.mulf %102, %102 : vector<128x1xf32>
    %104 = vector.extract_strided_slice %40 {offsets = [0, 0], sizes = [128, 4], strides = [1, 1]} : vector<128x8xf32> to vector<128x4xf32>
    %105 = tpu.concatenate %104, %96, %103 in 1 : vector<128x4xf32>, vector<128x1xf32>, vector<128x1xf32> -> vector<128x6xf32>
    %c0_40 = arith.constant 0 : index
    %c0_41 = arith.constant 0 : index
    %106 = vector.load %arg9[%c0_40, %c0_41] : memref<128x6xf32, #tpu.memory_space<vmem>>, vector<128x6xf32>
    tpu.vector_store %arg9[%c0_40, %c0_41], %105 {strides = array<i32>} : memref<128x6xf32, #tpu.memory_space<vmem>>, vector<128x6xf32>,
    return
  }
  func.func @transform_0(%arg0: i32) -> i32 {
    %c0_i32 = arith.constant 0 : i32
    %c0_i32_0 = arith.constant 0 : i32
    return %c0_i32 : i32
  }
  func.func @transform_1(%arg0: i32) -> (i32, i32) {
    %c0_i32 = arith.constant 0 : i32
    %c0_i32_0 = arith.constant 0 : i32
    return %arg0, %c0_i32 : i32, i32
  }
  func.func @transform_2(%arg0: i32) -> (i32, i32) {
    %c0_i32 = arith.constant 0 : i32
    %c0_i32_0 = arith.constant 0 : i32
    %c0_i32_1 = arith.constant 0 : i32
    return %c0_i32, %c0_i32_0 : i32, i32
  }
  func.func @transform_3(%arg0: i32) -> (i32, i32) {
    %c0_i32 = arith.constant 0 : i32
    %c0_i32_0 = arith.constant 0 : i32
    %c0_i32_1 = arith.constant 0 : i32
    return %c0_i32, %c0_i32_0 : i32, i32
  }
  func.func @transform_4(%arg0: i32) -> (i32, i32) {
    %c0_i32 = arith.constant 0 : i32
    %c0_i32_0 = arith.constant 0 : i32
    %c0_i32_1 = arith.constant 0 : i32
    return %c0_i32, %c0_i32_0 : i32, i32
  }
  func.func @transform_5(%arg0: i32) -> (i32, i32) {
    %c0_i32 = arith.constant 0 : i32
    %c0_i32_0 = arith.constant 0 : i32
    %c0_i32_1 = arith.constant 0 : i32
    return %c0_i32, %c0_i32_0 : i32, i32
  }
  func.func @transform_6(%arg0: i32) -> (i32, i32) {
    %c0_i32 = arith.constant 0 : i32
    %c0_i32_0 = arith.constant 0 : i32
    %c0_i32_1 = arith.constant 0 : i32
    return %c0_i32, %c0_i32_0 : i32, i32
  }
  func.func @transform_7(%arg0: i32) -> (i32, i32) {
    %c0_i32 = arith.constant 0 : i32
    %c0_i32_0 = arith.constant 0 : i32
    %c0_i32_1 = arith.constant 0 : i32
    return %c0_i32, %c0_i32_0 : i32, i32
  }
  func.func @transform_8(%arg0: i32) -> (i32, i32) {
    %c0_i32 = arith.constant 0 : i32
    %c0_i32_0 = arith.constant 0 : i32
    return %arg0, %c0_i32 : i32, i32
  }
}

</mosaic_0001>

<llo_original>
// kernel: squeeze.3
$region0: #{squeeze.3}
  %s0 = inlined_call_operand.vmem [shape: f32[128], index: 0, kind: input, shape index: {}]
  %s1 = inlined_call_operand.hbm [shape: f32[1,8,16], index: 1, kind: output, shape index: {}]
  $region1: #{squeeze.3} parent=0
    #allocation0 [shape = 'u8[4096]{0}', space=vmem, size = 0x1000, scoped, tag = 'operand span for operand 1']
    #allocation1 [shape = 's32[1]{0}', space=sflag, size = 0x4, scoped, tag = 'scoped memory for squeeze.3']
    #allocation2 [shape = 'u8[4096]{0}', space=vmem, size = 0x1000, scoped, tag = 'scoped mem for input reshape']
    %2 = vsyncpa [#allocation1], 0
    %s4 = ssub.s32 2, 1
    %v5 = vld [vmem:[%s0] sm:%s4]
    %6 = vst [vmem:[#allocation2] sm:%s4] %v5
    %v7 = vld [vmem:[#allocation2] sm:$0x1]
    %vm8 = vcmask 130048
    %9 = vst.msk [vmem:[#allocation0] sm:$0x1] %vm8, %v7
    %v10 = vld [vmem:[#allocation2] sm:$0x1]
    %11 = vrot.lane.b32.xlu0 %v10, 112
    %v12 = vpop.permute.xlu0 %11
    %vm13 = vcmask 130048
    %s14 = scalar_lea.vmem [#allocation0], 1
    %15 = vst.msk [vmem:[%s14] sm:$0x1] %vm13, %v12
    %v16 = vld [vmem:[#allocation2] sm:$0x1]
    %17 = vrot.lane.b32.xlu0 %v16, 96
    %v18 = vpop.permute.xlu0 %17
    %vm19 = vcmask 130048
    %s20 = scalar_lea.vmem [#allocation0], 2
    %21 = vst.msk [vmem:[%s20] sm:$0x1] %vm19, %v18
    %v22 = vld [vmem:[#allocation2] sm:$0x1]
    %23 = vrot.lane.b32.xlu0 %v22, 80
    %v24 = vpop.permute.xlu0 %23
    %vm25 = vcmask 130048
    %s26 = scalar_lea.vmem [#allocation0], 3
    %27 = vst.msk [vmem:[%s26] sm:$0x1] %vm25, %v24
    %v28 = vld [vmem:[#allocation2] sm:$0x1]
    %29 = vrot.lane.b32.xlu0 %v28, 64
    %v30 = vpop.permute.xlu0 %29
    %vm31 = vcmask 130048
    %s32 = scalar_lea.vmem [#allocation0], 4
    %33 = vst.msk [vmem:[%s32] sm:$0x1] %vm31, %v30
    %v34 = vld [vmem:[#allocation2] sm:$0x1]
    %35 = vrot.lane.b32.xlu0 %v34, 48
    %v36 = vpop.permute.xlu0 %35
    %vm37 = vcmask 130048
    %s38 = scalar_lea.vmem [#allocation0], 5
    %39 = vst.msk [vmem:[%s38] sm:$0x1] %vm37, %v36
    %v40 = vld [vmem:[#allocation2] sm:$0x1]
    %41 = vrot.lane.b32.xlu0 %v40, 32
    %v42 = vpop.permute.xlu0 %41
    %vm43 = vcmask 130048
    %s44 = scalar_lea.vmem [#allocation0], 6
    %45 = vst.msk [vmem:[%s44] sm:$0x1] %vm43, %v42
    %v46 = vld [vmem:[#allocation2] sm:$0x1]
    %47 = vrot.lane.b32.xlu0 %v46, 16
    %v48 = vpop.permute.xlu0 %47
    %vm49 = vcmask 130048
    %s50 = scalar_lea.vmem [#allocation0], 7
    %51 = vst.msk [vmem:[%s50] sm:$0x1] %vm49, %v48
    %53 = vsyncadd [#allocation1], 0
    %s55 = sshll.u32 [#allocation0], 4
    %s56 = int_to_ptr.vmem [resolvable:$true] %s55
    %s57 = sshll.u32 %s1, 4
    %s58 = int_to_ptr.hbm [resolvable:$true] %s57
    %60 = dma.vmem_to_hbm [thread:$0]  %s56, 128, %s58, [#allocation1]
    %62 = dma.done [#allocation1], 128
    %63 = vsyncpa [#allocation1], 1

// kernel: neus_aggregation_forward.1
$region0: #{neus_aggregation_forward.1}
  #allocation0 [shape = 'u32[]', space=smem, size = 0x4, offset = 0x4, fixed_abs, tag = 'smem constant byte address 0x4 - core index']
  #allocation1 [shape = 'u32[72,128]{1,0:T(1,128)}', space=vmem, size = 0x9000, scoped, tag = 'internal scratch']
  %s0 = inlined_call_operand.vmem [shape: f32[2], index: 0, kind: input, shape index: {}]
  %s1 = inlined_call_operand.vmem [shape: bf16[128,145], index: 1, kind: input, shape index: {}]
  %s2 = inlined_call_operand.vmem [shape: bf16[145,145], index: 2, kind: input, shape index: {}]
  %s3 = inlined_call_operand.vmem [shape: bf16[145,48], index: 3, kind: input, shape index: {}]
  %s4 = inlined_call_operand.vmem [shape: f32[48,32], index: 4, kind: input, shape index: {}]
  %s5 = inlined_call_operand.vmem [shape: f32[1,32], index: 5, kind: input, shape index: {}]
  %s6 = inlined_call_operand.vmem [shape: f32[32,8], index: 6, kind: input, shape index: {}]
  %s7 = inlined_call_operand.vmem [shape: f32[1,8], index: 7, kind: input, shape index: {}]
  %s8 = inlined_call_operand.vmem [shape: f32[128,6], index: 8, kind: output, shape index: {}]
  %s9 = sld [smem:[#allocation0]]
  $region46: #{neus_aggregation_forward.1} parent=0
    _
  %s11 = ssub.s32 1, %s9
  %s12 = scalar_select 0, %s11, %s9
  $region1: #{neus_aggregation_forward.1} parent=0
    #allocation2 [shape = 'u8[512]{0}', space=smem, size = 0x200, scoped, tag = 'input window, operand 0, single buffered']
    #allocation3 [shape = 's32[1]{0}', space=sflag, size = 0x4, scoped, tag = 'scoped memory for neus_aggregation_forward.1']
    %13 = vsyncpa [#allocation3], 0
    // Predicated region
    $region2: #{neus_aggregation_forward.1} parent=1 // pred_check
      _
    $region3: #{neus_aggregation_forward.1} parent=1 // pred_check_branch
      %15 = sbr.rel (0) target = $region5
    $region4: #{neus_aggregation_forward.1} parent=1 // pred_region
      %17 = vsyncadd [#allocation3], 0
      %s19 = sshll.u32 %s0, 4
      %s20 = int_to_ptr.vmem [resolvable:$true] %s19
      %22 = dma.vmem_to_smem %s20, 16, [#allocation2], [#allocation3]
    $region5: #{neus_aggregation_forward.1} parent=1 // pred_fallthru
      _
    // Predicated region
    $region6: #{neus_aggregation_forward.1} parent=1 // pred_check
      _
    $region7: #{neus_aggregation_forward.1} parent=1 // pred_check_branch
      %24 = sbr.rel (0) target = $region9
    $region8: #{neus_aggregation_forward.1} parent=1 // pred_region
      _
    $region9: #{neus_aggregation_forward.1} parent=1 // pred_fallthru
      _
    // Predicated region
    $region10: #{neus_aggregation_forward.1} parent=1 // pred_check
      _
    $region11: #{neus_aggregation_forward.1} parent=1 // pred_check_branch
      %26 = sbr.rel (0) target = $region13
    $region12: #{neus_aggregation_forward.1} parent=1 // pred_region
      _
    $region13: #{neus_aggregation_forward.1} parent=1 // pred_fallthru
      _
    // Predicated region
    $region14: #{neus_aggregation_forward.1} parent=1 // pred_check
      _
    $region15: #{neus_aggregation_forward.1} parent=1 // pred_check_branch
      %28 = sbr.rel (0) target = $region17
    $region16: #{neus_aggregation_forward.1} parent=1 // pred_region
      _
    $region17: #{neus_aggregation_forward.1} parent=1 // pred_fallthru
      _
    // Predicated region
    $region18: #{neus_aggregation_forward.1} parent=1 // pred_check
      _
    $region19: #{neus_aggregation_forward.1} parent=1 // pred_check_branch
      %30 = sbr.rel (0) target = $region21
    $region20: #{neus_aggregation_forward.1} parent=1 // pred_region
      _
    $region21: #{neus_aggregation_forward.1} parent=1 // pred_fallthru
      _
    // Predicated region
    $region22: #{neus_aggregation_forward.1} parent=1 // pred_check
      _
    $region23: #{neus_aggregation_forward.1} parent=1 // pred_check_branch
      %32 = sbr.rel (0) target = $region25
    $region24: #{neus_aggregation_forward.1} parent=1 // pred_region
      _
    $region25: #{neus_aggregation_forward.1} parent=1 // pred_fallthru
      _
    // Predicated region
    $region26: #{neus_aggregation_forward.1} parent=1 // pred_check
      _
    $region27: #{neus_aggregation_forward.1} parent=1 // pred_check_branch
      %34 = sbr.rel (0) target = $region29
    $region28: #{neus_aggregation_forward.1} parent=1 // pred_region
      _
    $region29: #{neus_aggregation_forward.1} parent=1 // pred_fallthru
      _
    // Predicated region
    $region30: #{neus_aggregation_forward.1} parent=1 // pred_check
      _
    $region31: #{neus_aggregation_forward.1} parent=1 // pred_check_branch
      %36 = sbr.rel (0) target = $region33
    $region32: #{neus_aggregation_forward.1} parent=1 // pred_region
      _
    $region33: #{neus_aggregation_forward.1} parent=1 // pred_fallthru
      _
    // Predicated region
    $region34: #{neus_aggregation_forward.1} parent=1 // pred_check
      _
    $region35: #{neus_aggregation_forward.1} parent=1 // pred_check_branch
      %38 = sbr.rel (0) target = $region37
    $region36: #{neus_aggregation_forward.1} parent=1 // pred_region
      %40 = dma.done [#allocation3], 16
    $region37: #{neus_aggregation_forward.1} parent=1 // pred_fallthru
      _
    %41 = sfence
    %s43 = sld [smem:[#allocation2]]
    %s44 = sld [smem:[#allocation2 + $0x1]]
    %v45 = vld [vmem:[%s1] sm:$0xff]
    %v46 = vld [vmem:[%s1 + $0x8] sm:$0xff]
    %v47 = vld [vmem:[%s1 + $0x10] sm:$0xff]
    %v48 = vld [vmem:[%s1 + $0x18] sm:$0xff]
    %v49 = vld [vmem:[%s1 + $0x20] sm:$0xff]
    %v50 = vld [vmem:[%s1 + $0x28] sm:$0xff]
    %v51 = vld [vmem:[%s1 + $0x30] sm:$0xff]
    %v52 = vld [vmem:[%s1 + $0x38] sm:$0xff]
    %v53 = vld [vmem:[%s1 + $0x40] sm:$0xff]
    %v54 = vld [vmem:[%s1 + $0x48] sm:$0xff]
    %v55 = vld [vmem:[%s1 + $0x50] sm:$0xff]
    %v56 = vld [vmem:[%s1 + $0x58] sm:$0xff]
    %v57 = vld [vmem:[%s1 + $0x60] sm:$0xff]
    %v58 = vld [vmem:[%s1 + $0x68] sm:$0xff]
    %v59 = vld [vmem:[%s1 + $0x70] sm:$0xff]
    %v60 = vld [vmem:[%s1 + $0x78] sm:$0xff]
    %77 = vrot.lane.b32.xlu0 %v45, 115
    %v78 = vpop.permute.xlu0 %77
    %79 = vrot.lane.b32.xlu0 %v46, 115
    %v80 = vpop.permute.xlu0 %79
    %81 = vrot.lane.b32.xlu0 %v47, 115
    %v82 = vpop.permute.xlu0 %81
    %83 = vrot.lane.b32.xlu0 %v48, 115
    %v84 = vpop.permute.xlu0 %83
    %85 = vrot.lane.b32.xlu0 %v49, 115
    %v86 = vpop.permute.xlu0 %85
    %87 = vrot.lane.b32.xlu0 %v50, 115
    %v88 = vpop.permute.xlu0 %87
    %89 = vrot.lane.b32.xlu0 %v51, 115
    %v90 = vpop.permute.xlu0 %89
    %91 = vrot.lane.b32.xlu0 %v52, 115
    %v92 = vpop.permute.xlu0 %91
    %93 = vrot.lane.b32.xlu0 %v53, 115
    %v94 = vpop.permute.xlu0 %93
    %95 = vrot.lane.b32.xlu0 %v54, 115
    %v96 = vpop.permute.xlu0 %95
    %97 = vrot.lane.b32.xlu0 %v55, 115
    %v98 = vpop.permute.xlu0 %97
    %99 = vrot.lane.b32.xlu0 %v56, 115
    %v100 = vpop.permute.xlu0 %99
    %101 = vrot.lane.b32.xlu0 %v57, 115
    %v102 = vpop.permute.xlu0 %101
    %103 = vrot.lane.b32.xlu0 %v58, 115
    %v104 = vpop.permute.xlu0 %103
    %105 = vrot.lane.b32.xlu0 %v59, 115
    %v106 = vpop.permute.xlu0 %105
    %107 = vrot.lane.b32.xlu0 %v60, 115
    %v108 = vpop.permute.xlu0 %107
    %v109 = vrot.slane %v78, 4
    %v110 = vrot.slane %v80, 4
    %v111 = vrot.slane %v82, 4
    %v112 = vrot.slane %v84, 4
    %v113 = vrot.slane %v86, 4
    %v114 = vrot.slane %v88, 4
    %v115 = vrot.slane %v90, 4
    %v116 = vrot.slane %v92, 4
    %v117 = vrot.slane %v94, 4
    %v118 = vrot.slane %v96, 4
    %v119 = vrot.slane %v98, 4
    %v120 = vrot.slane %v100, 4
    %v121 = vrot.slane %v102, 4
    %v122 = vrot.slane %v104, 4
    %v123 = vrot.slane %v106, 4
    %v124 = vrot.slane %v108, 4
    %v141 = vunpack.c.l.bf16 %v109
    %v142 = vunpack.c.l.bf16 %v110
    %v143 = vunpack.c.l.bf16 %v111
    %v144 = vunpack.c.l.bf16 %v112
    %v145 = vunpack.c.l.bf16 %v113
    %v146 = vunpack.c.l.bf16 %v114
    %v147 = vunpack.c.l.bf16 %v115
    %v148 = vunpack.c.l.bf16 %v116
    %v149 = vunpack.c.l.bf16 %v117
    %v150 = vunpack.c.l.bf16 %v118
    %v151 = vunpack.c.l.bf16 %v119
    %v152 = vunpack.c.l.bf16 %v120
    %v153 = vunpack.c.l.bf16 %v121
    %v154 = vunpack.c.l.bf16 %v122
    %v155 = vunpack.c.l.bf16 %v123
    %v156 = vunpack.c.l.bf16 %v124
    %157 = vrot.lane.b32.xlu0 %v45, 112
    %v158 = vpop.permute.xlu0 %157
    %159 = vrot.lane.b32.xlu0 %v46, 112
    %v160 = vpop.permute.xlu0 %159
    %161 = vrot.lane.b32.xlu0 %v47, 112
    %v162 = vpop.permute.xlu0 %161
    %163 = vrot.lane.b32.xlu0 %v48, 112
    %v164 = vpop.permute.xlu0 %163
    %165 = vrot.lane.b32.xlu0 %v49, 112
    %v166 = vpop.permute.xlu0 %165
    %167 = vrot.lane.b32.xlu0 %v50, 112
    %v168 = vpop.permute.xlu0 %167
    %169 = vrot.lane.b32.xlu0 %v51, 112
    %v170 = vpop.permute.xlu0 %169
    %171 = vrot.lane.b32.xlu0 %v52, 112
    %v172 = vpop.permute.xlu0 %171
    %173 = vrot.lane.b32.xlu0 %v53, 112
    %v174 = vpop.permute.xlu0 %173
    %175 = vrot.lane.b32.xlu0 %v54, 112
    %v176 = vpop.permute.xlu0 %175
    %177 = vrot.lane.b32.xlu0 %v55, 112
    %v178 = vpop.permute.xlu0 %177
    %179 = vrot.lane.b32.xlu0 %v56, 112
    %v180 = vpop.permute.xlu0 %179
    %181 = vrot.lane.b32.xlu0 %v57, 112
    %v182 = vpop.permute.xlu0 %181
    %183 = vrot.lane.b32.xlu0 %v58, 112
    %v184 = vpop.permute.xlu0 %183
    %185 = vrot.lane.b32.xlu0 %v59, 112
    %v186 = vpop.permute.xlu0 %185
    %187 = vrot.lane.b32.xlu0 %v60, 112
    %v188 = vpop.permute.xlu0 %187
    %v189 = vrot.slane %v158, 4
    %v190 = vrot.slane %v160, 4
    %v191 = vrot.slane %v162, 4
    %v192 = vrot.slane %v164, 4
    %v193 = vrot.slane %v166, 4
    %v194 = vrot.slane %v168, 4
    %v195 = vrot.slane %v170, 4
    %v196 = vrot.slane %v172, 4
    %v197 = vrot.slane %v174, 4
    %v198 = vrot.slane %v176, 4
    %v199 = vrot.slane %v178, 4
    %v200 = vrot.slane %v180, 4
    %v201 = vrot.slane %v182, 4
    %v202 = vrot.slane %v184, 4
    %v203 = vrot.slane %v186, 4
    %v204 = vrot.slane %v188, 4
    %v221 = vunpack.c.l.bf16 %v189
    %v222 = vunpack.c.l.bf16 %v190
    %v223 = vunpack.c.l.bf16 %v191
    %v224 = vunpack.c.l.bf16 %v192
    %v225 = vunpack.c.l.bf16 %v193
    %v226 = vunpack.c.l.bf16 %v194
    %v227 = vunpack.c.l.bf16 %v195
    %v228 = vunpack.c.l.bf16 %v196
    %v229 = vunpack.c.l.bf16 %v197
    %v230 = vunpack.c.l.bf16 %v198
    %v231 = vunpack.c.l.bf16 %v199
    %v232 = vunpack.c.l.bf16 %v200
    %v233 = vunpack.c.l.bf16 %v201
    %v234 = vunpack.c.l.bf16 %v202
    %v235 = vunpack.c.l.bf16 %v203
    %v236 = vunpack.c.l.bf16 %v204
    %v237 = vld [vmem:[%s2] sm:$0xff]
    %v238 = vld [vmem:[%s2 + $0x8] sm:$0xff]
    %v239 = vld [vmem:[%s2 + $0x10] sm:$0xff]
    %v240 = vld [vmem:[%s2 + $0x18] sm:$0xff]
    %v241 = vld [vmem:[%s2 + $0x20] sm:$0xff]
    %v242 = vld [vmem:[%s2 + $0x28] sm:$0xff]
    %v243 = vld [vmem:[%s2 + $0x30] sm:$0xff]
    %v244 = vld [vmem:[%s2 + $0x38] sm:$0xff]
    %v245 = vld [vmem:[%s2 + $0x40] sm:$0xff]
    %v246 = vld [vmem:[%s2 + $0x48] sm:$0xff]
    %v247 = vld [vmem:[%s2 + $0x50] sm:$0xff]
    %v248 = vld [vmem:[%s2 + $0x58] sm:$0xff]
    %v249 = vld [vmem:[%s2 + $0x60] sm:$0xff]
    %v250 = vld [vmem:[%s2 + $0x68] sm:$0xff]
    %v251 = vld [vmem:[%s2 + $0x70] sm:$0xff]
    %v252 = vld [vmem:[%s2 + $0x78] sm:$0xff]
    %v253 = vld [vmem:[%s2 + $0x80] sm:$0xff]
    %v254 = vld [vmem:[%s2 + $0x88] sm:$0xff]
    %v255 = vld [vmem:[%s2 + $0x90] sm:$0x11]
    %v256 = vunpack.c.l.b16 %v45
    %v257 = vunpack.c.h.b16 %v45
    %v258 = vunpack.c.l.b16 %v46
    %v259 = vunpack.c.h.b16 %v46
    %v260 = vunpack.c.l.b16 %v47
    %v261 = vunpack.c.h.b16 %v47
    %v262 = vunpack.c.l.b16 %v48
    %v263 = vunpack.c.h.b16 %v48
    %v264 = vunpack.c.l.b16 %v49
    %v265 = vunpack.c.h.b16 %v49
    %v266 = vunpack.c.l.b16 %v50
    %v267 = vunpack.c.h.b16 %v50
    %v268 = vunpack.c.l.b16 %v51
    %v269 = vunpack.c.h.b16 %v51
    %v270 = vunpack.c.l.b16 %v52
    %v271 = vunpack.c.h.b16 %v52
    %v272 = vunpack.c.l.b16 %v53
    %v273 = vunpack.c.h.b16 %v53
    %v274 = vunpack.c.l.b16 %v54
    %v275 = vunpack.c.h.b16 %v54
    %v276 = vunpack.c.l.b16 %v55
    %v277 = vunpack.c.h.b16 %v55
    %v278 = vunpack.c.l.b16 %v56
    %v279 = vunpack.c.h.b16 %v56
    %v280 = vunpack.c.l.b16 %v57
    %v281 = vunpack.c.h.b16 %v57
    %v282 = vunpack.c.l.b16 %v58
    %v283 = vunpack.c.h.b16 %v58
    %v284 = vunpack.c.l.b16 %v59
    %v285 = vunpack.c.h.b16 %v59
    %v286 = vunpack.c.l.b16 %v60
    %v287 = vunpack.c.h.b16 %v60
    %v288 = vpack.c.b16 %v258, %v256
    %v289 = vpack.c.b16 %v259, %v257
    %v290 = vpack.c.b16 %v262, %v260
    %v291 = vpack.c.b16 %v263, %v261
    %v292 = vpack.c.b16 %v266, %v264
    %v293 = vpack.c.b16 %v267, %v265
    %v294 = vpack.c.b16 %v270, %v268
    %v295 = vpack.c.b16 %v271, %v269
    %v296 = vpack.c.b16 %v274, %v272
    %v297 = vpack.c.b16 %v275, %v273
    %v298 = vpack.c.b16 %v278, %v276
    %v299 = vpack.c.b16 %v279, %v277
    %v300 = vpack.c.b16 %v282, %v280
    %v301 = vpack.c.b16 %v283, %v281
    %v302 = vpack.c.b16 %v286, %v284
    %v303 = vpack.c.b16 %v287, %v285
    %v331 = vunpack.c.l.b16 %v237
    %v332 = vunpack.c.h.b16 %v237
    %v333 = vunpack.c.l.b16 %v238
    %v334 = vunpack.c.h.b16 %v238
    %v335 = vunpack.c.l.b16 %v239
    %v336 = vunpack.c.h.b16 %v239
    %v337 = vunpack.c.l.b16 %v240
    %v338 = vunpack.c.h.b16 %v240
    %v339 = vunpack.c.l.b16 %v241
    %v340 = vunpack.c.h.b16 %v241
    %v341 = vunpack.c.l.b16 %v242
    %v342 = vunpack.c.h.b16 %v242
    %v343 = vunpack.c.l.b16 %v243
    %v344 = vunpack.c.h.b16 %v243
    %v345 = vunpack.c.l.b16 %v244
    %v346 = vunpack.c.h.b16 %v244
    %v347 = vunpack.c.l.b16 %v245
    %v348 = vunpack.c.h.b16 %v245
    %v349 = vunpack.c.l.b16 %v246
    %v350 = vunpack.c.h.b16 %v246
    %v351 = vunpack.c.l.b16 %v247
    %v352 = vunpack.c.h.b16 %v247
    %v353 = vunpack.c.l.b16 %v248
    %v354 = vunpack.c.h.b16 %v248
    %v355 = vunpack.c.l.b16 %v249
    %v356 = vunpack.c.h.b16 %v249
    %v357 = vunpack.c.l.b16 %v250
    %v358 = vunpack.c.h.b16 %v250
    %v359 = vunpack.c.l.b16 %v251
    %v360 = vunpack.c.h.b16 %v251
    %v361 = vunpack.c.l.b16 %v252
    %v362 = vunpack.c.h.b16 %v252
    %v363 = vunpack.c.l.b16 %v253
    %v364 = vunpack.c.h.b16 %v253
    %v365 = vunpack.c.l.b16 %v254
    %v366 = vunpack.c.h.b16 %v254
    %v367 = vunpack.c.l.b16 %v255
    %v368 = vunpack.c.h.b16 %v255
    %v369 = vpack.c.b16 %v333, %v331
    %v370 = vpack.c.b16 %v334, %v332
    %v371 = vpack.c.b16 %v337, %v335
    %v372 = vpack.c.b16 %v338, %v336
    %v373 = vpack.c.b16 %v341, %v339
    %v374 = vpack.c.b16 %v342, %v340
    %v375 = vpack.c.b16 %v345, %v343
    %v376 = vpack.c.b16 %v346, %v344
    %v377 = vpack.c.b16 %v349, %v347
    %v378 = vpack.c.b16 %v350, %v348
    %v379 = vpack.c.b16 %v353, %v351
    %v380 = vpack.c.b16 %v354, %v352
    %v381 = vpack.c.b16 %v357, %v355
    %v382 = vpack.c.b16 %v358, %v356
    %v383 = vpack.c.b16 %v361, %v359
    %v384 = vpack.c.b16 %v362, %v360
    %v385 = vpack.c.b16 %v365, %v363
    %v386 = vpack.c.b16 %v366, %v364
    %v387 = vpack.c.b16 %v367, %v367
    %v388 = vpack.c.b16 %v368, %v368
    %vm407 = vcmask 138240
    %v409 = vsel %vm407, %v289, 0
    %v412 = vsel %vm407, %v291, 0
    %v415 = vsel %vm407, %v293, 0
    %v418 = vsel %vm407, %v295, 0
    %v421 = vsel %vm407, %v297, 0
    %v424 = vsel %vm407, %v299, 0
    %v427 = vsel %vm407, %v301, 0
    %v430 = vsel %vm407, %v303, 0
    %vm432 = vcmask 1040384
    %v433 = vsel 0, 4294967295, 65535
    %v434 = vsel %vm432, %v433, 0
    %v436 = vand.u32 %v387, %v434
    %v439 = vand.u32 %v388, %v434
    %441 = vmatpush.bf16.msra.mxu0 %v383
    %442 = vmatpush.bf16.msra.mxu0 %v381
    %443 = vmatpush.bf16.msra.mxu0 %v379
    %444 = vmatpush.bf16.msra.mxu0 %v377
    %445 = vmatpush.bf16.msra.mxu0 %v375
    %446 = vmatpush.bf16.msra.mxu0 %v373
    %447 = vmatpush.bf16.msra.mxu0 %v371
    %448 = vmatpush.bf16.msra.mxu0 %v369
    %449 = vmatmul.bf16.gmra.mxu0 %v288
    %v450 = vpop.f32.mrf.mxu0
    %v451 = vadd.f32 0.0, %v450
    %v452 = vpop.f32.mrf.mxu0
    %v453 = vadd.f32 0.0, %v452
    %454 = vmatmul.bf16.gmra.mxu0 %v290
    %v455 = vpop.f32.mrf.mxu0
    %v456 = vadd.f32 0.0, %v455
    %v457 = vpop.f32.mrf.mxu0
    %v458 = vadd.f32 0.0, %v457
    %459 = vmatmul.bf16.gmra.mxu0 %v292
    %v460 = vpop.f32.mrf.mxu0
    %v461 = vadd.f32 0.0, %v460
    %v462 = vpop.f32.mrf.mxu0
    %v463 = vadd.f32 0.0, %v462
    %464 = vmatmul.bf16.gmra.mxu0 %v294
    %v465 = vpop.f32.mrf.mxu0
    %v466 = vadd.f32 0.0, %v465
    %v467 = vpop.f32.mrf.mxu0
    %v468 = vadd.f32 0.0, %v467
    %469 = vmatmul.bf16.gmra.mxu0 %v296
    %v470 = vpop.f32.mrf.mxu0
    %v471 = vadd.f32 0.0, %v470
    %v472 = vpop.f32.mrf.mxu0
    %v473 = vadd.f32 0.0, %v472
    %474 = vmatmul.bf16.gmra.mxu0 %v298
    %v475 = vpop.f32.mrf.mxu0
    %v476 = vadd.f32 0.0, %v475
    %v477 = vpop.f32.mrf.mxu0
    %v478 = vadd.f32 0.0, %v477
    %479 = vmatmul.bf16.gmra.mxu0 %v300
    %v480 = vpop.f32.mrf.mxu0
    %v481 = vadd.f32 0.0, %v480
    %v482 = vpop.f32.mrf.mxu0
    %v483 = vadd.f32 0.0, %v482
    %484 = vmatmul.bf16.gmra.mxu0 %v302
    %v485 = vpop.f32.mrf.mxu0
    %v486 = vadd.f32 0.0, %v485
    %v487 = vpop.f32.mrf.mxu0
    %v488 = vadd.f32 0.0, %v487
    %489 = vdwg.mxu0
    %490 = vmatpush.bf16.msra.mxu0 0
    %491 = vmatpush.bf16.msra.mxu0 0
    %492 = vmatpush.bf16.msra.mxu0 0
    %493 = vmatpush.bf16.msra.mxu0 0
    %494 = vmatpush.bf16.msra.mxu0 0
    %495 = vmatpush.bf16.msra.mxu0 0
    %496 = vmatpush.bf16.msra.mxu0 %v436
    %497 = vmatpush.bf16.msra.mxu0 %v385
    %498 = vmatmul.bf16.gmra.mxu0 %v409
    %v499 = vpop.f32.mrf.mxu0
    %v500 = vadd.f32 %v451, %v499
    %v501 = vpop.f32.mrf.mxu0
    %v502 = vadd.f32 %v453, %v501
    %503 = vmatmul.bf16.gmra.mxu0 %v412
    %v504 = vpop.f32.mrf.mxu0
    %v505 = vadd.f32 %v456, %v504
    %v506 = vpop.f32.mrf.mxu0
    %v507 = vadd.f32 %v458, %v506
    %508 = vmatmul.bf16.gmra.mxu0 %v415
    %v509 = vpop.f32.mrf.mxu0
    %v510 = vadd.f32 %v461, %v509
    %v511 = vpop.f32.mrf.mxu0
    %v512 = vadd.f32 %v463, %v511
    %513 = vmatmul.bf16.gmra.mxu0 %v418
    %v514 = vpop.f32.mrf.mxu0
    %v515 = vadd.f32 %v466, %v514
    %v516 = vpop.f32.mrf.mxu0
    %v517 = vadd.f32 %v468, %v516
    %518 = vmatmul.bf16.gmra.mxu0 %v421
    %v519 = vpop.f32.mrf.mxu0
    %v520 = vadd.f32 %v471, %v519
    %v521 = vpop.f32.mrf.mxu0
    %v522 = vadd.f32 %v473, %v521
    %523 = vmatmul.bf16.gmra.mxu0 %v424
    %v524 = vpop.f32.mrf.mxu0
    %v525 = vadd.f32 %v476, %v524
    %v526 = vpop.f32.mrf.mxu0
    %v527 = vadd.f32 %v478, %v526
    %528 = vmatmul.bf16.gmra.mxu0 %v427
    %v529 = vpop.f32.mrf.mxu0
    %v530 = vadd.f32 %v481, %v529
    %v531 = vpop.f32.mrf.mxu0
    %v532 = vadd.f32 %v483, %v531
    %533 = vmatmul.bf16.gmra.mxu0 %v430
    %v534 = vpop.f32.mrf.mxu0
    %v535 = vadd.f32 %v486, %v534
    %v536 = vpop.f32.mrf.mxu0
    %v537 = vadd.f32 %v488, %v536
    %538 = vdwg.mxu0
    %539 = vmatpush.bf16.msra.mxu0 %v384
    %540 = vmatpush.bf16.msra.mxu0 %v382
    %541 = vmatpush.bf16.msra.mxu0 %v380
    %542 = vmatpush.bf16.msra.mxu0 %v378
    %543 = vmatpush.bf16.msra.mxu0 %v376
    %544 = vmatpush.bf16.msra.mxu0 %v374
    %545 = vmatpush.bf16.msra.mxu0 %v372
    %546 = vmatpush.bf16.msra.mxu0 %v370
    %547 = vmatmul.bf16.gmra.mxu0 %v288
    %v548 = vpop.f32.mrf.mxu0
    %v549 = vadd.f32 0.0, %v548
    %v550 = vpop.f32.mrf.mxu0
    %v551 = vadd.f32 0.0, %v550
    %552 = vmatmul.bf16.gmra.mxu0 %v290
    %v553 = vpop.f32.mrf.mxu0
    %v554 = vadd.f32 0.0, %v553
    %v555 = vpop.f32.mrf.mxu0
    %v556 = vadd.f32 0.0, %v555
    %557 = vmatmul.bf16.gmra.mxu0 %v292
    %v558 = vpop.f32.mrf.mxu0
    %v559 = vadd.f32 0.0, %v558
    %v560 = vpop.f32.mrf.mxu0
    %v561 = vadd.f32 0.0, %v560
    %562 = vmatmul.bf16.gmra.mxu0 %v294
    %v563 = vpop.f32.mrf.mxu0
    %v564 = vadd.f32 0.0, %v563
    %v565 = vpop.f32.mrf.mxu0
    %v566 = vadd.f32 0.0, %v565
    %567 = vmatmul.bf16.gmra.mxu0 %v296
    %v568 = vpop.f32.mrf.mxu0
    %v569 = vadd.f32 0.0, %v568
    %v570 = vpop.f32.mrf.mxu0
    %v571 = vadd.f32 0.0, %v570
    %572 = vmatmul.bf16.gmra.mxu0 %v298
    %v573 = vpop.f32.mrf.mxu0
    %v574 = vadd.f32 0.0, %v573
    %v575 = vpop.f32.mrf.mxu0
    %v576 = vadd.f32 0.0, %v575
    %577 = vmatmul.bf16.gmra.mxu0 %v300
    %v578 = vpop.f32.mrf.mxu0
    %v579 = vadd.f32 0.0, %v578
    %v580 = vpop.f32.mrf.mxu0
    %v581 = vadd.f32 0.0, %v580
    %582 = vmatmul.bf16.gmra.mxu0 %v302
    %v583 = vpop.f32.mrf.mxu0
    %v584 = vadd.f32 0.0, %v583
    %v585 = vpop.f32.mrf.mxu0
    %v586 = vadd.f32 0.0, %v585
    %587 = vdwg.mxu0
    %588 = vmatpush.bf16.msra.mxu0 0
    %589 = vmatpush.bf16.msra.mxu0 0
    %590 = vmatpush.bf16.msra.mxu0 0
    %591 = vmatpush.bf16.msra.mxu0 0
    %592 = vmatpush.bf16.msra.mxu0 0
    %593 = vmatpush.bf16.msra.mxu0 0
    %594 = vmatpush.bf16.msra.mxu0 %v439
    %595 = vmatpush.bf16.msra.mxu0 %v386
    %596 = vmatmul.bf16.gmra.mxu0 %v409
    %v597 = vpop.f32.mrf.mxu0
    %v598 = vadd.f32 %v549, %v597
    %v599 = vpop.f32.mrf.mxu0
    %v600 = vadd.f32 %v551, %v599
    %601 = vmatmul.bf16.gmra.mxu0 %v412
    %v602 = vpop.f32.mrf.mxu0
    %v603 = vadd.f32 %v554, %v602
    %v604 = vpop.f32.mrf.mxu0
    %v605 = vadd.f32 %v556, %v604
    %606 = vmatmul.bf16.gmra.mxu0 %v415
    %v607 = vpop.f32.mrf.mxu0
    %v608 = vadd.f32 %v559, %v607
    %v609 = vpop.f32.mrf.mxu0
    %v610 = vadd.f32 %v561, %v609
    %611 = vmatmul.bf16.gmra.mxu0 %v418
    %v612 = vpop.f32.mrf.mxu0
    %v613 = vadd.f32 %v564, %v612
    %v614 = vpop.f32.mrf.mxu0
    %v615 = vadd.f32 %v566, %v614
    %616 = vmatmul.bf16.gmra.mxu0 %v421
    %v617 = vpop.f32.mrf.mxu0
    %v618 = vadd.f32 %v569, %v617
    %v619 = vpop.f32.mrf.mxu0
    %v620 = vadd.f32 %v571, %v619
    %621 = vmatmul.bf16.gmra.mxu0 %v424
    %v622 = vpop.f32.mrf.mxu0
    %v623 = vadd.f32 %v574, %v622
    %v624 = vpop.f32.mrf.mxu0
    %v625 = vadd.f32 %v576, %v624
    %626 = vmatmul.bf16.gmra.mxu0 %v427
    %v627 = vpop.f32.mrf.mxu0
    %v628 = vadd.f32 %v579, %v627
    %v629 = vpop.f32.mrf.mxu0
    %v630 = vadd.f32 %v581, %v629
    %631 = vmatmul.bf16.gmra.mxu0 %v430
    %v632 = vpop.f32.mrf.mxu0
    %v633 = vadd.f32 %v584, %v632
    %v634 = vpop.f32.mrf.mxu0
    %v635 = vadd.f32 %v586, %v634
    %636 = vdwg.mxu0
    %v637 = vpack.c.bf16 %v598, %v500
    %v638 = vpack.c.bf16 %v600, %v502
    %v639 = vpack.c.bf16 %v603, %v505
    %v640 = vpack.c.bf16 %v605, %v507
    %v641 = vpack.c.bf16 %v608, %v510
    %v642 = vpack.c.bf16 %v610, %v512
    %v643 = vpack.c.bf16 %v613, %v515
    %v644 = vpack.c.bf16 %v615, %v517
    %v645 = vpack.c.bf16 %v618, %v520
    %v646 = vpack.c.bf16 %v620, %v522
    %v647 = vpack.c.bf16 %v623, %v525
    %v648 = vpack.c.bf16 %v625, %v527
    %v649 = vpack.c.bf16 %v628, %v530
    %v650 = vpack.c.bf16 %v630, %v532
    %v651 = vpack.c.bf16 %v633, %v535
    %v652 = vpack.c.bf16 %v635, %v537
    %v653 = vunpack.c.l.bf16 %v45
    %v654 = vunpack.c.h.bf16 %v45
    %v655 = vunpack.c.l.bf16 %v46
    %v656 = vunpack.c.h.bf16 %v46
    %v657 = vunpack.c.l.bf16 %v47
    %v658 = vunpack.c.h.bf16 %v47
    %v659 = vunpack.c.l.bf16 %v48
    %v660 = vunpack.c.h.bf16 %v48
    %v661 = vunpack.c.l.bf16 %v49
    %v662 = vunpack.c.h.bf16 %v49
    %v663 = vunpack.c.l.bf16 %v50
    %v664 = vunpack.c.h.bf16 %v50
    %v665 = vunpack.c.l.bf16 %v51
    %v666 = vunpack.c.h.bf16 %v51
    %v667 = vunpack.c.l.bf16 %v52
    %v668 = vunpack.c.h.bf16 %v52
    %v669 = vunpack.c.l.bf16 %v53
    %v670 = vunpack.c.h.bf16 %v53
    %v671 = vunpack.c.l.bf16 %v54
    %v672 = vunpack.c.h.bf16 %v54
    %v673 = vunpack.c.l.bf16 %v55
    %v674 = vunpack.c.h.bf16 %v55
    %v675 = vunpack.c.l.bf16 %v56
    %v676 = vunpack.c.h.bf16 %v56
    %v677 = vunpack.c.l.bf16 %v57
    %v678 = vunpack.c.h.bf16 %v57
    %v679 = vunpack.c.l.bf16 %v58
    %v680 = vunpack.c.h.bf16 %v58
    %v681 = vunpack.c.l.bf16 %v59
    %v682 = vunpack.c.h.bf16 %v59
    %v683 = vunpack.c.l.bf16 %v60
    %v684 = vunpack.c.h.bf16 %v60
    %v685 = vunpack.c.l.bf16 %v637
    %v686 = vunpack.c.h.bf16 %v637
    %v687 = vunpack.c.l.bf16 %v638
    %v688 = vunpack.c.h.bf16 %v638
    %v689 = vunpack.c.l.bf16 %v639
    %v690 = vunpack.c.h.bf16 %v639
    %v691 = vunpack.c.l.bf16 %v640
    %v692 = vunpack.c.h.bf16 %v640
    %v693 = vunpack.c.l.bf16 %v641
    %v694 = vunpack.c.h.bf16 %v641
    %v695 = vunpack.c.l.bf16 %v642
    %v696 = vunpack.c.h.bf16 %v642
    %v697 = vunpack.c.l.bf16 %v643
    %v698 = vunpack.c.h.bf16 %v643
    %v699 = vunpack.c.l.bf16 %v644
    %v700 = vunpack.c.h.bf16 %v644
    %v701 = vunpack.c.l.bf16 %v645
    %v702 = vunpack.c.h.bf16 %v645
    %v703 = vunpack.c.l.bf16 %v646
    %v704 = vunpack.c.h.bf16 %v646
    %v705 = vunpack.c.l.bf16 %v647
    %v706 = vunpack.c.h.bf16 %v647
    %v707 = vunpack.c.l.bf16 %v648
    %v708 = vunpack.c.h.bf16 %v648
    %v709 = vunpack.c.l.bf16 %v649
    %v710 = vunpack.c.h.bf16 %v649
    %v711 = vunpack.c.l.bf16 %v650
    %v712 = vunpack.c.h.bf16 %v650
    %v713 = vunpack.c.l.bf16 %v651
    %v714 = vunpack.c.h.bf16 %v651
    %v715 = vunpack.c.l.bf16 %v652
    %v716 = vunpack.c.h.bf16 %v652
    %v717 = vmul.f32 %v653, %v685
    %v718 = vmul.f32 %v654, %v686
    %v719 = vmul.f32 %v655, %v687
    %v720 = vmul.f32 %v656, %v688
    %v721 = vmul.f32 %v657, %v689
    %v722 = vmul.f32 %v658, %v690
    %v723 = vmul.f32 %v659, %v691
    %v724 = vmul.f32 %v660, %v692
    %v725 = vmul.f32 %v661, %v693
    %v726 = vmul.f32 %v662, %v694
    %v727 = vmul.f32 %v663, %v695
    %v728 = vmul.f32 %v664, %v696
    %v729 = vmul.f32 %v665, %v697
    %v730 = vmul.f32 %v666, %v698
    %v731 = vmul.f32 %v667, %v699
    %v732 = vmul.f32 %v668, %v700
    %v733 = vmul.f32 %v669, %v701
    %v734 = vmul.f32 %v670, %v702
    %v735 = vmul.f32 %v671, %v703
    %v736 = vmul.f32 %v672, %v704
    %v737 = vmul.f32 %v673, %v705
    %v738 = vmul.f32 %v674, %v706
    %v739 = vmul.f32 %v675, %v707
    %v740 = vmul.f32 %v676, %v708
    %v741 = vmul.f32 %v677, %v709
    %v742 = vmul.f32 %v678, %v710
    %v743 = vmul.f32 %v679, %v711
    %v744 = vmul.f32 %v680, %v712
    %v745 = vmul.f32 %v681, %v713
    %v746 = vmul.f32 %v682, %v714
    %v747 = vmul.f32 %v683, %v715
    %v748 = vmul.f32 %v684, %v716
    %v749 = vpack.c.bf16 %v719, %v717
    %v750 = vpack.c.bf16 %v720, %v718
    %v751 = vpack.c.bf16 %v723, %v721
    %v752 = vpack.c.bf16 %v724, %v722
    %v753 = vpack.c.bf16 %v727, %v725
    %v754 = vpack.c.bf16 %v728, %v726
    %v755 = vpack.c.bf16 %v731, %v729
    %v756 = vpack.c.bf16 %v732, %v730
    %v757 = vpack.c.bf16 %v735, %v733
    %v758 = vpack.c.bf16 %v736, %v734
    %v759 = vpack.c.bf16 %v739, %v737
    %v760 = vpack.c.bf16 %v740, %v738
    %v761 = vpack.c.bf16 %v743, %v741
    %v762 = vpack.c.bf16 %v744, %v742
    %v763 = vpack.c.bf16 %v747, %v745
    %v764 = vpack.c.bf16 %v748, %v746
    %v765 = vld [vmem:[%s3] sm:$0xf]
    %v766 = vld [vmem:[%s3 + $0x4] sm:$0xf]
    %v767 = vld [vmem:[%s3 + $0x8] sm:$0xf]
    %v768 = vld [vmem:[%s3 + $0xc] sm:$0xf]
    %v769 = vld [vmem:[%s3 + $0x10] sm:$0xf]
    %v770 = vld [vmem:[%s3 + $0x14] sm:$0xf]
    %v771 = vld [vmem:[%s3 + $0x18] sm:$0xf]
    %v772 = vld [vmem:[%s3 + $0x1c] sm:$0xf]
    %v773 = vld [vmem:[%s3 + $0x20] sm:$0xf]
    %v774 = vld [vmem:[%s3 + $0x24] sm:$0xf]
    %v775 = vld [vmem:[%s3 + $0x28] sm:$0xf]
    %v776 = vld [vmem:[%s3 + $0x2c] sm:$0xf]
    %v777 = vld [vmem:[%s3 + $0x30] sm:$0xf]
    %v778 = vld [vmem:[%s3 + $0x34] sm:$0xf]
    %v779 = vld [vmem:[%s3 + $0x38] sm:$0xf]
    %v780 = vld [vmem:[%s3 + $0x3c] sm:$0xf]
    %v781 = vld [vmem:[%s3 + $0x40] sm:$0xf]
    %v782 = vld [vmem:[%s3 + $0x44] sm:$0xf]
    %v783 = vld [vmem:[%s3 + $0x48] sm:$0x1]
    %v803 = vunpack.c.l.b16 %v765
    %v804 = vunpack.c.l.b16 %v766
    %v805 = vunpack.c.l.b16 %v767
    %v806 = vunpack.c.l.b16 %v768
    %v807 = vunpack.c.l.b16 %v769
    %v808 = vunpack.c.l.b16 %v770
    %v809 = vunpack.c.l.b16 %v771
    %v810 = vunpack.c.l.b16 %v772
    %v811 = vunpack.c.l.b16 %v773
    %v812 = vunpack.c.l.b16 %v774
    %v813 = vunpack.c.l.b16 %v775
    %v814 = vunpack.c.l.b16 %v776
    %v815 = vunpack.c.l.b16 %v777
    %v816 = vunpack.c.l.b16 %v778
    %v817 = vunpack.c.l.b16 %v779
    %v818 = vunpack.c.l.b16 %v780
    %v819 = vunpack.c.l.b16 %v781
    %v820 = vunpack.c.l.b16 %v782
    %v821 = vunpack.c.l.b16 %v783
    %v822 = vpack.c.b16 %v804, %v803
    %v823 = vpack.c.b16 %v806, %v805
    %v824 = vpack.c.b16 %v808, %v807
    %v825 = vpack.c.b16 %v810, %v809
    %v826 = vpack.c.b16 %v812, %v811
    %v827 = vpack.c.b16 %v814, %v813
    %v828 = vpack.c.b16 %v816, %v815
    %v829 = vpack.c.b16 %v818, %v817
    %v830 = vpack.c.b16 %v820, %v819
    %v831 = vpack.c.b16 %v821, %v821
    %v842 = vsel %vm407, %v750, 0
    %v845 = vsel %vm407, %v752, 0
    %v848 = vsel %vm407, %v754, 0
    %v851 = vsel %vm407, %v756, 0
    %v854 = vsel %vm407, %v758, 0
    %v857 = vsel %vm407, %v760, 0
    %v860 = vsel %vm407, %v762, 0
    %v863 = vsel %vm407, %v764, 0
    %v866 = vand.u32 %v831, %v434
    %868 = vmatpush.bf16.msra.mxu0 %v829
    %869 = vmatpush.bf16.msra.mxu0 %v828
    %870 = vmatpush.bf16.msra.mxu0 %v827
    %871 = vmatpush.bf16.msra.mxu0 %v826
    %872 = vmatpush.bf16.msra.mxu0 %v825
    %873 = vmatpush.bf16.msra.mxu0 %v824
    %874 = vmatpush.bf16.msra.mxu0 %v823
    %875 = vmatpush.bf16.msra.mxu0 %v822
    %876 = vmatmul.bf16.gmra.mxu0 %v749
    %v877 = vpop.f32.mrf.mxu0
    %v878 = vadd.f32 0.0, %v877
    %v879 = vpop.f32.mrf.mxu0
    %v880 = vadd.f32 0.0, %v879
    %881 = vmatmul.bf16.gmra.mxu0 %v751
    %v882 = vpop.f32.mrf.mxu0
    %v883 = vadd.f32 0.0, %v882
    %v884 = vpop.f32.mrf.mxu0
    %v885 = vadd.f32 0.0, %v884
    %886 = vmatmul.bf16.gmra.mxu0 %v753
    %v887 = vpop.f32.mrf.mxu0
    %v888 = vadd.f32 0.0, %v887
    %v889 = vpop.f32.mrf.mxu0
    %v890 = vadd.f32 0.0, %v889
    %891 = vmatmul.bf16.gmra.mxu0 %v755
    %v892 = vpop.f32.mrf.mxu0
    %v893 = vadd.f32 0.0, %v892
    %v894 = vpop.f32.mrf.mxu0
    %v895 = vadd.f32 0.0, %v894
    %896 = vmatmul.bf16.gmra.mxu0 %v757
    %v897 = vpop.f32.mrf.mxu0
    %v898 = vadd.f32 0.0, %v897
    %v899 = vpop.f32.mrf.mxu0
    %v900 = vadd.f32 0.0, %v899
    %901 = vmatmul.bf16.gmra.mxu0 %v759
    %v902 = vpop.f32.mrf.mxu0
    %v903 = vadd.f32 0.0, %v902
    %v904 = vpop.f32.mrf.mxu0
    %v905 = vadd.f32 0.0, %v904
    %906 = vmatmul.bf16.gmra.mxu0 %v761
    %v907 = vpop.f32.mrf.mxu0
    %v908 = vadd.f32 0.0, %v907
    %v909 = vpop.f32.mrf.mxu0
    %v910 = vadd.f32 0.0, %v909
    %911 = vmatmul.bf16.gmra.mxu0 %v763
    %v912 = vpop.f32.mrf.mxu0
    %v913 = vadd.f32 0.0, %v912
    %v914 = vpop.f32.mrf.mxu0
    %v915 = vadd.f32 0.0, %v914
    %916 = vdwg.mxu0
    %917 = vmatpush.bf16.msra.mxu0 0
    %918 = vmatpush.bf16.msra.mxu0 0
    %919 = vmatpush.bf16.msra.mxu0 0
    %920 = vmatpush.bf16.msra.mxu0 0
    %921 = vmatpush.bf16.msra.mxu0 0
    %922 = vmatpush.bf16.msra.mxu0 0
    %923 = vmatpush.bf16.msra.mxu0 %v866
    %924 = vmatpush.bf16.msra.mxu0 %v830
    %925 = vmatmul.bf16.gmra.mxu0 %v842
    %v926 = vpop.f32.mrf.mxu0
    %v927 = vadd.f32 %v878, %v926
    %v928 = vpop.f32.mrf.mxu0
    %v929 = vadd.f32 %v880, %v928
    %930 = vmatmul.bf16.gmra.mxu0 %v845
    %v931 = vpop.f32.mrf.mxu0
    %v932 = vadd.f32 %v883, %v931
    %v933 = vpop.f32.mrf.mxu0
    %v934 = vadd.f32 %v885, %v933
    %935 = vmatmul.bf16.gmra.mxu0 %v848
    %v936 = vpop.f32.mrf.mxu0
    %v937 = vadd.f32 %v888, %v936
    %v938 = vpop.f32.mrf.mxu0
    %v939 = vadd.f32 %v890, %v938
    %940 = vmatmul.bf16.gmra.mxu0 %v851
    %v941 = vpop.f32.mrf.mxu0
    %v942 = vadd.f32 %v893, %v941
    %v943 = vpop.f32.mrf.mxu0
    %v944 = vadd.f32 %v895, %v943
    %945 = vmatmul.bf16.gmra.mxu0 %v854
    %v946 = vpop.f32.mrf.mxu0
    %v947 = vadd.f32 %v898, %v946
    %v948 = vpop.f32.mrf.mxu0
    %v949 = vadd.f32 %v900, %v948
    %950 = vmatmul.bf16.gmra.mxu0 %v857
    %v951 = vpop.f32.mrf.mxu0
    %v952 = vadd.f32 %v903, %v951
    %v953 = vpop.f32.mrf.mxu0
    %v954 = vadd.f32 %v905, %v953
    %955 = vmatmul.bf16.gmra.mxu0 %v860
    %v956 = vpop.f32.mrf.mxu0
    %v957 = vadd.f32 %v908, %v956
    %v958 = vpop.f32.mrf.mxu0
    %v959 = vadd.f32 %v910, %v958
    %960 = vmatmul.bf16.gmra.mxu0 %v863
    %v961 = vpop.f32.mrf.mxu0
    %v962 = vadd.f32 %v913, %v961
    %v963 = vpop.f32.mrf.mxu0
    %v964 = vadd.f32 %v915, %v963
    %965 = vdwg.mxu0
    %967 = vset.pattern.permute.xlu0 47
    %968 = vperm.xlu0 %967, %v927
    %v969 = vpop.permute.xlu0 %968
    %972 = vset.pattern.permute.xlu0 47
    %973 = vperm.xlu0 %972, %v929
    %v974 = vpop.permute.xlu0 %973
    %977 = vset.pattern.permute.xlu0 47
    %978 = vperm.xlu0 %977, %v932
    %v979 = vpop.permute.xlu0 %978
    %982 = vset.pattern.permute.xlu0 47
    %983 = vperm.xlu0 %982, %v934
    %v984 = vpop.permute.xlu0 %983
    %987 = vset.pattern.permute.xlu0 47
    %988 = vperm.xlu0 %987, %v937
    %v989 = vpop.permute.xlu0 %988
    %992 = vset.pattern.permute.xlu0 47
    %993 = vperm.xlu0 %992, %v939
    %v994 = vpop.permute.xlu0 %993
    %997 = vset.pattern.permute.xlu0 47
    %998 = vperm.xlu0 %997, %v942
    %v999 = vpop.permute.xlu0 %998
    %1002 = vset.pattern.permute.xlu0 47
    %1003 = vperm.xlu0 %1002, %v944
    %v1004 = vpop.permute.xlu0 %1003
    %1007 = vset.pattern.permute.xlu0 47
    %1008 = vperm.xlu0 %1007, %v947
    %v1009 = vpop.permute.xlu0 %1008
    %1012 = vset.pattern.permute.xlu0 47
    %1013 = vperm.xlu0 %1012, %v949
    %v1014 = vpop.permute.xlu0 %1013
    %1017 = vset.pattern.permute.xlu0 47
    %1018 = vperm.xlu0 %1017, %v952
    %v1019 = vpop.permute.xlu0 %1018
    %1022 = vset.pattern.permute.xlu0 47
    %1023 = vperm.xlu0 %1022, %v954
    %v1024 = vpop.permute.xlu0 %1023
    %1027 = vset.pattern.permute.xlu0 47
    %1028 = vperm.xlu0 %1027, %v957
    %v1029 = vpop.permute.xlu0 %1028
    %1032 = vset.pattern.permute.xlu0 47
    %1033 = vperm.xlu0 %1032, %v959
    %v1034 = vpop.permute.xlu0 %1033
    %1037 = vset.pattern.permute.xlu0 47
    %1038 = vperm.xlu0 %1037, %v962
    %v1039 = vpop.permute.xlu0 %1038
    %1042 = vset.pattern.permute.xlu0 47
    %1043 = vperm.xlu0 %1042, %v964
    %v1044 = vpop.permute.xlu0 %1043
    %v1046 = vmul.f32 %v969, %v141
    %v1047 = vmul.f32 %v974, %v142
    %v1048 = vmul.f32 %v979, %v143
    %v1049 = vmul.f32 %v984, %v144
    %v1050 = vmul.f32 %v989, %v145
    %v1051 = vmul.f32 %v994, %v146
    %v1052 = vmul.f32 %v999, %v147
    %v1053 = vmul.f32 %v1004, %v148
    %v1054 = vmul.f32 %v1009, %v149
    %v1055 = vmul.f32 %v1014, %v150
    %v1056 = vmul.f32 %v1019, %v151
    %v1057 = vmul.f32 %v1024, %v152
    %v1058 = vmul.f32 %v1029, %v153
    %v1059 = vmul.f32 %v1034, %v154
    %v1060 = vmul.f32 %v1039, %v155
    %v1061 = vmul.f32 %v1044, %v156
    %1078 = vrot.lane.b32.xlu0 %v1046, 43
    %v1079 = vpop.permute.xlu0 %1078
    %1080 = vrot.lane.b32.xlu0 %v1047, 43
    %v1081 = vpop.permute.xlu0 %1080
    %1082 = vrot.lane.b32.xlu0 %v1048, 43
    %v1083 = vpop.permute.xlu0 %1082
    %1084 = vrot.lane.b32.xlu0 %v1049, 43
    %v1085 = vpop.permute.xlu0 %1084
    %1086 = vrot.lane.b32.xlu0 %v1050, 43
    %v1087 = vpop.permute.xlu0 %1086
    %1088 = vrot.lane.b32.xlu0 %v1051, 43
    %v1089 = vpop.permute.xlu0 %1088
    %1090 = vrot.lane.b32.xlu0 %v1052, 43
    %v1091 = vpop.permute.xlu0 %1090
    %1092 = vrot.lane.b32.xlu0 %v1053, 43
    %v1093 = vpop.permute.xlu0 %1092
    %1094 = vrot.lane.b32.xlu0 %v1054, 43
    %v1095 = vpop.permute.xlu0 %1094
    %1096 = vrot.lane.b32.xlu0 %v1055, 43
    %v1097 = vpop.permute.xlu0 %1096
    %1098 = vrot.lane.b32.xlu0 %v1056, 43
    %v1099 = vpop.permute.xlu0 %1098
    %1100 = vrot.lane.b32.xlu0 %v1057, 43
    %v1101 = vpop.permute.xlu0 %1100
    %1102 = vrot.lane.b32.xlu0 %v1058, 43
    %v1103 = vpop.permute.xlu0 %1102
    %1104 = vrot.lane.b32.xlu0 %v1059, 43
    %v1105 = vpop.permute.xlu0 %1104
    %1106 = vrot.lane.b32.xlu0 %v1060, 43
    %v1107 = vpop.permute.xlu0 %1106
    %1108 = vrot.lane.b32.xlu0 %v1061, 43
    %v1109 = vpop.permute.xlu0 %1108
    %v1126 = vsub.f32 %v927, %v1079
    %v1127 = vsub.f32 %v929, %v1081
    %v1128 = vsub.f32 %v932, %v1083
    %v1129 = vsub.f32 %v934, %v1085
    %v1130 = vsub.f32 %v937, %v1087
    %v1131 = vsub.f32 %v939, %v1089
    %v1132 = vsub.f32 %v942, %v1091
    %v1133 = vsub.f32 %v944, %v1093
    %v1134 = vsub.f32 %v947, %v1095
    %v1135 = vsub.f32 %v949, %v1097
    %v1136 = vsub.f32 %v952, %v1099
    %v1137 = vsub.f32 %v954, %v1101
    %v1138 = vsub.f32 %v957, %v1103
    %v1139 = vsub.f32 %v959, %v1105
    %v1140 = vsub.f32 %v962, %v1107
    %v1141 = vsub.f32 %v964, %v1109
    %1158 = vrot.lane.b32.xlu0 %v141, 43
    %v1159 = vpop.permute.xlu0 %1158
    %1160 = vrot.lane.b32.xlu0 %v142, 43
    %v1161 = vpop.permute.xlu0 %1160
    %1162 = vrot.lane.b32.xlu0 %v143, 43
    %v1163 = vpop.permute.xlu0 %1162
    %1164 = vrot.lane.b32.xlu0 %v144, 43
    %v1165 = vpop.permute.xlu0 %1164
    %1166 = vrot.lane.b32.xlu0 %v145, 43
    %v1167 = vpop.permute.xlu0 %1166
    %1168 = vrot.lane.b32.xlu0 %v146, 43
    %v1169 = vpop.permute.xlu0 %1168
    %1170 = vrot.lane.b32.xlu0 %v147, 43
    %v1171 = vpop.permute.xlu0 %1170
    %1172 = vrot.lane.b32.xlu0 %v148, 43
    %v1173 = vpop.permute.xlu0 %1172
    %1174 = vrot.lane.b32.xlu0 %v149, 43
    %v1175 = vpop.permute.xlu0 %1174
    %1176 = vrot.lane.b32.xlu0 %v150, 43
    %v1177 = vpop.permute.xlu0 %1176
    %1178 = vrot.lane.b32.xlu0 %v151, 43
    %v1179 = vpop.permute.xlu0 %1178
    %1180 = vrot.lane.b32.xlu0 %v152, 43
    %v1181 = vpop.permute.xlu0 %1180
    %1182 = vrot.lane.b32.xlu0 %v153, 43
    %v1183 = vpop.permute.xlu0 %1182
    %1184 = vrot.lane.b32.xlu0 %v154, 43
    %v1185 = vpop.permute.xlu0 %1184
    %1186 = vrot.lane.b32.xlu0 %v155, 43
    %v1187 = vpop.permute.xlu0 %1186
    %1188 = vrot.lane.b32.xlu0 %v156, 43
    %v1189 = vpop.permute.xlu0 %1188
    %v1206 = vmul.f32 %v927, %v1159
    %v1207 = vmul.f32 %v929, %v1161
    %v1208 = vmul.f32 %v932, %v1163
    %v1209 = vmul.f32 %v934, %v1165
    %v1210 = vmul.f32 %v937, %v1167
    %v1211 = vmul.f32 %v939, %v1169
    %v1212 = vmul.f32 %v942, %v1171
    %v1213 = vmul.f32 %v944, %v1173
    %v1214 = vmul.f32 %v947, %v1175
    %v1215 = vmul.f32 %v949, %v1177
    %v1216 = vmul.f32 %v952, %v1179
    %v1217 = vmul.f32 %v954, %v1181
    %v1218 = vmul.f32 %v957, %v1183
    %v1219 = vmul.f32 %v959, %v1185
    %v1220 = vmul.f32 %v962, %v1187
    %v1221 = vmul.f32 %v964, %v1189
    %1238 = vrot.lane.b32.xlu0 %v1206, 85
    %v1239 = vpop.permute.xlu0 %1238
    %1240 = vrot.lane.b32.xlu0 %v1207, 85
    %v1241 = vpop.permute.xlu0 %1240
    %1242 = vrot.lane.b32.xlu0 %v1208, 85
    %v1243 = vpop.permute.xlu0 %1242
    %1244 = vrot.lane.b32.xlu0 %v1209, 85
    %v1245 = vpop.permute.xlu0 %1244
    %1246 = vrot.lane.b32.xlu0 %v1210, 85
    %v1247 = vpop.permute.xlu0 %1246
    %1248 = vrot.lane.b32.xlu0 %v1211, 85
    %v1249 = vpop.permute.xlu0 %1248
    %1250 = vrot.lane.b32.xlu0 %v1212, 85
    %v1251 = vpop.permute.xlu0 %1250
    %1252 = vrot.lane.b32.xlu0 %v1213, 85
    %v1253 = vpop.permute.xlu0 %1252
    %1254 = vrot.lane.b32.xlu0 %v1214, 85
    %v1255 = vpop.permute.xlu0 %1254
    %1256 = vrot.lane.b32.xlu0 %v1215, 85
    %v1257 = vpop.permute.xlu0 %1256
    %1258 = vrot.lane.b32.xlu0 %v1216, 85
    %v1259 = vpop.permute.xlu0 %1258
    %1260 = vrot.lane.b32.xlu0 %v1217, 85
    %v1261 = vpop.permute.xlu0 %1260
    %1262 = vrot.lane.b32.xlu0 %v1218, 85
    %v1263 = vpop.permute.xlu0 %1262
    %1264 = vrot.lane.b32.xlu0 %v1219, 85
    %v1265 = vpop.permute.xlu0 %1264
    %1266 = vrot.lane.b32.xlu0 %v1220, 85
    %v1267 = vpop.permute.xlu0 %1266
    %1268 = vrot.lane.b32.xlu0 %v1221, 85
    %v1269 = vpop.permute.xlu0 %1268
    %vm1286 = vcmask 23552
    %v1287 = vsel %vm1286, %v1239, 0.0
    %1288 = vadd.xlane.f32.xlu0 %v1287
    %v1289 = vpop.xlane.xlu0 %1288
    %v1290 = vsel %vm1286, %v1241, 0.0
    %1291 = vadd.xlane.f32.xlu0 %v1290
    %v1292 = vpop.xlane.xlu0 %1291
    %v1293 = vsel %vm1286, %v1243, 0.0
    %1294 = vadd.xlane.f32.xlu0 %v1293
    %v1295 = vpop.xlane.xlu0 %1294
    %v1296 = vsel %vm1286, %v1245, 0.0
    %1297 = vadd.xlane.f32.xlu0 %v1296
    %v1298 = vpop.xlane.xlu0 %1297
    %v1299 = vsel %vm1286, %v1247, 0.0
    %1300 = vadd.xlane.f32.xlu0 %v1299
    %v1301 = vpop.xlane.xlu0 %1300
    %v1302 = vsel %vm1286, %v1249, 0.0
    %1303 = vadd.xlane.f32.xlu0 %v1302
    %v1304 = vpop.xlane.xlu0 %1303
    %v1305 = vsel %vm1286, %v1251, 0.0
    %1306 = vadd.xlane.f32.xlu0 %v1305
    %v1307 = vpop.xlane.xlu0 %1306
    %v1308 = vsel %vm1286, %v1253, 0.0
    %1309 = vadd.xlane.f32.xlu0 %v1308
    %v1310 = vpop.xlane.xlu0 %1309
    %v1311 = vsel %vm1286, %v1255, 0.0
    %1312 = vadd.xlane.f32.xlu0 %v1311
    %v1313 = vpop.xlane.xlu0 %1312
    %v1314 = vsel %vm1286, %v1257, 0.0
    %1315 = vadd.xlane.f32.xlu0 %v1314
    %v1316 = vpop.xlane.xlu0 %1315
    %v1317 = vsel %vm1286, %v1259, 0.0
    %1318 = vadd.xlane.f32.xlu0 %v1317
    %v1319 = vpop.xlane.xlu0 %1318
    %v1320 = vsel %vm1286, %v1261, 0.0
    %1321 = vadd.xlane.f32.xlu0 %v1320
    %v1322 = vpop.xlane.xlu0 %1321
    %v1323 = vsel %vm1286, %v1263, 0.0
    %1324 = vadd.xlane.f32.xlu0 %v1323
    %v1325 = vpop.xlane.xlu0 %1324
    %v1326 = vsel %vm1286, %v1265, 0.0
    %1327 = vadd.xlane.f32.xlu0 %v1326
    %v1328 = vpop.xlane.xlu0 %1327
    %v1329 = vsel %vm1286, %v1267, 0.0
    %1330 = vadd.xlane.f32.xlu0 %v1329
    %v1331 = vpop.xlane.xlu0 %1330
    %v1332 = vsel %vm1286, %v1269, 0.0
    %1333 = vadd.xlane.f32.xlu0 %v1332
    %v1334 = vpop.xlane.xlu0 %1333
    %v1335 = vmax.f32 %v927, 1.0
    %v1336 = vmax.f32 %v929, 1.0
    %v1337 = vmax.f32 %v932, 1.0
    %v1338 = vmax.f32 %v934, 1.0
    %v1339 = vmax.f32 %v937, 1.0
    %v1340 = vmax.f32 %v939, 1.0
    %v1341 = vmax.f32 %v942, 1.0
    %v1342 = vmax.f32 %v944, 1.0
    %v1343 = vmax.f32 %v947, 1.0
    %v1344 = vmax.f32 %v949, 1.0
    %v1345 = vmax.f32 %v952, 1.0
    %v1346 = vmax.f32 %v954, 1.0
    %v1347 = vmax.f32 %v957, 1.0
    %v1348 = vmax.f32 %v959, 1.0
    %v1349 = vmax.f32 %v962, 1.0
    %v1350 = vmax.f32 %v964, 1.0
    %v1351 = vrcp.pop %v1335
    %v1352 = vmul.f32 %v1335, %v1351
    %v1353 = vsub.f32 1.0, %v1352
    %v1354 = vmul.f32 %v1351, %v1353
    %v1355 = vadd.f32 %v1351, %v1354
    %vm1356 = vweird.f32 %v1335
    %vm1357 = vweird.f32 %v1351
    %vm1358 = vmor %vm1356, %vm1357
    %v1359 = vsel %vm1358, %v1351, %v1355
    %v1360 = vand.u32 2147483647, %v1335
    %vm1361 = vcmp.eq.f32.partialorder %v1360, 8.507059e+37
    %v1362 = vand.u32 %v1335, 2147483648
    %v1363 = vor.u32 1.1754944e-38, %v1362
    %v1364 = vsel %vm1361, %v1363, %v1359
    %v1365 = vmul.f32 1.0, %v1364
    %v1366 = vrcp.pop %v1336
    %v1367 = vmul.f32 %v1336, %v1366
    %v1368 = vsub.f32 1.0, %v1367
    %v1369 = vmul.f32 %v1366, %v1368
    %v1370 = vadd.f32 %v1366, %v1369
    %vm1371 = vweird.f32 %v1336
    %vm1372 = vweird.f32 %v1366
    %vm1373 = vmor %vm1371, %vm1372
    %v1374 = vsel %vm1373, %v1366, %v1370
    %v1375 = vand.u32 2147483647, %v1336
    %vm1376 = vcmp.eq.f32.partialorder %v1375, 8.507059e+37
    %v1377 = vand.u32 %v1336, 2147483648
    %v1378 = vor.u32 1.1754944e-38, %v1377
    %v1379 = vsel %vm1376, %v1378, %v1374
    %v1380 = vmul.f32 1.0, %v1379
    %v1381 = vrcp.pop %v1337
    %v1382 = vmul.f32 %v1337, %v1381
    %v1383 = vsub.f32 1.0, %v1382
    %v1384 = vmul.f32 %v1381, %v1383
    %v1385 = vadd.f32 %v1381, %v1384
    %vm1386 = vweird.f32 %v1337
    %vm1387 = vweird.f32 %v1381
    %vm1388 = vmor %vm1386, %vm1387
    %v1389 = vsel %vm1388, %v1381, %v1385
    %v1390 = vand.u32 2147483647, %v1337
    %vm1391 = vcmp.eq.f32.partialorder %v1390, 8.507059e+37
    %v1392 = vand.u32 %v1337, 2147483648
    %v1393 = vor.u32 1.1754944e-38, %v1392
    %v1394 = vsel %vm1391, %v1393, %v1389
    %v1395 = vmul.f32 1.0, %v1394
    %v1396 = vrcp.pop %v1338
    %v1397 = vmul.f32 %v1338, %v1396
    %v1398 = vsub.f32 1.0, %v1397
    %v1399 = vmul.f32 %v1396, %v1398
    %v1400 = vadd.f32 %v1396, %v1399
    %vm1401 = vweird.f32 %v1338
    %vm1402 = vweird.f32 %v1396
    %vm1403 = vmor %vm1401, %vm1402
    %v1404 = vsel %vm1403, %v1396, %v1400
    %v1405 = vand.u32 2147483647, %v1338
    %vm1406 = vcmp.eq.f32.partialorder %v1405, 8.507059e+37
    %v1407 = vand.u32 %v1338, 2147483648
    %v1408 = vor.u32 1.1754944e-38, %v1407
    %v1409 = vsel %vm1406, %v1408, %v1404
    %v1410 = vmul.f32 1.0, %v1409
    %v1411 = vrcp.pop %v1339
    %v1412 = vmul.f32 %v1339, %v1411
    %v1413 = vsub.f32 1.0, %v1412
    %v1414 = vmul.f32 %v1411, %v1413
    %v1415 = vadd.f32 %v1411, %v1414
    %vm1416 = vweird.f32 %v1339
    %vm1417 = vweird.f32 %v1411
    %vm1418 = vmor %vm1416, %vm1417
    %v1419 = vsel %vm1418, %v1411, %v1415
    %v1420 = vand.u32 2147483647, %v1339
    %vm1421 = vcmp.eq.f32.partialorder %v1420, 8.507059e+37
    %v1422 = vand.u32 %v1339, 2147483648
    %v1423 = vor.u32 1.1754944e-38, %v1422
    %v1424 = vsel %vm1421, %v1423, %v1419
    %v1425 = vmul.f32 1.0, %v1424
    %v1426 = vrcp.pop %v1340
    %v1427 = vmul.f32 %v1340, %v1426
    %v1428 = vsub.f32 1.0, %v1427
    %v1429 = vmul.f32 %v1426, %v1428
    %v1430 = vadd.f32 %v1426, %v1429
    %vm1431 = vweird.f32 %v1340
    %vm1432 = vweird.f32 %v1426
    %vm1433 = vmor %vm1431, %vm1432
    %v1434 = vsel %vm1433, %v1426, %v1430
    %v1435 = vand.u32 2147483647, %v1340
    %vm1436 = vcmp.eq.f32.partialorder %v1435, 8.507059e+37
    %v1437 = vand.u32 %v1340, 2147483648
    %v1438 = vor.u32 1.1754944e-38, %v1437
    %v1439 = vsel %vm1436, %v1438, %v1434
    %v1440 = vmul.f32 1.0, %v1439
    %v1441 = vrcp.pop %v1341
    %v1442 = vmul.f32 %v1341, %v1441
    %v1443 = vsub.f32 1.0, %v1442
    %v1444 = vmul.f32 %v1441, %v1443
    %v1445 = vadd.f32 %v1441, %v1444
    %vm1446 = vweird.f32 %v1341
    %vm1447 = vweird.f32 %v1441
    %vm1448 = vmor %vm1446, %vm1447
    %v1449 = vsel %vm1448, %v1441, %v1445
    %v1450 = vand.u32 2147483647, %v1341
    %vm1451 = vcmp.eq.f32.partialorder %v1450, 8.507059e+37
    %v1452 = vand.u32 %v1341, 2147483648
    %v1453 = vor.u32 1.1754944e-38, %v1452
    %v1454 = vsel %vm1451, %v1453, %v1449
    %v1455 = vmul.f32 1.0, %v1454
    %v1456 = vrcp.pop %v1342
    %v1457 = vmul.f32 %v1342, %v1456
    %v1458 = vsub.f32 1.0, %v1457
    %v1459 = vmul.f32 %v1456, %v1458
    %v1460 = vadd.f32 %v1456, %v1459
    %vm1461 = vweird.f32 %v1342
    %vm1462 = vweird.f32 %v1456
    %vm1463 = vmor %vm1461, %vm1462
    %v1464 = vsel %vm1463, %v1456, %v1460
    %v1465 = vand.u32 2147483647, %v1342
    %vm1466 = vcmp.eq.f32.partialorder %v1465, 8.507059e+37
    %v1467 = vand.u32 %v1342, 2147483648
    %v1468 = vor.u32 1.1754944e-38, %v1467
    %v1469 = vsel %vm1466, %v1468, %v1464
    %v1470 = vmul.f32 1.0, %v1469
    %v1471 = vrcp.pop %v1343
    %v1472 = vmul.f32 %v1343, %v1471
    %v1473 = vsub.f32 1.0, %v1472
    %v1474 = vmul.f32 %v1471, %v1473
    %v1475 = vadd.f32 %v1471, %v1474
    %vm1476 = vweird.f32 %v1343
    %vm1477 = vweird.f32 %v1471
    %vm1478 = vmor %vm1476, %vm1477
    %v1479 = vsel %vm1478, %v1471, %v1475
    %v1480 = vand.u32 2147483647, %v1343
    %vm1481 = vcmp.eq.f32.partialorder %v1480, 8.507059e+37
    %v1482 = vand.u32 %v1343, 2147483648
    %v1483 = vor.u32 1.1754944e-38, %v1482
    %v1484 = vsel %vm1481, %v1483, %v1479
    %v1485 = vmul.f32 1.0, %v1484
    %v1486 = vrcp.pop %v1344
    %v1487 = vmul.f32 %v1344, %v1486
    %v1488 = vsub.f32 1.0, %v1487
    %v1489 = vmul.f32 %v1486, %v1488
    %v1490 = vadd.f32 %v1486, %v1489
    %vm1491 = vweird.f32 %v1344
    %vm1492 = vweird.f32 %v1486
    %vm1493 = vmor %vm1491, %vm1492
    %v1494 = vsel %vm1493, %v1486, %v1490
    %v1495 = vand.u32 2147483647, %v1344
    %vm1496 = vcmp.eq.f32.partialorder %v1495, 8.507059e+37
    %v1497 = vand.u32 %v1344, 2147483648
    %v1498 = vor.u32 1.1754944e-38, %v1497
    %v1499 = vsel %vm1496, %v1498, %v1494
    %v1500 = vmul.f32 1.0, %v1499
    %v1501 = vrcp.pop %v1345
    %v1502 = vmul.f32 %v1345, %v1501
    %v1503 = vsub.f32 1.0, %v1502
    %v1504 = vmul.f32 %v1501, %v1503
    %v1505 = vadd.f32 %v1501, %v1504
    %vm1506 = vweird.f32 %v1345
    %vm1507 = vweird.f32 %v1501
    %vm1508 = vmor %vm1506, %vm1507
    %v1509 = vsel %vm1508, %v1501, %v1505
    %v1510 = vand.u32 2147483647, %v1345
    %vm1511 = vcmp.eq.f32.partialorder %v1510, 8.507059e+37
    %v1512 = vand.u32 %v1345, 2147483648
    %v1513 = vor.u32 1.1754944e-38, %v1512
    %v1514 = vsel %vm1511, %v1513, %v1509
    %v1515 = vmul.f32 1.0, %v1514
    %v1516 = vrcp.pop %v1346
    %v1517 = vmul.f32 %v1346, %v1516
    %v1518 = vsub.f32 1.0, %v1517
    %v1519 = vmul.f32 %v1516, %v1518
    %v1520 = vadd.f32 %v1516, %v1519
    %vm1521 = vweird.f32 %v1346
    %vm1522 = vweird.f32 %v1516
    %vm1523 = vmor %vm1521, %vm1522
    %v1524 = vsel %vm1523, %v1516, %v1520
    %v1525 = vand.u32 2147483647, %v1346
    %vm1526 = vcmp.eq.f32.partialorder %v1525, 8.507059e+37
    %v1527 = vand.u32 %v1346, 2147483648
    %v1528 = vor.u32 1.1754944e-38, %v1527
    %v1529 = vsel %vm1526, %v1528, %v1524
    %v1530 = vmul.f32 1.0, %v1529
    %v1531 = vrcp.pop %v1347
    %v1532 = vmul.f32 %v1347, %v1531
    %v1533 = vsub.f32 1.0, %v1532
    %v1534 = vmul.f32 %v1531, %v1533
    %v1535 = vadd.f32 %v1531, %v1534
    %vm1536 = vweird.f32 %v1347
    %vm1537 = vweird.f32 %v1531
    %vm1538 = vmor %vm1536, %vm1537
    %v1539 = vsel %vm1538, %v1531, %v1535
    %v1540 = vand.u32 2147483647, %v1347
    %vm1541 = vcmp.eq.f32.partialorder %v1540, 8.507059e+37
    %v1542 = vand.u32 %v1347, 2147483648
    %v1543 = vor.u32 1.1754944e-38, %v1542
    %v1544 = vsel %vm1541, %v1543, %v1539
    %v1545 = vmul.f32 1.0, %v1544
    %v1546 = vrcp.pop %v1348
    %v1547 = vmul.f32 %v1348, %v1546
    %v1548 = vsub.f32 1.0, %v1547
    %v1549 = vmul.f32 %v1546, %v1548
    %v1550 = vadd.f32 %v1546, %v1549
    %vm1551 = vweird.f32 %v1348
    %vm1552 = vweird.f32 %v1546
    %vm1553 = vmor %vm1551, %vm1552
    %v1554 = vsel %vm1553, %v1546, %v1550
    %v1555 = vand.u32 2147483647, %v1348
    %vm1556 = vcmp.eq.f32.partialorder %v1555, 8.507059e+37
    %v1557 = vand.u32 %v1348, 2147483648
    %v1558 = vor.u32 1.1754944e-38, %v1557
    %v1559 = vsel %vm1556, %v1558, %v1554
    %v1560 = vmul.f32 1.0, %v1559
    %v1561 = vrcp.pop %v1349
    %v1562 = vmul.f32 %v1349, %v1561
    %v1563 = vsub.f32 1.0, %v1562
    %v1564 = vmul.f32 %v1561, %v1563
    %v1565 = vadd.f32 %v1561, %v1564
    %vm1566 = vweird.f32 %v1349
    %vm1567 = vweird.f32 %v1561
    %vm1568 = vmor %vm1566, %vm1567
    %v1569 = vsel %vm1568, %v1561, %v1565
    %v1570 = vand.u32 2147483647, %v1349
    %vm1571 = vcmp.eq.f32.partialorder %v1570, 8.507059e+37
    %v1572 = vand.u32 %v1349, 2147483648
    %v1573 = vor.u32 1.1754944e-38, %v1572
    %v1574 = vsel %vm1571, %v1573, %v1569
    %v1575 = vmul.f32 1.0, %v1574
    %v1576 = vrcp.pop %v1350
    %v1577 = vmul.f32 %v1350, %v1576
    %v1578 = vsub.f32 1.0, %v1577
    %v1579 = vmul.f32 %v1576, %v1578
    %v1580 = vadd.f32 %v1576, %v1579
    %vm1581 = vweird.f32 %v1350
    %vm1582 = vweird.f32 %v1576
    %vm1583 = vmor %vm1581, %vm1582
    %v1584 = vsel %vm1583, %v1576, %v1580
    %v1585 = vand.u32 2147483647, %v1350
    %vm1586 = vcmp.eq.f32.partialorder %v1585, 8.507059e+37
    %v1587 = vand.u32 %v1350, 2147483648
    %v1588 = vor.u32 1.1754944e-38, %v1587
    %v1589 = vsel %vm1586, %v1588, %v1584
    %v1590 = vmul.f32 1.0, %v1589
    %vm1591 = vcmask 351232
    %v1592 = vsel %vm1591, %v927, %v1126
    %v1593 = vsel %vm1591, %v929, %v1127
    %v1594 = vsel %vm1591, %v932, %v1128
    %v1595 = vsel %vm1591, %v934, %v1129
    %v1596 = vsel %vm1591, %v937, %v1130
    %v1597 = vsel %vm1591, %v939, %v1131
    %v1598 = vsel %vm1591, %v942, %v1132
    %v1599 = vsel %vm1591, %v944, %v1133
    %v1600 = vsel %vm1591, %v947, %v1134
    %v1601 = vsel %vm1591, %v949, %v1135
    %v1602 = vsel %vm1591, %v952, %v1136
    %v1603 = vsel %vm1591, %v954, %v1137
    %v1604 = vsel %vm1591, %v957, %v1138
    %v1605 = vsel %vm1591, %v959, %v1139
    %v1606 = vsel %vm1591, %v962, %v1140
    %v1607 = vsel %vm1591, %v964, %v1141
    %vm1608 = vcmask 375808
    %v1609 = vsel %vm1608, %v1592, %v1289
    %v1610 = vsel %vm1608, %v1593, %v1292
    %v1611 = vsel %vm1608, %v1594, %v1295
    %v1612 = vsel %vm1608, %v1595, %v1298
    %v1613 = vsel %vm1608, %v1596, %v1301
    %v1614 = vsel %vm1608, %v1597, %v1304
    %v1615 = vsel %vm1608, %v1598, %v1307
    %v1616 = vsel %vm1608, %v1599, %v1310
    %v1617 = vsel %vm1608, %v1600, %v1313
    %v1618 = vsel %vm1608, %v1601, %v1316
    %v1619 = vsel %vm1608, %v1602, %v1319
    %v1620 = vsel %vm1608, %v1603, %v1322
    %v1621 = vsel %vm1608, %v1604, %v1325
    %v1622 = vsel %vm1608, %v1605, %v1328
    %v1623 = vsel %vm1608, %v1606, %v1331
    %v1624 = vsel %vm1608, %v1607, %v1334
    %vm1625 = vcmask 384000
    %v1626 = vsel %vm1625, %v1609, %v927
    %v1627 = vsel %vm1625, %v1610, %v929
    %v1628 = vsel %vm1625, %v1611, %v932
    %v1629 = vsel %vm1625, %v1612, %v934
    %v1630 = vsel %vm1625, %v1613, %v937
    %v1631 = vsel %vm1625, %v1614, %v939
    %v1632 = vsel %vm1625, %v1615, %v942
    %v1633 = vsel %vm1625, %v1616, %v944
    %v1634 = vsel %vm1625, %v1617, %v947
    %v1635 = vsel %vm1625, %v1618, %v949
    %v1636 = vsel %vm1625, %v1619, %v952
    %v1637 = vsel %vm1625, %v1620, %v954
    %v1638 = vsel %vm1625, %v1621, %v957
    %v1639 = vsel %vm1625, %v1622, %v959
    %v1640 = vsel %vm1625, %v1623, %v962
    %v1641 = vsel %vm1625, %v1624, %v964
    %1643 = vset.pattern.permute.xlu0 47
    %1644 = vperm.xlu0 %1643, %v1365
    %v1645 = vpop.permute.xlu0 %1644
    %1648 = vset.pattern.permute.xlu0 47
    %1649 = vperm.xlu0 %1648, %v1380
    %v1650 = vpop.permute.xlu0 %1649
    %1653 = vset.pattern.permute.xlu0 47
    %1654 = vperm.xlu0 %1653, %v1395
    %v1655 = vpop.permute.xlu0 %1654
    %1658 = vset.pattern.permute.xlu0 47
    %1659 = vperm.xlu0 %1658, %v1410
    %v1660 = vpop.permute.xlu0 %1659
    %1663 = vset.pattern.permute.xlu0 47
    %1664 = vperm.xlu0 %1663, %v1425
    %v1665 = vpop.permute.xlu0 %1664
    %1668 = vset.pattern.permute.xlu0 47
    %1669 = vperm.xlu0 %1668, %v1440
    %v1670 = vpop.permute.xlu0 %1669
    %1673 = vset.pattern.permute.xlu0 47
    %1674 = vperm.xlu0 %1673, %v1455
    %v1675 = vpop.permute.xlu0 %1674
    %1678 = vset.pattern.permute.xlu0 47
    %1679 = vperm.xlu0 %1678, %v1470
    %v1680 = vpop.permute.xlu0 %1679
    %1683 = vset.pattern.permute.xlu0 47
    %1684 = vperm.xlu0 %1683, %v1485
    %v1685 = vpop.permute.xlu0 %1684
    %1688 = vset.pattern.permute.xlu0 47
    %1689 = vperm.xlu0 %1688, %v1500
    %v1690 = vpop.permute.xlu0 %1689
    %1693 = vset.pattern.permute.xlu0 47
    %1694 = vperm.xlu0 %1693, %v1515
    %v1695 = vpop.permute.xlu0 %1694
    %1698 = vset.pattern.permute.xlu0 47
    %1699 = vperm.xlu0 %1698, %v1530
    %v1700 = vpop.permute.xlu0 %1699
    %1703 = vset.pattern.permute.xlu0 47
    %1704 = vperm.xlu0 %1703, %v1545
    %v1705 = vpop.permute.xlu0 %1704
    %1708 = vset.pattern.permute.xlu0 47
    %1709 = vperm.xlu0 %1708, %v1560
    %v1710 = vpop.permute.xlu0 %1709
    %1713 = vset.pattern.permute.xlu0 47
    %1714 = vperm.xlu0 %1713, %v1575
    %v1715 = vpop.permute.xlu0 %1714
    %1718 = vset.pattern.permute.xlu0 47
    %1719 = vperm.xlu0 %1718, %v1590
    %v1720 = vpop.permute.xlu0 %1719
    %v1722 = vmul.f32 %v1626, %v1645
    %v1723 = vmul.f32 %v1627, %v1650
    %v1724 = vmul.f32 %v1628, %v1655
    %v1725 = vmul.f32 %v1629, %v1660
    %v1726 = vmul.f32 %v1630, %v1665
    %v1727 = vmul.f32 %v1631, %v1670
    %v1728 = vmul.f32 %v1632, %v1675
    %v1729 = vmul.f32 %v1633, %v1680
    %v1730 = vmul.f32 %v1634, %v1685
    %v1731 = vmul.f32 %v1635, %v1690
    %v1732 = vmul.f32 %v1636, %v1695
    %v1733 = vmul.f32 %v1637, %v1700
    %v1734 = vmul.f32 %v1638, %v1705
    %v1735 = vmul.f32 %v1639, %v1710
    %v1736 = vmul.f32 %v1640, %v1715
    %v1737 = vmul.f32 %v1641, %v1720
    %v1738 = vld [vmem:[%s4] sm:$0xff]
    %v1739 = vld [vmem:[%s4 + $0x8] sm:$0xff]
    %v1740 = vld [vmem:[%s4 + $0x10] sm:$0xff]
    %v1741 = vld [vmem:[%s4 + $0x18] sm:$0xff]
    %v1742 = vld [vmem:[%s4 + $0x20] sm:$0xff]
    %v1743 = vld [vmem:[%s4 + $0x28] sm:$0xff]
    %v1744 = vld [vmem:[%s5] sm:$0x1]
    %v1746 = vperm.slane %v1744, 0
    %vm1748 = vcmask 392192
    %v1750 = vsel %vm1748, %v1722, 0
    %v1753 = vsel %vm1748, %v1723, 0
    %v1756 = vsel %vm1748, %v1724, 0
    %v1759 = vsel %vm1748, %v1725, 0
    %v1762 = vsel %vm1748, %v1726, 0
    %v1765 = vsel %vm1748, %v1727, 0
    %v1768 = vsel %vm1748, %v1728, 0
    %v1771 = vsel %vm1748, %v1729, 0
    %v1774 = vsel %vm1748, %v1730, 0
    %v1777 = vsel %vm1748, %v1731, 0
    %v1780 = vsel %vm1748, %v1732, 0
    %v1783 = vsel %vm1748, %v1733, 0
    %v1786 = vsel %vm1748, %v1734, 0
    %v1789 = vsel %vm1748, %v1735, 0
    %v1792 = vsel %vm1748, %v1736, 0
    %v1795 = vsel %vm1748, %v1737, 0
    %1797 = vmatpush.msra.mxu0 0.0
    %1798 = vmatpush.msra.mxu0 0.0
    %1799 = vmatpush.msra.mxu0 0.0
    %1800 = vmatpush.msra.mxu0 0.0
    %1801 = vmatpush.msra.mxu0 0.0
    %1802 = vmatpush.msra.mxu0 0.0
    %1803 = vmatpush.msra.mxu0 0.0
    %1804 = vmatpush.msra.mxu0 0.0
    %1805 = vmatpush.msra.mxu0 0.0
    %1806 = vmatpush.msra.mxu0 0.0
    %1807 = vmatpush.msra.mxu0 %v1743
    %1808 = vmatpush.msra.mxu0 %v1742
    %1809 = vmatpush.msra.mxu0 %v1741
    %1810 = vmatpush.msra.mxu0 %v1740
    %1811 = vmatpush.msra.mxu0 %v1739
    %1812 = vmatpush.msra.mxu0 %v1738
    %1813 = vmatmul.f32.gmra.mxu0 %v1750
    %v1814 = vpop.f32.mrf.mxu0
    %v1815 = vadd.f32 %v1746, %v1814
    %1816 = vmatmul.f32.gmra.mxu0 %v1753
    %v1817 = vpop.f32.mrf.mxu0
    %v1818 = vadd.f32 %v1746, %v1817
    %1819 = vmatmul.f32.gmra.mxu0 %v1756
    %v1820 = vpop.f32.mrf.mxu0
    %v1821 = vadd.f32 %v1746, %v1820
    %1822 = vmatmul.f32.gmra.mxu0 %v1759
    %v1823 = vpop.f32.mrf.mxu0
    %v1824 = vadd.f32 %v1746, %v1823
    %1825 = vmatmul.f32.gmra.mxu0 %v1762
    %v1826 = vpop.f32.mrf.mxu0
    %v1827 = vadd.f32 %v1746, %v1826
    %1828 = vmatmul.f32.gmra.mxu0 %v1765
    %v1829 = vpop.f32.mrf.mxu0
    %v1830 = vadd.f32 %v1746, %v1829
    %1831 = vmatmul.f32.gmra.mxu0 %v1768
    %v1832 = vpop.f32.mrf.mxu0
    %v1833 = vadd.f32 %v1746, %v1832
    %1834 = vmatmul.f32.gmra.mxu0 %v1771
    %v1835 = vpop.f32.mrf.mxu0
    %v1836 = vadd.f32 %v1746, %v1835
    %1837 = vmatmul.f32.gmra.mxu0 %v1774
    %v1838 = vpop.f32.mrf.mxu0
    %v1839 = vadd.f32 %v1746, %v1838
    %1840 = vmatmul.f32.gmra.mxu0 %v1777
    %v1841 = vpop.f32.mrf.mxu0
    %v1842 = vadd.f32 %v1746, %v1841
    %1843 = vmatmul.f32.gmra.mxu0 %v1780
    %v1844 = vpop.f32.mrf.mxu0
    %v1845 = vadd.f32 %v1746, %v1844
    %1846 = vmatmul.f32.gmra.mxu0 %v1783
    %v1847 = vpop.f32.mrf.mxu0
    %v1848 = vadd.f32 %v1746, %v1847
    %1849 = vmatmul.f32.gmra.mxu0 %v1786
    %v1850 = vpop.f32.mrf.mxu0
    %v1851 = vadd.f32 %v1746, %v1850
    %1852 = vmatmul.f32.gmra.mxu0 %v1789
    %v1853 = vpop.f32.mrf.mxu0
    %v1854 = vadd.f32 %v1746, %v1853
    %1855 = vmatmul.f32.gmra.mxu0 %v1792
    %v1856 = vpop.f32.mrf.mxu0
    %v1857 = vadd.f32 %v1746, %v1856
    %1858 = vmatmul.f32.gmra.mxu0 %v1795
    %v1859 = vpop.f32.mrf.mxu0
    %v1860 = vadd.f32 %v1746, %v1859
    %1861 = vdwg.mxu0
    %v1862 = vmax.f32 %v1815, 0.0
    %v1863 = vmax.f32 %v1818, 0.0
    %v1864 = vmax.f32 %v1821, 0.0
    %v1865 = vmax.f32 %v1824, 0.0
    %v1866 = vmax.f32 %v1827, 0.0
    %v1867 = vmax.f32 %v1830, 0.0
    %v1868 = vmax.f32 %v1833, 0.0
    %v1869 = vmax.f32 %v1836, 0.0
    %v1870 = vmax.f32 %v1839, 0.0
    %v1871 = vmax.f32 %v1842, 0.0
    %v1872 = vmax.f32 %v1845, 0.0
    %v1873 = vmax.f32 %v1848, 0.0
    %v1874 = vmax.f32 %v1851, 0.0
    %v1875 = vmax.f32 %v1854, 0.0
    %v1876 = vmax.f32 %v1857, 0.0
    %v1877 = vmax.f32 %v1860, 0.0
    %v1878 = vld [vmem:[%s6] sm:$0xff]
    %v1879 = vld [vmem:[%s6 + $0x8] sm:$0xff]
    %v1880 = vld [vmem:[%s6 + $0x10] sm:$0xff]
    %v1881 = vld [vmem:[%s6 + $0x18] sm:$0xff]
    %v1882 = vld [vmem:[%s7] sm:$0x1]
    %v1884 = vperm.slane %v1882, 0
    %vm1886 = vcmask 261120
    %v1888 = vsel %vm1886, %v1862, 0
    %v1891 = vsel %vm1886, %v1863, 0
    %v1894 = vsel %vm1886, %v1864, 0
    %v1897 = vsel %vm1886, %v1865, 0
    %v1900 = vsel %vm1886, %v1866, 0
    %v1903 = vsel %vm1886, %v1867, 0
    %v1906 = vsel %vm1886, %v1868, 0
    %v1909 = vsel %vm1886, %v1869, 0
    %v1912 = vsel %vm1886, %v1870, 0
    %v1915 = vsel %vm1886, %v1871, 0
    %v1918 = vsel %vm1886, %v1872, 0
    %v1921 = vsel %vm1886, %v1873, 0
    %v1924 = vsel %vm1886, %v1874, 0
    %v1927 = vsel %vm1886, %v1875, 0
    %v1930 = vsel %vm1886, %v1876, 0
    %v1933 = vsel %vm1886, %v1877, 0
    %1935 = vmatpush.msra.mxu0 0.0
    %1936 = vmatpush.msra.mxu0 0.0
    %1937 = vmatpush.msra.mxu0 0.0
    %1938 = vmatpush.msra.mxu0 0.0
    %1939 = vmatpush.msra.mxu0 0.0
    %1940 = vmatpush.msra.mxu0 0.0
    %1941 = vmatpush.msra.mxu0 0.0
    %1942 = vmatpush.msra.mxu0 0.0
    %1943 = vmatpush.msra.mxu0 0.0
    %1944 = vmatpush.msra.mxu0 0.0
    %1945 = vmatpush.msra.mxu0 0.0
    %1946 = vmatpush.msra.mxu0 0.0
    %1947 = vmatpush.msra.mxu0 %v1881
    %1948 = vmatpush.msra.mxu0 %v1880
    %1949 = vmatpush.msra.mxu0 %v1879
    %1950 = vmatpush.msra.mxu0 %v1878
    %1951 = vmatmul.f32.gmra.mxu0 %v1888
    %v1952 = vpop.f32.mrf.mxu0
    %v1953 = vadd.f32 %v1884, %v1952
    %1954 = vmatmul.f32.gmra.mxu0 %v1891
    %v1955 = vpop.f32.mrf.mxu0
    %v1956 = vadd.f32 %v1884, %v1955
    %1957 = vmatmul.f32.gmra.mxu0 %v1894
    %v1958 = vpop.f32.mrf.mxu0
    %v1959 = vadd.f32 %v1884, %v1958
    %1960 = vmatmul.f32.gmra.mxu0 %v1897
    %v1961 = vpop.f32.mrf.mxu0
    %v1962 = vadd.f32 %v1884, %v1961
    %1963 = vmatmul.f32.gmra.mxu0 %v1900
    %v1964 = vpop.f32.mrf.mxu0
    %v1965 = vadd.f32 %v1884, %v1964
    %1966 = vmatmul.f32.gmra.mxu0 %v1903
    %v1967 = vpop.f32.mrf.mxu0
    %v1968 = vadd.f32 %v1884, %v1967
    %1969 = vmatmul.f32.gmra.mxu0 %v1906
    %v1970 = vpop.f32.mrf.mxu0
    %v1971 = vadd.f32 %v1884, %v1970
    %1972 = vmatmul.f32.gmra.mxu0 %v1909
    %v1973 = vpop.f32.mrf.mxu0
    %v1974 = vadd.f32 %v1884, %v1973
    %1975 = vmatmul.f32.gmra.mxu0 %v1912
    %v1976 = vpop.f32.mrf.mxu0
    %v1977 = vadd.f32 %v1884, %v1976
    %1978 = vmatmul.f32.gmra.mxu0 %v1915
    %v1979 = vpop.f32.mrf.mxu0
    %v1980 = vadd.f32 %v1884, %v1979
    %1981 = vmatmul.f32.gmra.mxu0 %v1918
    %v1982 = vpop.f32.mrf.mxu0
    %v1983 = vadd.f32 %v1884, %v1982
    %1984 = vmatmul.f32.gmra.mxu0 %v1921
    %v1985 = vpop.f32.mrf.mxu0
    %v1986 = vadd.f32 %v1884, %v1985
    %1987 = vmatmul.f32.gmra.mxu0 %v1924
    %v1988 = vpop.f32.mrf.mxu0
    %v1989 = vadd.f32 %v1884, %v1988
    %1990 = vmatmul.f32.gmra.mxu0 %v1927
    %v1991 = vpop.f32.mrf.mxu0
    %v1992 = vadd.f32 %v1884, %v1991
    %1993 = vmatmul.f32.gmra.mxu0 %v1930
    %v1994 = vpop.f32.mrf.mxu0
    %v1995 = vadd.f32 %v1884, %v1994
    %1996 = vmatmul.f32.gmra.mxu0 %v1933
    %v1997 = vpop.f32.mrf.mxu0
    %v1998 = vadd.f32 %v1884, %v1997
    %1999 = vdwg.mxu0
    %2016 = vrot.lane.b32.xlu0 %v1953, 124
    %v2017 = vpop.permute.xlu0 %2016
    %2018 = vrot.lane.b32.xlu0 %v1956, 124
    %v2019 = vpop.permute.xlu0 %2018
    %2020 = vrot.lane.b32.xlu0 %v1959, 124
    %v2021 = vpop.permute.xlu0 %2020
    %2022 = vrot.lane.b32.xlu0 %v1962, 124
    %v2023 = vpop.permute.xlu0 %2022
    %2024 = vrot.lane.b32.xlu0 %v1965, 124
    %v2025 = vpop.permute.xlu0 %2024
    %2026 = vrot.lane.b32.xlu0 %v1968, 124
    %v2027 = vpop.permute.xlu0 %2026
    %2028 = vrot.lane.b32.xlu0 %v1971, 124
    %v2029 = vpop.permute.xlu0 %2028
    %2030 = vrot.lane.b32.xlu0 %v1974, 124
    %v2031 = vpop.permute.xlu0 %2030
    %2032 = vrot.lane.b32.xlu0 %v1977, 124
    %v2033 = vpop.permute.xlu0 %2032
    %2034 = vrot.lane.b32.xlu0 %v1980, 124
    %v2035 = vpop.permute.xlu0 %2034
    %2036 = vrot.lane.b32.xlu0 %v1983, 124
    %v2037 = vpop.permute.xlu0 %2036
    %2038 = vrot.lane.b32.xlu0 %v1986, 124
    %v2039 = vpop.permute.xlu0 %2038
    %2040 = vrot.lane.b32.xlu0 %v1989, 124
    %v2041 = vpop.permute.xlu0 %2040
    %2042 = vrot.lane.b32.xlu0 %v1992, 124
    %v2043 = vpop.permute.xlu0 %2042
    %2044 = vrot.lane.b32.xlu0 %v1995, 124
    %v2045 = vpop.permute.xlu0 %2044
    %2046 = vrot.lane.b32.xlu0 %v1998, 124
    %v2047 = vpop.permute.xlu0 %2046
    %v2064 = vmul.f32 %v141, %v2017
    %v2065 = vmul.f32 %v142, %v2019
    %v2066 = vmul.f32 %v143, %v2021
    %v2067 = vmul.f32 %v144, %v2023
    %v2068 = vmul.f32 %v145, %v2025
    %v2069 = vmul.f32 %v146, %v2027
    %v2070 = vmul.f32 %v147, %v2029
    %v2071 = vmul.f32 %v148, %v2031
    %v2072 = vmul.f32 %v149, %v2033
    %v2073 = vmul.f32 %v150, %v2035
    %v2074 = vmul.f32 %v151, %v2037
    %v2075 = vmul.f32 %v152, %v2039
    %v2076 = vmul.f32 %v153, %v2041
    %v2077 = vmul.f32 %v154, %v2043
    %v2078 = vmul.f32 %v155, %v2045
    %v2079 = vmul.f32 %v156, %v2047
    %v2080 = vsel %vm1286, %v2064, 0.0
    %2081 = vadd.xlane.f32.xlu0 %v2080
    %v2082 = vpop.xlane.xlu0 %2081
    %v2083 = vsel %vm1286, %v2065, 0.0
    %2084 = vadd.xlane.f32.xlu0 %v2083
    %v2085 = vpop.xlane.xlu0 %2084
    %v2086 = vsel %vm1286, %v2066, 0.0
    %2087 = vadd.xlane.f32.xlu0 %v2086
    %v2088 = vpop.xlane.xlu0 %2087
    %v2089 = vsel %vm1286, %v2067, 0.0
    %2090 = vadd.xlane.f32.xlu0 %v2089
    %v2091 = vpop.xlane.xlu0 %2090
    %v2092 = vsel %vm1286, %v2068, 0.0
    %2093 = vadd.xlane.f32.xlu0 %v2092
    %v2094 = vpop.xlane.xlu0 %2093
    %v2095 = vsel %vm1286, %v2069, 0.0
    %2096 = vadd.xlane.f32.xlu0 %v2095
    %v2097 = vpop.xlane.xlu0 %2096
    %v2098 = vsel %vm1286, %v2070, 0.0
    %2099 = vadd.xlane.f32.xlu0 %v2098
    %v2100 = vpop.xlane.xlu0 %2099
    %v2101 = vsel %vm1286, %v2071, 0.0
    %2102 = vadd.xlane.f32.xlu0 %v2101
    %v2103 = vpop.xlane.xlu0 %2102
    %v2104 = vsel %vm1286, %v2072, 0.0
    %2105 = vadd.xlane.f32.xlu0 %v2104
    %v2106 = vpop.xlane.xlu0 %2105
    %v2107 = vsel %vm1286, %v2073, 0.0
    %2108 = vadd.xlane.f32.xlu0 %v2107
    %v2109 = vpop.xlane.xlu0 %2108
    %v2110 = vsel %vm1286, %v2074, 0.0
    %2111 = vadd.xlane.f32.xlu0 %v2110
    %v2112 = vpop.xlane.xlu0 %2111
    %v2113 = vsel %vm1286, %v2075, 0.0
    %2114 = vadd.xlane.f32.xlu0 %v2113
    %v2115 = vpop.xlane.xlu0 %2114
    %v2116 = vsel %vm1286, %v2076, 0.0
    %2117 = vadd.xlane.f32.xlu0 %v2116
    %v2118 = vpop.xlane.xlu0 %2117
    %v2119 = vsel %vm1286, %v2077, 0.0
    %2120 = vadd.xlane.f32.xlu0 %v2119
    %v2121 = vpop.xlane.xlu0 %2120
    %v2122 = vsel %vm1286, %v2078, 0.0
    %2123 = vadd.xlane.f32.xlu0 %v2122
    %v2124 = vpop.xlane.xlu0 %2123
    %v2125 = vsel %vm1286, %v2079, 0.0
    %2126 = vadd.xlane.f32.xlu0 %v2125
    %v2127 = vpop.xlane.xlu0 %2126
    %v2128 = vsub.f32 0.0, %v2082
    %v2129 = vsub.f32 0.0, %v2085
    %v2130 = vsub.f32 0.0, %v2088
    %v2131 = vsub.f32 0.0, %v2091
    %v2132 = vsub.f32 0.0, %v2094
    %v2133 = vsub.f32 0.0, %v2097
    %v2134 = vsub.f32 0.0, %v2100
    %v2135 = vsub.f32 0.0, %v2103
    %v2136 = vsub.f32 0.0, %v2106
    %v2137 = vsub.f32 0.0, %v2109
    %v2138 = vsub.f32 0.0, %v2112
    %v2139 = vsub.f32 0.0, %v2115
    %v2140 = vsub.f32 0.0, %v2118
    %v2141 = vsub.f32 0.0, %v2121
    %v2142 = vsub.f32 0.0, %v2124
    %v2143 = vsub.f32 0.0, %v2127
    %v2144 = vsub.f32 0.0, %v2128
    %v2145 = vsub.f32 0.0, %v2129
    %v2146 = vsub.f32 0.0, %v2130
    %v2147 = vsub.f32 0.0, %v2131
    %v2148 = vsub.f32 0.0, %v2132
    %v2149 = vsub.f32 0.0, %v2133
    %v2150 = vsub.f32 0.0, %v2134
    %v2151 = vsub.f32 0.0, %v2135
    %v2152 = vsub.f32 0.0, %v2136
    %v2153 = vsub.f32 0.0, %v2137
    %v2154 = vsub.f32 0.0, %v2138
    %v2155 = vsub.f32 0.0, %v2139
    %v2156 = vsub.f32 0.0, %v2140
    %v2157 = vsub.f32 0.0, %v2141
    %v2158 = vsub.f32 0.0, %v2142
    %v2159 = vsub.f32 0.0, %v2143
    %v2160 = vmul.f32 %v2144, 0.5
    %v2161 = vmul.f32 %v2145, 0.5
    %v2162 = vmul.f32 %v2146, 0.5
    %v2163 = vmul.f32 %v2147, 0.5
    %v2164 = vmul.f32 %v2148, 0.5
    %v2165 = vmul.f32 %v2149, 0.5
    %v2166 = vmul.f32 %v2150, 0.5
    %v2167 = vmul.f32 %v2151, 0.5
    %v2168 = vmul.f32 %v2152, 0.5
    %v2169 = vmul.f32 %v2153, 0.5
    %v2170 = vmul.f32 %v2154, 0.5
    %v2171 = vmul.f32 %v2155, 0.5
    %v2172 = vmul.f32 %v2156, 0.5
    %v2173 = vmul.f32 %v2157, 0.5
    %v2174 = vmul.f32 %v2158, 0.5
    %v2175 = vmul.f32 %v2159, 0.5
    %v2176 = vadd.f32 %v2160, 0.5
    %v2177 = vadd.f32 %v2161, 0.5
    %v2178 = vadd.f32 %v2162, 0.5
    %v2179 = vadd.f32 %v2163, 0.5
    %v2180 = vadd.f32 %v2164, 0.5
    %v2181 = vadd.f32 %v2165, 0.5
    %v2182 = vadd.f32 %v2166, 0.5
    %v2183 = vadd.f32 %v2167, 0.5
    %v2184 = vadd.f32 %v2168, 0.5
    %v2185 = vadd.f32 %v2169, 0.5
    %v2186 = vadd.f32 %v2170, 0.5
    %v2187 = vadd.f32 %v2171, 0.5
    %v2188 = vadd.f32 %v2172, 0.5
    %v2189 = vadd.f32 %v2173, 0.5
    %v2190 = vadd.f32 %v2174, 0.5
    %v2191 = vadd.f32 %v2175, 0.5
    %v2192 = vmax.f32 %v2176, 0.0
    %v2193 = vmax.f32 %v2177, 0.0
    %v2194 = vmax.f32 %v2178, 0.0
    %v2195 = vmax.f32 %v2179, 0.0
    %v2196 = vmax.f32 %v2180, 0.0
    %v2197 = vmax.f32 %v2181, 0.0
    %v2198 = vmax.f32 %v2182, 0.0
    %v2199 = vmax.f32 %v2183, 0.0
    %v2200 = vmax.f32 %v2184, 0.0
    %v2201 = vmax.f32 %v2185, 0.0
    %v2202 = vmax.f32 %v2186, 0.0
    %v2203 = vmax.f32 %v2187, 0.0
    %v2204 = vmax.f32 %v2188, 0.0
    %v2205 = vmax.f32 %v2189, 0.0
    %v2206 = vmax.f32 %v2190, 0.0
    %v2207 = vmax.f32 %v2191, 0.0
    %s2208 = ssub.f32 1.0, %s44
    %v2209 = vstv %s2208
    %v2210 = vmul.f32 %v2192, %v2209
    %v2211 = vmul.f32 %v2193, %v2209
    %v2212 = vmul.f32 %v2194, %v2209
    %v2213 = vmul.f32 %v2195, %v2209
    %v2214 = vmul.f32 %v2196, %v2209
    %v2215 = vmul.f32 %v2197, %v2209
    %v2216 = vmul.f32 %v2198, %v2209
    %v2217 = vmul.f32 %v2199, %v2209
    %v2218 = vmul.f32 %v2200, %v2209
    %v2219 = vmul.f32 %v2201, %v2209
    %v2220 = vmul.f32 %v2202, %v2209
    %v2221 = vmul.f32 %v2203, %v2209
    %v2222 = vmul.f32 %v2204, %v2209
    %v2223 = vmul.f32 %v2205, %v2209
    %v2224 = vmul.f32 %v2206, %v2209
    %v2225 = vmul.f32 %v2207, %v2209
    %v2226 = vmax.f32 %v2144, 0.0
    %v2227 = vmax.f32 %v2145, 0.0
    %v2228 = vmax.f32 %v2146, 0.0
    %v2229 = vmax.f32 %v2147, 0.0
    %v2230 = vmax.f32 %v2148, 0.0
    %v2231 = vmax.f32 %v2149, 0.0
    %v2232 = vmax.f32 %v2150, 0.0
    %v2233 = vmax.f32 %v2151, 0.0
    %v2234 = vmax.f32 %v2152, 0.0
    %v2235 = vmax.f32 %v2153, 0.0
    %v2236 = vmax.f32 %v2154, 0.0
    %v2237 = vmax.f32 %v2155, 0.0
    %v2238 = vmax.f32 %v2156, 0.0
    %v2239 = vmax.f32 %v2157, 0.0
    %v2240 = vmax.f32 %v2158, 0.0
    %v2241 = vmax.f32 %v2159, 0.0
    %v2242 = vstv %s44
    %v2243 = vmul.f32 %v2226, %v2242
    %v2244 = vmul.f32 %v2227, %v2242
    %v2245 = vmul.f32 %v2228, %v2242
    %v2246 = vmul.f32 %v2229, %v2242
    %v2247 = vmul.f32 %v2230, %v2242
    %v2248 = vmul.f32 %v2231, %v2242
    %v2249 = vmul.f32 %v2232, %v2242
    %v2250 = vmul.f32 %v2233, %v2242
    %v2251 = vmul.f32 %v2234, %v2242
    %v2252 = vmul.f32 %v2235, %v2242
    %v2253 = vmul.f32 %v2236, %v2242
    %v2254 = vmul.f32 %v2237, %v2242
    %v2255 = vmul.f32 %v2238, %v2242
    %v2256 = vmul.f32 %v2239, %v2242
    %v2257 = vmul.f32 %v2240, %v2242
    %v2258 = vmul.f32 %v2241, %v2242
    %v2259 = vadd.f32 %v2210, %v2243
    %v2260 = vadd.f32 %v2211, %v2244
    %v2261 = vadd.f32 %v2212, %v2245
    %v2262 = vadd.f32 %v2213, %v2246
    %v2263 = vadd.f32 %v2214, %v2247
    %v2264 = vadd.f32 %v2215, %v2248
    %v2265 = vadd.f32 %v2216, %v2249
    %v2266 = vadd.f32 %v2217, %v2250
    %v2267 = vadd.f32 %v2218, %v2251
    %v2268 = vadd.f32 %v2219, %v2252
    %v2269 = vadd.f32 %v2220, %v2253
    %v2270 = vadd.f32 %v2221, %v2254
    %v2271 = vadd.f32 %v2222, %v2255
    %v2272 = vadd.f32 %v2223, %v2256
    %v2273 = vadd.f32 %v2224, %v2257
    %v2274 = vadd.f32 %v2225, %v2258
    %v2275 = vsub.f32 0.0, %v2259
    %v2276 = vsub.f32 0.0, %v2260
    %v2277 = vsub.f32 0.0, %v2261
    %v2278 = vsub.f32 0.0, %v2262
    %v2279 = vsub.f32 0.0, %v2263
    %v2280 = vsub.f32 0.0, %v2264
    %v2281 = vsub.f32 0.0, %v2265
    %v2282 = vsub.f32 0.0, %v2266
    %v2283 = vsub.f32 0.0, %v2267
    %v2284 = vsub.f32 0.0, %v2268
    %v2285 = vsub.f32 0.0, %v2269
    %v2286 = vsub.f32 0.0, %v2270
    %v2287 = vsub.f32 0.0, %v2271
    %v2288 = vsub.f32 0.0, %v2272
    %v2289 = vsub.f32 0.0, %v2273
    %v2290 = vsub.f32 0.0, %v2274
    %v2291 = vmul.f32 %v2275, %v221
    %v2292 = vmul.f32 %v2276, %v222
    %v2293 = vmul.f32 %v2277, %v223
    %v2294 = vmul.f32 %v2278, %v224
    %v2295 = vmul.f32 %v2279, %v225
    %v2296 = vmul.f32 %v2280, %v226
    %v2297 = vmul.f32 %v2281, %v227
    %v2298 = vmul.f32 %v2282, %v228
    %v2299 = vmul.f32 %v2283, %v229
    %v2300 = vmul.f32 %v2284, %v230
    %v2301 = vmul.f32 %v2285, %v231
    %v2302 = vmul.f32 %v2286, %v232
    %v2303 = vmul.f32 %v2287, %v233
    %v2304 = vmul.f32 %v2288, %v234
    %v2305 = vmul.f32 %v2289, %v235
    %v2306 = vmul.f32 %v2290, %v236
    %v2307 = vmul.f32 %v2291, 0.5
    %v2308 = vmul.f32 %v2292, 0.5
    %v2309 = vmul.f32 %v2293, 0.5
    %v2310 = vmul.f32 %v2294, 0.5
    %v2311 = vmul.f32 %v2295, 0.5
    %v2312 = vmul.f32 %v2296, 0.5
    %v2313 = vmul.f32 %v2297, 0.5
    %v2314 = vmul.f32 %v2298, 0.5
    %v2315 = vmul.f32 %v2299, 0.5
    %v2316 = vmul.f32 %v2300, 0.5
    %v2317 = vmul.f32 %v2301, 0.5
    %v2318 = vmul.f32 %v2302, 0.5
    %v2319 = vmul.f32 %v2303, 0.5
    %v2320 = vmul.f32 %v2304, 0.5
    %v2321 = vmul.f32 %v2305, 0.5
    %v2322 = vmul.f32 %v2306, 0.5
    %2339 = vrot.lane.b32.xlu0 %v2307, 3
    %v2340 = vpop.permute.xlu0 %2339
    %2341 = vrot.lane.b32.xlu0 %v2308, 3
    %v2342 = vpop.permute.xlu0 %2341
    %2343 = vrot.lane.b32.xlu0 %v2309, 3
    %v2344 = vpop.permute.xlu0 %2343
    %2345 = vrot.lane.b32.xlu0 %v2310, 3
    %v2346 = vpop.permute.xlu0 %2345
    %2347 = vrot.lane.b32.xlu0 %v2311, 3
    %v2348 = vpop.permute.xlu0 %2347
    %2349 = vrot.lane.b32.xlu0 %v2312, 3
    %v2350 = vpop.permute.xlu0 %2349
    %2351 = vrot.lane.b32.xlu0 %v2313, 3
    %v2352 = vpop.permute.xlu0 %2351
    %2353 = vrot.lane.b32.xlu0 %v2314, 3
    %v2354 = vpop.permute.xlu0 %2353
    %2355 = vrot.lane.b32.xlu0 %v2315, 3
    %v2356 = vpop.permute.xlu0 %2355
    %2357 = vrot.lane.b32.xlu0 %v2316, 3
    %v2358 = vpop.permute.xlu0 %2357
    %2359 = vrot.lane.b32.xlu0 %v2317, 3
    %v2360 = vpop.permute.xlu0 %2359
    %2361 = vrot.lane.b32.xlu0 %v2318, 3
    %v2362 = vpop.permute.xlu0 %2361
    %2363 = vrot.lane.b32.xlu0 %v2319, 3
    %v2364 = vpop.permute.xlu0 %2363
    %2365 = vrot.lane.b32.xlu0 %v2320, 3
    %v2366 = vpop.permute.xlu0 %2365
    %2367 = vrot.lane.b32.xlu0 %v2321, 3
    %v2368 = vpop.permute.xlu0 %2367
    %2369 = vrot.lane.b32.xlu0 %v2322, 3
    %v2370 = vpop.permute.xlu0 %2369
    %v2387 = vsub.f32 %v1953, %v2340
    %v2388 = vsub.f32 %v1956, %v2342
    %v2389 = vsub.f32 %v1959, %v2344
    %v2390 = vsub.f32 %v1962, %v2346
    %v2391 = vsub.f32 %v1965, %v2348
    %v2392 = vsub.f32 %v1968, %v2350
    %v2393 = vsub.f32 %v1971, %v2352
    %v2394 = vsub.f32 %v1974, %v2354
    %v2395 = vsub.f32 %v1977, %v2356
    %v2396 = vsub.f32 %v1980, %v2358
    %v2397 = vsub.f32 %v1983, %v2360
    %v2398 = vsub.f32 %v1986, %v2362
    %v2399 = vsub.f32 %v1989, %v2364
    %v2400 = vsub.f32 %v1992, %v2366
    %v2401 = vsub.f32 %v1995, %v2368
    %v2402 = vsub.f32 %v1998, %v2370
    %v2403 = vstv %s43
    %v2404 = vmul.f32 %v2387, %v2403
    %v2405 = vmul.f32 %v2388, %v2403
    %v2406 = vmul.f32 %v2389, %v2403
    %v2407 = vmul.f32 %v2390, %v2403
    %v2408 = vmul.f32 %v2391, %v2403
    %v2409 = vmul.f32 %v2392, %v2403
    %v2410 = vmul.f32 %v2393, %v2403
    %v2411 = vmul.f32 %v2394, %v2403
    %v2412 = vmul.f32 %v2395, %v2403
    %v2413 = vmul.f32 %v2396, %v2403
    %v2414 = vmul.f32 %v2397, %v2403
    %v2415 = vmul.f32 %v2398, %v2403
    %v2416 = vmul.f32 %v2399, %v2403
    %v2417 = vmul.f32 %v2400, %v2403
    %v2418 = vmul.f32 %v2401, %v2403
    %v2419 = vmul.f32 %v2402, %v2403
    %v2420 = vxor.u32 %v2404, 2147483648
    %v2421 = vxor.u32 %v2405, 2147483648
    %v2422 = vxor.u32 %v2406, 2147483648
    %v2423 = vxor.u32 %v2407, 2147483648
    %v2424 = vxor.u32 %v2408, 2147483648
    %v2425 = vxor.u32 %v2409, 2147483648
    %v2426 = vxor.u32 %v2410, 2147483648
    %v2427 = vxor.u32 %v2411, 2147483648
    %v2428 = vxor.u32 %v2412, 2147483648
    %v2429 = vxor.u32 %v2413, 2147483648
    %v2430 = vxor.u32 %v2414, 2147483648
    %v2431 = vxor.u32 %v2415, 2147483648
    %v2432 = vxor.u32 %v2416, 2147483648
    %v2433 = vxor.u32 %v2417, 2147483648
    %v2434 = vxor.u32 %v2418, 2147483648
    %v2435 = vxor.u32 %v2419, 2147483648
    %v2436 = vmul.f32 %v2420, 1.442695
    %v2437 = vpow.pop %v2436
    %v2438 = vmul.f32 %v2421, 1.442695
    %v2439 = vpow.pop %v2438
    %v2440 = vmul.f32 %v2422, 1.442695
    %v2441 = vpow.pop %v2440
    %v2442 = vmul.f32 %v2423, 1.442695
    %v2443 = vpow.pop %v2442
    %v2444 = vmul.f32 %v2424, 1.442695
    %v2445 = vpow.pop %v2444
    %v2446 = vmul.f32 %v2425, 1.442695
    %v2447 = vpow.pop %v2446
    %v2448 = vmul.f32 %v2426, 1.442695
    %v2449 = vpow.pop %v2448
    %v2450 = vmul.f32 %v2427, 1.442695
    %v2451 = vpow.pop %v2450
    %v2452 = vmul.f32 %v2428, 1.442695
    %v2453 = vpow.pop %v2452
    %v2454 = vmul.f32 %v2429, 1.442695
    %v2455 = vpow.pop %v2454
    %v2456 = vmul.f32 %v2430, 1.442695
    %v2457 = vpow.pop %v2456
    %v2458 = vmul.f32 %v2431, 1.442695
    %v2459 = vpow.pop %v2458
    %v2460 = vmul.f32 %v2432, 1.442695
    %v2461 = vpow.pop %v2460
    %v2462 = vmul.f32 %v2433, 1.442695
    %v2463 = vpow.pop %v2462
    %v2464 = vmul.f32 %v2434, 1.442695
    %v2465 = vpow.pop %v2464
    %v2466 = vmul.f32 %v2435, 1.442695
    %v2467 = vpow.pop %v2466
    %v2468 = vadd.f32 %v2437, 1.0
    %v2469 = vadd.f32 %v2439, 1.0
    %v2470 = vadd.f32 %v2441, 1.0
    %v2471 = vadd.f32 %v2443, 1.0
    %v2472 = vadd.f32 %v2445, 1.0
    %v2473 = vadd.f32 %v2447, 1.0
    %v2474 = vadd.f32 %v2449, 1.0
    %v2475 = vadd.f32 %v2451, 1.0
    %v2476 = vadd.f32 %v2453, 1.0
    %v2477 = vadd.f32 %v2455, 1.0
    %v2478 = vadd.f32 %v2457, 1.0
    %v2479 = vadd.f32 %v2459, 1.0
    %v2480 = vadd.f32 %v2461, 1.0
    %v2481 = vadd.f32 %v2463, 1.0
    %v2482 = vadd.f32 %v2465, 1.0
    %v2483 = vadd.f32 %v2467, 1.0
    %v2484 = vrcp.pop %v2468
    %v2485 = vmul.f32 %v2468, %v2484
    %v2486 = vsub.f32 1.0, %v2485
    %v2487 = vmul.f32 %v2484, %v2486
    %v2488 = vadd.f32 %v2484, %v2487
    %vm2489 = vweird.f32 %v2468
    %vm2490 = vweird.f32 %v2484
    %vm2491 = vmor %vm2489, %vm2490
    %v2492 = vsel %vm2491, %v2484, %v2488
    %v2493 = vand.u32 2147483647, %v2468
    %vm2494 = vcmp.eq.f32.partialorder %v2493, 8.507059e+37
    %v2495 = vand.u32 %v2468, 2147483648
    %v2496 = vor.u32 1.1754944e-38, %v2495
    %v2497 = vsel %vm2494, %v2496, %v2492
    %v2498 = vmul.f32 1.0, %v2497
    %v2499 = vrcp.pop %v2469
    %v2500 = vmul.f32 %v2469, %v2499
    %v2501 = vsub.f32 1.0, %v2500
    %v2502 = vmul.f32 %v2499, %v2501
    %v2503 = vadd.f32 %v2499, %v2502
    %vm2504 = vweird.f32 %v2469
    %vm2505 = vweird.f32 %v2499
    %vm2506 = vmor %vm2504, %vm2505
    %v2507 = vsel %vm2506, %v2499, %v2503
    %v2508 = vand.u32 2147483647, %v2469
    %vm2509 = vcmp.eq.f32.partialorder %v2508, 8.507059e+37
    %v2510 = vand.u32 %v2469, 2147483648
    %v2511 = vor.u32 1.1754944e-38, %v2510
    %v2512 = vsel %vm2509, %v2511, %v2507
    %v2513 = vmul.f32 1.0, %v2512
    %v2514 = vrcp.pop %v2470
    %v2515 = vmul.f32 %v2470, %v2514
    %v2516 = vsub.f32 1.0, %v2515
    %v2517 = vmul.f32 %v2514, %v2516
    %v2518 = vadd.f32 %v2514, %v2517
    %vm2519 = vweird.f32 %v2470
    %vm2520 = vweird.f32 %v2514
    %vm2521 = vmor %vm2519, %vm2520
    %v2522 = vsel %vm2521, %v2514, %v2518
    %v2523 = vand.u32 2147483647, %v2470
    %vm2524 = vcmp.eq.f32.partialorder %v2523, 8.507059e+37
    %v2525 = vand.u32 %v2470, 2147483648
    %v2526 = vor.u32 1.1754944e-38, %v2525
    %v2527 = vsel %vm2524, %v2526, %v2522
    %v2528 = vmul.f32 1.0, %v2527
    %v2529 = vrcp.pop %v2471
    %v2530 = vmul.f32 %v2471, %v2529
    %v2531 = vsub.f32 1.0, %v2530
    %v2532 = vmul.f32 %v2529, %v2531
    %v2533 = vadd.f32 %v2529, %v2532
    %vm2534 = vweird.f32 %v2471
    %vm2535 = vweird.f32 %v2529
    %vm2536 = vmor %vm2534, %vm2535
    %v2537 = vsel %vm2536, %v2529, %v2533
    %v2538 = vand.u32 2147483647, %v2471
    %vm2539 = vcmp.eq.f32.partialorder %v2538, 8.507059e+37
    %v2540 = vand.u32 %v2471, 2147483648
    %v2541 = vor.u32 1.1754944e-38, %v2540
    %v2542 = vsel %vm2539, %v2541, %v2537
    %v2543 = vmul.f32 1.0, %v2542
    %v2544 = vrcp.pop %v2472
    %v2545 = vmul.f32 %v2472, %v2544
    %v2546 = vsub.f32 1.0, %v2545
    %v2547 = vmul.f32 %v2544, %v2546
    %v2548 = vadd.f32 %v2544, %v2547
    %vm2549 = vweird.f32 %v2472
    %vm2550 = vweird.f32 %v2544
    %vm2551 = vmor %vm2549, %vm2550
    %v2552 = vsel %vm2551, %v2544, %v2548
    %v2553 = vand.u32 2147483647, %v2472
    %vm2554 = vcmp.eq.f32.partialorder %v2553, 8.507059e+37
    %v2555 = vand.u32 %v2472, 2147483648
    %v2556 = vor.u32 1.1754944e-38, %v2555
    %v2557 = vsel %vm2554, %v2556, %v2552
    %v2558 = vmul.f32 1.0, %v2557
    %v2559 = vrcp.pop %v2473
    %v2560 = vmul.f32 %v2473, %v2559
    %v2561 = vsub.f32 1.0, %v2560
    %v2562 = vmul.f32 %v2559, %v2561
    %v2563 = vadd.f32 %v2559, %v2562
    %vm2564 = vweird.f32 %v2473
    %vm2565 = vweird.f32 %v2559
    %vm2566 = vmor %vm2564, %vm2565
    %v2567 = vsel %vm2566, %v2559, %v2563
    %v2568 = vand.u32 2147483647, %v2473
    %vm2569 = vcmp.eq.f32.partialorder %v2568, 8.507059e+37
    %v2570 = vand.u32 %v2473, 2147483648
    %v2571 = vor.u32 1.1754944e-38, %v2570
    %v2572 = vsel %vm2569, %v2571, %v2567
    %v2573 = vmul.f32 1.0, %v2572
    %v2574 = vrcp.pop %v2474
    %v2575 = vmul.f32 %v2474, %v2574
    %v2576 = vsub.f32 1.0, %v2575
    %v2577 = vmul.f32 %v2574, %v2576
    %v2578 = vadd.f32 %v2574, %v2577
    %vm2579 = vweird.f32 %v2474
    %vm2580 = vweird.f32 %v2574
    %vm2581 = vmor %vm2579, %vm2580
    %v2582 = vsel %vm2581, %v2574, %v2578
    %v2583 = vand.u32 2147483647, %v2474
    %vm2584 = vcmp.eq.f32.partialorder %v2583, 8.507059e+37
    %v2585 = vand.u32 %v2474, 2147483648
    %v2586 = vor.u32 1.1754944e-38, %v2585
    %v2587 = vsel %vm2584, %v2586, %v2582
    %v2588 = vmul.f32 1.0, %v2587
    %v2589 = vrcp.pop %v2475
    %v2590 = vmul.f32 %v2475, %v2589
    %v2591 = vsub.f32 1.0, %v2590
    %v2592 = vmul.f32 %v2589, %v2591
    %v2593 = vadd.f32 %v2589, %v2592
    %vm2594 = vweird.f32 %v2475
    %vm2595 = vweird.f32 %v2589
    %vm2596 = vmor %vm2594, %vm2595
    %v2597 = vsel %vm2596, %v2589, %v2593
    %v2598 = vand.u32 2147483647, %v2475
    %vm2599 = vcmp.eq.f32.partialorder %v2598, 8.507059e+37
    %v2600 = vand.u32 %v2475, 2147483648
    %v2601 = vor.u32 1.1754944e-38, %v2600
    %v2602 = vsel %vm2599, %v2601, %v2597
    %v2603 = vmul.f32 1.0, %v2602
    %v2604 = vrcp.pop %v2476
    %v2605 = vmul.f32 %v2476, %v2604
    %v2606 = vsub.f32 1.0, %v2605
    %v2607 = vmul.f32 %v2604, %v2606
    %v2608 = vadd.f32 %v2604, %v2607
    %vm2609 = vweird.f32 %v2476
    %vm2610 = vweird.f32 %v2604
    %vm2611 = vmor %vm2609, %vm2610
    %v2612 = vsel %vm2611, %v2604, %v2608
    %v2613 = vand.u32 2147483647, %v2476
    %vm2614 = vcmp.eq.f32.partialorder %v2613, 8.507059e+37
    %v2615 = vand.u32 %v2476, 2147483648
    %v2616 = vor.u32 1.1754944e-38, %v2615
    %v2617 = vsel %vm2614, %v2616, %v2612
    %v2618 = vmul.f32 1.0, %v2617
    %v2619 = vrcp.pop %v2477
    %v2620 = vmul.f32 %v2477, %v2619
    %v2621 = vsub.f32 1.0, %v2620
    %v2622 = vmul.f32 %v2619, %v2621
    %v2623 = vadd.f32 %v2619, %v2622
    %vm2624 = vweird.f32 %v2477
    %vm2625 = vweird.f32 %v2619
    %vm2626 = vmor %vm2624, %vm2625
    %v2627 = vsel %vm2626, %v2619, %v2623
    %v2628 = vand.u32 2147483647, %v2477
    %vm2629 = vcmp.eq.f32.partialorder %v2628, 8.507059e+37
    %v2630 = vand.u32 %v2477, 2147483648
    %v2631 = vor.u32 1.1754944e-38, %v2630
    %v2632 = vsel %vm2629, %v2631, %v2627
    %v2633 = vmul.f32 1.0, %v2632
    %v2634 = vrcp.pop %v2478
    %v2635 = vmul.f32 %v2478, %v2634
    %v2636 = vsub.f32 1.0, %v2635
    %v2637 = vmul.f32 %v2634, %v2636
    %v2638 = vadd.f32 %v2634, %v2637
    %vm2639 = vweird.f32 %v2478
    %vm2640 = vweird.f32 %v2634
    %vm2641 = vmor %vm2639, %vm2640
    %v2642 = vsel %vm2641, %v2634, %v2638
    %v2643 = vand.u32 2147483647, %v2478
    %vm2644 = vcmp.eq.f32.partialorder %v2643, 8.507059e+37
    %v2645 = vand.u32 %v2478, 2147483648
    %v2646 = vor.u32 1.1754944e-38, %v2645
    %v2647 = vsel %vm2644, %v2646, %v2642
    %v2648 = vmul.f32 1.0, %v2647
    %v2649 = vrcp.pop %v2479
    %v2650 = vmul.f32 %v2479, %v2649
    %v2651 = vsub.f32 1.0, %v2650
    %v2652 = vmul.f32 %v2649, %v2651
    %v2653 = vadd.f32 %v2649, %v2652
    %vm2654 = vweird.f32 %v2479
    %vm2655 = vweird.f32 %v2649
    %vm2656 = vmor %vm2654, %vm2655
    %v2657 = vsel %vm2656, %v2649, %v2653
    %v2658 = vand.u32 2147483647, %v2479
    %vm2659 = vcmp.eq.f32.partialorder %v2658, 8.507059e+37
    %v2660 = vand.u32 %v2479, 2147483648
    %v2661 = vor.u32 1.1754944e-38, %v2660
    %v2662 = vsel %vm2659, %v2661, %v2657
    %v2663 = vmul.f32 1.0, %v2662
    %v2664 = vrcp.pop %v2480
    %v2665 = vmul.f32 %v2480, %v2664
    %v2666 = vsub.f32 1.0, %v2665
    %v2667 = vmul.f32 %v2664, %v2666
    %v2668 = vadd.f32 %v2664, %v2667
    %vm2669 = vweird.f32 %v2480
    %vm2670 = vweird.f32 %v2664
    %vm2671 = vmor %vm2669, %vm2670
    %v2672 = vsel %vm2671, %v2664, %v2668
    %v2673 = vand.u32 2147483647, %v2480
    %vm2674 = vcmp.eq.f32.partialorder %v2673, 8.507059e+37
    %v2675 = vand.u32 %v2480, 2147483648
    %v2676 = vor.u32 1.1754944e-38, %v2675
    %v2677 = vsel %vm2674, %v2676, %v2672
    %v2678 = vmul.f32 1.0, %v2677
    %v2679 = vrcp.pop %v2481
    %v2680 = vmul.f32 %v2481, %v2679
    %v2681 = vsub.f32 1.0, %v2680
    %v2682 = vmul.f32 %v2679, %v2681
    %v2683 = vadd.f32 %v2679, %v2682
    %vm2684 = vweird.f32 %v2481
    %vm2685 = vweird.f32 %v2679
    %vm2686 = vmor %vm2684, %vm2685
    %v2687 = vsel %vm2686, %v2679, %v2683
    %v2688 = vand.u32 2147483647, %v2481
    %vm2689 = vcmp.eq.f32.partialorder %v2688, 8.507059e+37
    %v2690 = vand.u32 %v2481, 2147483648
    %v2691 = vor.u32 1.1754944e-38, %v2690
    %v2692 = vsel %vm2689, %v2691, %v2687
    %v2693 = vmul.f32 1.0, %v2692
    %v2694 = vrcp.pop %v2482
    %v2695 = vmul.f32 %v2482, %v2694
    %v2696 = vsub.f32 1.0, %v2695
    %v2697 = vmul.f32 %v2694, %v2696
    %v2698 = vadd.f32 %v2694, %v2697
    %vm2699 = vweird.f32 %v2482
    %vm2700 = vweird.f32 %v2694
    %vm2701 = vmor %vm2699, %vm2700
    %v2702 = vsel %vm2701, %v2694, %v2698
    %v2703 = vand.u32 2147483647, %v2482
    %vm2704 = vcmp.eq.f32.partialorder %v2703, 8.507059e+37
    %v2705 = vand.u32 %v2482, 2147483648
    %v2706 = vor.u32 1.1754944e-38, %v2705
    %v2707 = vsel %vm2704, %v2706, %v2702
    %v2708 = vmul.f32 1.0, %v2707
    %v2709 = vrcp.pop %v2483
    %v2710 = vmul.f32 %v2483, %v2709
    %v2711 = vsub.f32 1.0, %v2710
    %v2712 = vmul.f32 %v2709, %v2711
    %v2713 = vadd.f32 %v2709, %v2712
    %vm2714 = vweird.f32 %v2483
    %vm2715 = vweird.f32 %v2709
    %vm2716 = vmor %vm2714, %vm2715
    %v2717 = vsel %vm2716, %v2709, %v2713
    %v2718 = vand.u32 2147483647, %v2483
    %vm2719 = vcmp.eq.f32.partialorder %v2718, 8.507059e+37
    %v2720 = vand.u32 %v2483, 2147483648
    %v2721 = vor.u32 1.1754944e-38, %v2720
    %v2722 = vsel %vm2719, %v2721, %v2717
    %v2723 = vmul.f32 1.0, %v2722
    %v2724 = vadd.f32 %v1953, %v2340
    %v2725 = vadd.f32 %v1956, %v2342
    %v2726 = vadd.f32 %v1959, %v2344
    %v2727 = vadd.f32 %v1962, %v2346
    %v2728 = vadd.f32 %v1965, %v2348
    %v2729 = vadd.f32 %v1968, %v2350
    %v2730 = vadd.f32 %v1971, %v2352
    %v2731 = vadd.f32 %v1974, %v2354
    %v2732 = vadd.f32 %v1977, %v2356
    %v2733 = vadd.f32 %v1980, %v2358
    %v2734 = vadd.f32 %v1983, %v2360
    %v2735 = vadd.f32 %v1986, %v2362
    %v2736 = vadd.f32 %v1989, %v2364
    %v2737 = vadd.f32 %v1992, %v2366
    %v2738 = vadd.f32 %v1995, %v2368
    %v2739 = vadd.f32 %v1998, %v2370
    %v2740 = vmul.f32 %v2724, %v2403
    %v2741 = vmul.f32 %v2725, %v2403
    %v2742 = vmul.f32 %v2726, %v2403
    %v2743 = vmul.f32 %v2727, %v2403
    %v2744 = vmul.f32 %v2728, %v2403
    %v2745 = vmul.f32 %v2729, %v2403
    %v2746 = vmul.f32 %v2730, %v2403
    %v2747 = vmul.f32 %v2731, %v2403
    %v2748 = vmul.f32 %v2732, %v2403
    %v2749 = vmul.f32 %v2733, %v2403
    %v2750 = vmul.f32 %v2734, %v2403
    %v2751 = vmul.f32 %v2735, %v2403
    %v2752 = vmul.f32 %v2736, %v2403
    %v2753 = vmul.f32 %v2737, %v2403
    %v2754 = vmul.f32 %v2738, %v2403
    %v2755 = vmul.f32 %v2739, %v2403
    %v2756 = vxor.u32 %v2740, 2147483648
    %v2757 = vxor.u32 %v2741, 2147483648
    %v2758 = vxor.u32 %v2742, 2147483648
    %v2759 = vxor.u32 %v2743, 2147483648
    %v2760 = vxor.u32 %v2744, 2147483648
    %v2761 = vxor.u32 %v2745, 2147483648
    %v2762 = vxor.u32 %v2746, 2147483648
    %v2763 = vxor.u32 %v2747, 2147483648
    %v2764 = vxor.u32 %v2748, 2147483648
    %v2765 = vxor.u32 %v2749, 2147483648
    %v2766 = vxor.u32 %v2750, 2147483648
    %v2767 = vxor.u32 %v2751, 2147483648
    %v2768 = vxor.u32 %v2752, 2147483648
    %v2769 = vxor.u32 %v2753, 2147483648
    %v2770 = vxor.u32 %v2754, 2147483648
    %v2771 = vxor.u32 %v2755, 2147483648
    %v2772 = vmul.f32 %v2756, 1.442695
    %v2773 = vpow.pop %v2772
    %v2774 = vmul.f32 %v2757, 1.442695
    %v2775 = vpow.pop %v2774
    %v2776 = vmul.f32 %v2758, 1.442695
    %v2777 = vpow.pop %v2776
    %v2778 = vmul.f32 %v2759, 1.442695
    %v2779 = vpow.pop %v2778
    %v2780 = vmul.f32 %v2760, 1.442695
    %v2781 = vpow.pop %v2780
    %v2782 = vmul.f32 %v2761, 1.442695
    %v2783 = vpow.pop %v2782
    %v2784 = vmul.f32 %v2762, 1.442695
    %v2785 = vpow.pop %v2784
    %v2786 = vmul.f32 %v2763, 1.442695
    %v2787 = vpow.pop %v2786
    %v2788 = vmul.f32 %v2764, 1.442695
    %v2789 = vpow.pop %v2788
    %v2790 = vmul.f32 %v2765, 1.442695
    %v2791 = vpow.pop %v2790
    %v2792 = vmul.f32 %v2766, 1.442695
    %v2793 = vpow.pop %v2792
    %v2794 = vmul.f32 %v2767, 1.442695
    %v2795 = vpow.pop %v2794
    %v2796 = vmul.f32 %v2768, 1.442695
    %v2797 = vpow.pop %v2796
    %v2798 = vmul.f32 %v2769, 1.442695
    %v2799 = vpow.pop %v2798
    %v2800 = vmul.f32 %v2770, 1.442695
    %v2801 = vpow.pop %v2800
    %v2802 = vmul.f32 %v2771, 1.442695
    %v2803 = vpow.pop %v2802
    %v2804 = vadd.f32 %v2773, 1.0
    %v2805 = vadd.f32 %v2775, 1.0
    %v2806 = vadd.f32 %v2777, 1.0
    %v2807 = vadd.f32 %v2779, 1.0
    %v2808 = vadd.f32 %v2781, 1.0
    %v2809 = vadd.f32 %v2783, 1.0
    %v2810 = vadd.f32 %v2785, 1.0
    %v2811 = vadd.f32 %v2787, 1.0
    %v2812 = vadd.f32 %v2789, 1.0
    %v2813 = vadd.f32 %v2791, 1.0
    %v2814 = vadd.f32 %v2793, 1.0
    %v2815 = vadd.f32 %v2795, 1.0
    %v2816 = vadd.f32 %v2797, 1.0
    %v2817 = vadd.f32 %v2799, 1.0
    %v2818 = vadd.f32 %v2801, 1.0
    %v2819 = vadd.f32 %v2803, 1.0
    %v2820 = vrcp.pop %v2804
    %v2821 = vmul.f32 %v2804, %v2820
    %v2822 = vsub.f32 1.0, %v2821
    %v2823 = vmul.f32 %v2820, %v2822
    %v2824 = vadd.f32 %v2820, %v2823
    %vm2825 = vweird.f32 %v2804
    %vm2826 = vweird.f32 %v2820
    %vm2827 = vmor %vm2825, %vm2826
    %v2828 = vsel %vm2827, %v2820, %v2824
    %v2829 = vand.u32 2147483647, %v2804
    %vm2830 = vcmp.eq.f32.partialorder %v2829, 8.507059e+37
    %v2831 = vand.u32 %v2804, 2147483648
    %v2832 = vor.u32 1.1754944e-38, %v2831
    %v2833 = vsel %vm2830, %v2832, %v2828
    %v2834 = vmul.f32 1.0, %v2833
    %v2835 = vrcp.pop %v2805
    %v2836 = vmul.f32 %v2805, %v2835
    %v2837 = vsub.f32 1.0, %v2836
    %v2838 = vmul.f32 %v2835, %v2837
    %v2839 = vadd.f32 %v2835, %v2838
    %vm2840 = vweird.f32 %v2805
    %vm2841 = vweird.f32 %v2835
    %vm2842 = vmor %vm2840, %vm2841
    %v2843 = vsel %vm2842, %v2835, %v2839
    %v2844 = vand.u32 2147483647, %v2805
    %vm2845 = vcmp.eq.f32.partialorder %v2844, 8.507059e+37
    %v2846 = vand.u32 %v2805, 2147483648
    %v2847 = vor.u32 1.1754944e-38, %v2846
    %v2848 = vsel %vm2845, %v2847, %v2843
    %v2849 = vmul.f32 1.0, %v2848
    %v2850 = vrcp.pop %v2806
    %v2851 = vmul.f32 %v2806, %v2850
    %v2852 = vsub.f32 1.0, %v2851
    %v2853 = vmul.f32 %v2850, %v2852
    %v2854 = vadd.f32 %v2850, %v2853
    %vm2855 = vweird.f32 %v2806
    %vm2856 = vweird.f32 %v2850
    %vm2857 = vmor %vm2855, %vm2856
    %v2858 = vsel %vm2857, %v2850, %v2854
    %v2859 = vand.u32 2147483647, %v2806
    %vm2860 = vcmp.eq.f32.partialorder %v2859, 8.507059e+37
    %v2861 = vand.u32 %v2806, 2147483648
    %v2862 = vor.u32 1.1754944e-38, %v2861
    %v2863 = vsel %vm2860, %v2862, %v2858
    %v2864 = vmul.f32 1.0, %v2863
    %v2865 = vrcp.pop %v2807
    %v2866 = vmul.f32 %v2807, %v2865
    %v2867 = vsub.f32 1.0, %v2866
    %v2868 = vmul.f32 %v2865, %v2867
    %v2869 = vadd.f32 %v2865, %v2868
    %vm2870 = vweird.f32 %v2807
    %vm2871 = vweird.f32 %v2865
    %vm2872 = vmor %vm2870, %vm2871
    %v2873 = vsel %vm2872, %v2865, %v2869
    %v2874 = vand.u32 2147483647, %v2807
    %vm2875 = vcmp.eq.f32.partialorder %v2874, 8.507059e+37
    %v2876 = vand.u32 %v2807, 2147483648
    %v2877 = vor.u32 1.1754944e-38, %v2876
    %v2878 = vsel %vm2875, %v2877, %v2873
    %v2879 = vmul.f32 1.0, %v2878
    %v2880 = vrcp.pop %v2808
    %v2881 = vmul.f32 %v2808, %v2880
    %v2882 = vsub.f32 1.0, %v2881
    %v2883 = vmul.f32 %v2880, %v2882
    %v2884 = vadd.f32 %v2880, %v2883
    %vm2885 = vweird.f32 %v2808
    %vm2886 = vweird.f32 %v2880
    %vm2887 = vmor %vm2885, %vm2886
    %v2888 = vsel %vm2887, %v2880, %v2884
    %v2889 = vand.u32 2147483647, %v2808
    %vm2890 = vcmp.eq.f32.partialorder %v2889, 8.507059e+37
    %v2891 = vand.u32 %v2808, 2147483648
    %v2892 = vor.u32 1.1754944e-38, %v2891
    %v2893 = vsel %vm2890, %v2892, %v2888
    %v2894 = vmul.f32 1.0, %v2893
    %v2895 = vrcp.pop %v2809
    %v2896 = vmul.f32 %v2809, %v2895
    %v2897 = vsub.f32 1.0, %v2896
    %v2898 = vmul.f32 %v2895, %v2897
    %v2899 = vadd.f32 %v2895, %v2898
    %vm2900 = vweird.f32 %v2809
    %vm2901 = vweird.f32 %v2895
    %vm2902 = vmor %vm2900, %vm2901
    %v2903 = vsel %vm2902, %v2895, %v2899
    %v2904 = vand.u32 2147483647, %v2809
    %vm2905 = vcmp.eq.f32.partialorder %v2904, 8.507059e+37
    %v2906 = vand.u32 %v2809, 2147483648
    %v2907 = vor.u32 1.1754944e-38, %v2906
    %v2908 = vsel %vm2905, %v2907, %v2903
    %v2909 = vmul.f32 1.0, %v2908
    %v2910 = vrcp.pop %v2810
    %v2911 = vmul.f32 %v2810, %v2910
    %v2912 = vsub.f32 1.0, %v2911
    %v2913 = vmul.f32 %v2910, %v2912
    %v2914 = vadd.f32 %v2910, %v2913
    %vm2915 = vweird.f32 %v2810
    %vm2916 = vweird.f32 %v2910
    %vm2917 = vmor %vm2915, %vm2916
    %v2918 = vsel %vm2917, %v2910, %v2914
    %v2919 = vand.u32 2147483647, %v2810
    %vm2920 = vcmp.eq.f32.partialorder %v2919, 8.507059e+37
    %v2921 = vand.u32 %v2810, 2147483648
    %v2922 = vor.u32 1.1754944e-38, %v2921
    %v2923 = vsel %vm2920, %v2922, %v2918
    %v2924 = vmul.f32 1.0, %v2923
    %v2925 = vrcp.pop %v2811
    %v2926 = vmul.f32 %v2811, %v2925
    %v2927 = vsub.f32 1.0, %v2926
    %v2928 = vmul.f32 %v2925, %v2927
    %v2929 = vadd.f32 %v2925, %v2928
    %vm2930 = vweird.f32 %v2811
    %vm2931 = vweird.f32 %v2925
    %vm2932 = vmor %vm2930, %vm2931
    %v2933 = vsel %vm2932, %v2925, %v2929
    %v2934 = vand.u32 2147483647, %v2811
    %vm2935 = vcmp.eq.f32.partialorder %v2934, 8.507059e+37
    %v2936 = vand.u32 %v2811, 2147483648
    %v2937 = vor.u32 1.1754944e-38, %v2936
    %v2938 = vsel %vm2935, %v2937, %v2933
    %v2939 = vmul.f32 1.0, %v2938
    %v2940 = vrcp.pop %v2812
    %v2941 = vmul.f32 %v2812, %v2940
    %v2942 = vsub.f32 1.0, %v2941
    %v2943 = vmul.f32 %v2940, %v2942
    %v2944 = vadd.f32 %v2940, %v2943
    %vm2945 = vweird.f32 %v2812
    %vm2946 = vweird.f32 %v2940
    %vm2947 = vmor %vm2945, %vm2946
    %v2948 = vsel %vm2947, %v2940, %v2944
    %v2949 = vand.u32 2147483647, %v2812
    %vm2950 = vcmp.eq.f32.partialorder %v2949, 8.507059e+37
    %v2951 = vand.u32 %v2812, 2147483648
    %v2952 = vor.u32 1.1754944e-38, %v2951
    %v2953 = vsel %vm2950, %v2952, %v2948
    %v2954 = vmul.f32 1.0, %v2953
    %v2955 = vrcp.pop %v2813
    %v2956 = vmul.f32 %v2813, %v2955
    %v2957 = vsub.f32 1.0, %v2956
    %v2958 = vmul.f32 %v2955, %v2957
    %v2959 = vadd.f32 %v2955, %v2958
    %vm2960 = vweird.f32 %v2813
    %vm2961 = vweird.f32 %v2955
    %vm2962 = vmor %vm2960, %vm2961
    %v2963 = vsel %vm2962, %v2955, %v2959
    %v2964 = vand.u32 2147483647, %v2813
    %vm2965 = vcmp.eq.f32.partialorder %v2964, 8.507059e+37
    %v2966 = vand.u32 %v2813, 2147483648
    %v2967 = vor.u32 1.1754944e-38, %v2966
    %v2968 = vsel %vm2965, %v2967, %v2963
    %v2969 = vmul.f32 1.0, %v2968
    %v2970 = vrcp.pop %v2814
    %v2971 = vmul.f32 %v2814, %v2970
    %v2972 = vsub.f32 1.0, %v2971
    %v2973 = vmul.f32 %v2970, %v2972
    %v2974 = vadd.f32 %v2970, %v2973
    %vm2975 = vweird.f32 %v2814
    %vm2976 = vweird.f32 %v2970
    %vm2977 = vmor %vm2975, %vm2976
    %v2978 = vsel %vm2977, %v2970, %v2974
    %v2979 = vand.u32 2147483647, %v2814
    %vm2980 = vcmp.eq.f32.partialorder %v2979, 8.507059e+37
    %v2981 = vand.u32 %v2814, 2147483648
    %v2982 = vor.u32 1.1754944e-38, %v2981
    %v2983 = vsel %vm2980, %v2982, %v2978
    %v2984 = vmul.f32 1.0, %v2983
    %v2985 = vrcp.pop %v2815
    %v2986 = vmul.f32 %v2815, %v2985
    %v2987 = vsub.f32 1.0, %v2986
    %v2988 = vmul.f32 %v2985, %v2987
    %v2989 = vadd.f32 %v2985, %v2988
    %vm2990 = vweird.f32 %v2815
    %vm2991 = vweird.f32 %v2985
    %vm2992 = vmor %vm2990, %vm2991
    %v2993 = vsel %vm2992, %v2985, %v2989
    %v2994 = vand.u32 2147483647, %v2815
    %vm2995 = vcmp.eq.f32.partialorder %v2994, 8.507059e+37
    %v2996 = vand.u32 %v2815, 2147483648
    %v2997 = vor.u32 1.1754944e-38, %v2996
    %v2998 = vsel %vm2995, %v2997, %v2993
    %v2999 = vmul.f32 1.0, %v2998
    %v3000 = vrcp.pop %v2816
    %v3001 = vmul.f32 %v2816, %v3000
    %v3002 = vsub.f32 1.0, %v3001
    %v3003 = vmul.f32 %v3000, %v3002
    %v3004 = vadd.f32 %v3000, %v3003
    %vm3005 = vweird.f32 %v2816
    %vm3006 = vweird.f32 %v3000
    %vm3007 = vmor %vm3005, %vm3006
    %v3008 = vsel %vm3007, %v3000, %v3004
    %v3009 = vand.u32 2147483647, %v2816
    %vm3010 = vcmp.eq.f32.partialorder %v3009, 8.507059e+37
    %v3011 = vand.u32 %v2816, 2147483648
    %v3012 = vor.u32 1.1754944e-38, %v3011
    %v3013 = vsel %vm3010, %v3012, %v3008
    %v3014 = vmul.f32 1.0, %v3013
    %v3015 = vrcp.pop %v2817
    %v3016 = vmul.f32 %v2817, %v3015
    %v3017 = vsub.f32 1.0, %v3016
    %v3018 = vmul.f32 %v3015, %v3017
    %v3019 = vadd.f32 %v3015, %v3018
    %vm3020 = vweird.f32 %v2817
    %vm3021 = vweird.f32 %v3015
    %vm3022 = vmor %vm3020, %vm3021
    %v3023 = vsel %vm3022, %v3015, %v3019
    %v3024 = vand.u32 2147483647, %v2817
    %vm3025 = vcmp.eq.f32.partialorder %v3024, 8.507059e+37
    %v3026 = vand.u32 %v2817, 2147483648
    %v3027 = vor.u32 1.1754944e-38, %v3026
    %v3028 = vsel %vm3025, %v3027, %v3023
    %v3029 = vmul.f32 1.0, %v3028
    %v3030 = vrcp.pop %v2818
    %v3031 = vmul.f32 %v2818, %v3030
    %v3032 = vsub.f32 1.0, %v3031
    %v3033 = vmul.f32 %v3030, %v3032
    %v3034 = vadd.f32 %v3030, %v3033
    %vm3035 = vweird.f32 %v2818
    %vm3036 = vweird.f32 %v3030
    %vm3037 = vmor %vm3035, %vm3036
    %v3038 = vsel %vm3037, %v3030, %v3034
    %v3039 = vand.u32 2147483647, %v2818
    %vm3040 = vcmp.eq.f32.partialorder %v3039, 8.507059e+37
    %v3041 = vand.u32 %v2818, 2147483648
    %v3042 = vor.u32 1.1754944e-38, %v3041
    %v3043 = vsel %vm3040, %v3042, %v3038
    %v3044 = vmul.f32 1.0, %v3043
    %v3045 = vrcp.pop %v2819
    %v3046 = vmul.f32 %v2819, %v3045
    %v3047 = vsub.f32 1.0, %v3046
    %v3048 = vmul.f32 %v3045, %v3047
    %v3049 = vadd.f32 %v3045, %v3048
    %vm3050 = vweird.f32 %v2819
    %vm3051 = vweird.f32 %v3045
    %vm3052 = vmor %vm3050, %vm3051
    %v3053 = vsel %vm3052, %v3045, %v3049
    %v3054 = vand.u32 2147483647, %v2819
    %vm3055 = vcmp.eq.f32.partialorder %v3054, 8.507059e+37
    %v3056 = vand.u32 %v2819, 2147483648
    %v3057 = vor.u32 1.1754944e-38, %v3056
    %v3058 = vsel %vm3055, %v3057, %v3053
    %v3059 = vmul.f32 1.0, %v3058
    %v3060 = vsub.f32 %v2498, %v2834
    %v3061 = vsub.f32 %v2513, %v2849
    %v3062 = vsub.f32 %v2528, %v2864
    %v3063 = vsub.f32 %v2543, %v2879
    %v3064 = vsub.f32 %v2558, %v2894
    %v3065 = vsub.f32 %v2573, %v2909
    %v3066 = vsub.f32 %v2588, %v2924
    %v3067 = vsub.f32 %v2603, %v2939
    %v3068 = vsub.f32 %v2618, %v2954
    %v3069 = vsub.f32 %v2633, %v2969
    %v3070 = vsub.f32 %v2648, %v2984
    %v3071 = vsub.f32 %v2663, %v2999
    %v3072 = vsub.f32 %v2678, %v3014
    %v3073 = vsub.f32 %v2693, %v3029
    %v3074 = vsub.f32 %v2708, %v3044
    %v3075 = vsub.f32 %v2723, %v3059
    %v3076 = vadd.f32 %v3060, 1e-05
    %v3077 = vadd.f32 %v3061, 1e-05
    %v3078 = vadd.f32 %v3062, 1e-05
    %v3079 = vadd.f32 %v3063, 1e-05
    %v3080 = vadd.f32 %v3064, 1e-05
    %v3081 = vadd.f32 %v3065, 1e-05
    %v3082 = vadd.f32 %v3066, 1e-05
    %v3083 = vadd.f32 %v3067, 1e-05
    %v3084 = vadd.f32 %v3068, 1e-05
    %v3085 = vadd.f32 %v3069, 1e-05
    %v3086 = vadd.f32 %v3070, 1e-05
    %v3087 = vadd.f32 %v3071, 1e-05
    %v3088 = vadd.f32 %v3072, 1e-05
    %v3089 = vadd.f32 %v3073, 1e-05
    %v3090 = vadd.f32 %v3074, 1e-05
    %v3091 = vadd.f32 %v3075, 1e-05
    %v3092 = vadd.f32 %v2498, 1e-05
    %v3093 = vadd.f32 %v2513, 1e-05
    %v3094 = vadd.f32 %v2528, 1e-05
    %v3095 = vadd.f32 %v2543, 1e-05
    %v3096 = vadd.f32 %v2558, 1e-05
    %v3097 = vadd.f32 %v2573, 1e-05
    %v3098 = vadd.f32 %v2588, 1e-05
    %v3099 = vadd.f32 %v2603, 1e-05
    %v3100 = vadd.f32 %v2618, 1e-05
    %v3101 = vadd.f32 %v2633, 1e-05
    %v3102 = vadd.f32 %v2648, 1e-05
    %v3103 = vadd.f32 %v2663, 1e-05
    %v3104 = vadd.f32 %v2678, 1e-05
    %v3105 = vadd.f32 %v2693, 1e-05
    %v3106 = vadd.f32 %v2708, 1e-05
    %v3107 = vadd.f32 %v2723, 1e-05
    %v3108 = vrcp.pop %v3092
    %v3109 = vmul.f32 %v3092, %v3108
    %v3110 = vsub.f32 1.0, %v3109
    %v3111 = vmul.f32 %v3108, %v3110
    %v3112 = vadd.f32 %v3108, %v3111
    %vm3113 = vweird.f32 %v3092
    %vm3114 = vweird.f32 %v3108
    %vm3115 = vmor %vm3113, %vm3114
    %v3116 = vsel %vm3115, %v3108, %v3112
    %v3117 = vand.u32 2147483647, %v3092
    %vm3118 = vcmp.eq.f32.partialorder %v3117, 8.507059e+37
    %v3119 = vand.u32 %v3092, 2147483648
    %v3120 = vor.u32 1.1754944e-38, %v3119
    %v3121 = vsel %vm3118, %v3120, %v3116
    %v3122 = vmul.f32 %v3076, %v3121
    %v3123 = vrcp.pop %v3093
    %v3124 = vmul.f32 %v3093, %v3123
    %v3125 = vsub.f32 1.0, %v3124
    %v3126 = vmul.f32 %v3123, %v3125
    %v3127 = vadd.f32 %v3123, %v3126
    %vm3128 = vweird.f32 %v3093
    %vm3129 = vweird.f32 %v3123
    %vm3130 = vmor %vm3128, %vm3129
    %v3131 = vsel %vm3130, %v3123, %v3127
    %v3132 = vand.u32 2147483647, %v3093
    %vm3133 = vcmp.eq.f32.partialorder %v3132, 8.507059e+37
    %v3134 = vand.u32 %v3093, 2147483648
    %v3135 = vor.u32 1.1754944e-38, %v3134
    %v3136 = vsel %vm3133, %v3135, %v3131
    %v3137 = vmul.f32 %v3077, %v3136
    %v3138 = vrcp.pop %v3094
    %v3139 = vmul.f32 %v3094, %v3138
    %v3140 = vsub.f32 1.0, %v3139
    %v3141 = vmul.f32 %v3138, %v3140
    %v3142 = vadd.f32 %v3138, %v3141
    %vm3143 = vweird.f32 %v3094
    %vm3144 = vweird.f32 %v3138
    %vm3145 = vmor %vm3143, %vm3144
    %v3146 = vsel %vm3145, %v3138, %v3142
    %v3147 = vand.u32 2147483647, %v3094
    %vm3148 = vcmp.eq.f32.partialorder %v3147, 8.507059e+37
    %v3149 = vand.u32 %v3094, 2147483648
    %v3150 = vor.u32 1.1754944e-38, %v3149
    %v3151 = vsel %vm3148, %v3150, %v3146
    %v3152 = vmul.f32 %v3078, %v3151
    %v3153 = vrcp.pop %v3095
    %v3154 = vmul.f32 %v3095, %v3153
    %v3155 = vsub.f32 1.0, %v3154
    %v3156 = vmul.f32 %v3153, %v3155
    %v3157 = vadd.f32 %v3153, %v3156
    %vm3158 = vweird.f32 %v3095
    %vm3159 = vweird.f32 %v3153
    %vm3160 = vmor %vm3158, %vm3159
    %v3161 = vsel %vm3160, %v3153, %v3157
    %v3162 = vand.u32 2147483647, %v3095
    %vm3163 = vcmp.eq.f32.partialorder %v3162, 8.507059e+37
    %v3164 = vand.u32 %v3095, 2147483648
    %v3165 = vor.u32 1.1754944e-38, %v3164
    %v3166 = vsel %vm3163, %v3165, %v3161
    %v3167 = vmul.f32 %v3079, %v3166
    %v3168 = vrcp.pop %v3096
    %v3169 = vmul.f32 %v3096, %v3168
    %v3170 = vsub.f32 1.0, %v3169
    %v3171 = vmul.f32 %v3168, %v3170
    %v3172 = vadd.f32 %v3168, %v3171
    %vm3173 = vweird.f32 %v3096
    %vm3174 = vweird.f32 %v3168
    %vm3175 = vmor %vm3173, %vm3174
    %v3176 = vsel %vm3175, %v3168, %v3172
    %v3177 = vand.u32 2147483647, %v3096
    %vm3178 = vcmp.eq.f32.partialorder %v3177, 8.507059e+37
    %v3179 = vand.u32 %v3096, 2147483648
    %v3180 = vor.u32 1.1754944e-38, %v3179
    %v3181 = vsel %vm3178, %v3180, %v3176
    %v3182 = vmul.f32 %v3080, %v3181
    %v3183 = vrcp.pop %v3097
    %v3184 = vmul.f32 %v3097, %v3183
    %v3185 = vsub.f32 1.0, %v3184
    %v3186 = vmul.f32 %v3183, %v3185
    %v3187 = vadd.f32 %v3183, %v3186
    %vm3188 = vweird.f32 %v3097
    %vm3189 = vweird.f32 %v3183
    %vm3190 = vmor %vm3188, %vm3189
    %v3191 = vsel %vm3190, %v3183, %v3187
    %v3192 = vand.u32 2147483647, %v3097
    %vm3193 = vcmp.eq.f32.partialorder %v3192, 8.507059e+37
    %v3194 = vand.u32 %v3097, 2147483648
    %v3195 = vor.u32 1.1754944e-38, %v3194
    %v3196 = vsel %vm3193, %v3195, %v3191
    %v3197 = vmul.f32 %v3081, %v3196
    %v3198 = vrcp.pop %v3098
    %v3199 = vmul.f32 %v3098, %v3198
    %v3200 = vsub.f32 1.0, %v3199
    %v3201 = vmul.f32 %v3198, %v3200
    %v3202 = vadd.f32 %v3198, %v3201
    %vm3203 = vweird.f32 %v3098
    %vm3204 = vweird.f32 %v3198
    %vm3205 = vmor %vm3203, %vm3204
    %v3206 = vsel %vm3205, %v3198, %v3202
    %v3207 = vand.u32 2147483647, %v3098
    %vm3208 = vcmp.eq.f32.partialorder %v3207, 8.507059e+37
    %v3209 = vand.u32 %v3098, 2147483648
    %v3210 = vor.u32 1.1754944e-38, %v3209
    %v3211 = vsel %vm3208, %v3210, %v3206
    %v3212 = vmul.f32 %v3082, %v3211
    %v3213 = vrcp.pop %v3099
    %v3214 = vmul.f32 %v3099, %v3213
    %v3215 = vsub.f32 1.0, %v3214
    %v3216 = vmul.f32 %v3213, %v3215
    %v3217 = vadd.f32 %v3213, %v3216
    %vm3218 = vweird.f32 %v3099
    %vm3219 = vweird.f32 %v3213
    %vm3220 = vmor %vm3218, %vm3219
    %v3221 = vsel %vm3220, %v3213, %v3217
    %v3222 = vand.u32 2147483647, %v3099
    %vm3223 = vcmp.eq.f32.partialorder %v3222, 8.507059e+37
    %v3224 = vand.u32 %v3099, 2147483648
    %v3225 = vor.u32 1.1754944e-38, %v3224
    %v3226 = vsel %vm3223, %v3225, %v3221
    %v3227 = vmul.f32 %v3083, %v3226
    %v3228 = vrcp.pop %v3100
    %v3229 = vmul.f32 %v3100, %v3228
    %v3230 = vsub.f32 1.0, %v3229
    %v3231 = vmul.f32 %v3228, %v3230
    %v3232 = vadd.f32 %v3228, %v3231
    %vm3233 = vweird.f32 %v3100
    %vm3234 = vweird.f32 %v3228
    %vm3235 = vmor %vm3233, %vm3234
    %v3236 = vsel %vm3235, %v3228, %v3232
    %v3237 = vand.u32 2147483647, %v3100
    %vm3238 = vcmp.eq.f32.partialorder %v3237, 8.507059e+37
    %v3239 = vand.u32 %v3100, 2147483648
    %v3240 = vor.u32 1.1754944e-38, %v3239
    %v3241 = vsel %vm3238, %v3240, %v3236
    %v3242 = vmul.f32 %v3084, %v3241
    %v3243 = vrcp.pop %v3101
    %v3244 = vmul.f32 %v3101, %v3243
    %v3245 = vsub.f32 1.0, %v3244
    %v3246 = vmul.f32 %v3243, %v3245
    %v3247 = vadd.f32 %v3243, %v3246
    %vm3248 = vweird.f32 %v3101
    %vm3249 = vweird.f32 %v3243
    %vm3250 = vmor %vm3248, %vm3249
    %v3251 = vsel %vm3250, %v3243, %v3247
    %v3252 = vand.u32 2147483647, %v3101
    %vm3253 = vcmp.eq.f32.partialorder %v3252, 8.507059e+37
    %v3254 = vand.u32 %v3101, 2147483648
    %v3255 = vor.u32 1.1754944e-38, %v3254
    %v3256 = vsel %vm3253, %v3255, %v3251
    %v3257 = vmul.f32 %v3085, %v3256
    %v3258 = vrcp.pop %v3102
    %v3259 = vmul.f32 %v3102, %v3258
    %v3260 = vsub.f32 1.0, %v3259
    %v3261 = vmul.f32 %v3258, %v3260
    %v3262 = vadd.f32 %v3258, %v3261
    %vm3263 = vweird.f32 %v3102
    %vm3264 = vweird.f32 %v3258
    %vm3265 = vmor %vm3263, %vm3264
    %v3266 = vsel %vm3265, %v3258, %v3262
    %v3267 = vand.u32 2147483647, %v3102
    %vm3268 = vcmp.eq.f32.partialorder %v3267, 8.507059e+37
    %v3269 = vand.u32 %v3102, 2147483648
    %v3270 = vor.u32 1.1754944e-38, %v3269
    %v3271 = vsel %vm3268, %v3270, %v3266
    %v3272 = vmul.f32 %v3086, %v3271
    %v3273 = vrcp.pop %v3103
    %v3274 = vmul.f32 %v3103, %v3273
    %v3275 = vsub.f32 1.0, %v3274
    %v3276 = vmul.f32 %v3273, %v3275
    %v3277 = vadd.f32 %v3273, %v3276
    %vm3278 = vweird.f32 %v3103
    %vm3279 = vweird.f32 %v3273
    %vm3280 = vmor %vm3278, %vm3279
    %v3281 = vsel %vm3280, %v3273, %v3277
    %v3282 = vand.u32 2147483647, %v3103
    %vm3283 = vcmp.eq.f32.partialorder %v3282, 8.507059e+37
    %v3284 = vand.u32 %v3103, 2147483648
    %v3285 = vor.u32 1.1754944e-38, %v3284
    %v3286 = vsel %vm3283, %v3285, %v3281
    %v3287 = vmul.f32 %v3087, %v3286
    %v3288 = vrcp.pop %v3104
    %v3289 = vmul.f32 %v3104, %v3288
    %v3290 = vsub.f32 1.0, %v3289
    %v3291 = vmul.f32 %v3288, %v3290
    %v3292 = vadd.f32 %v3288, %v3291
    %vm3293 = vweird.f32 %v3104
    %vm3294 = vweird.f32 %v3288
    %vm3295 = vmor %vm3293, %vm3294
    %v3296 = vsel %vm3295, %v3288, %v3292
    %v3297 = vand.u32 2147483647, %v3104
    %vm3298 = vcmp.eq.f32.partialorder %v3297, 8.507059e+37
    %v3299 = vand.u32 %v3104, 2147483648
    %v3300 = vor.u32 1.1754944e-38, %v3299
    %v3301 = vsel %vm3298, %v3300, %v3296
    %v3302 = vmul.f32 %v3088, %v3301
    %v3303 = vrcp.pop %v3105
    %v3304 = vmul.f32 %v3105, %v3303
    %v3305 = vsub.f32 1.0, %v3304
    %v3306 = vmul.f32 %v3303, %v3305
    %v3307 = vadd.f32 %v3303, %v3306
    %vm3308 = vweird.f32 %v3105
    %vm3309 = vweird.f32 %v3303
    %vm3310 = vmor %vm3308, %vm3309
    %v3311 = vsel %vm3310, %v3303, %v3307
    %v3312 = vand.u32 2147483647, %v3105
    %vm3313 = vcmp.eq.f32.partialorder %v3312, 8.507059e+37
    %v3314 = vand.u32 %v3105, 2147483648
    %v3315 = vor.u32 1.1754944e-38, %v3314
    %v3316 = vsel %vm3313, %v3315, %v3311
    %v3317 = vmul.f32 %v3089, %v3316
    %v3318 = vrcp.pop %v3106
    %v3319 = vmul.f32 %v3106, %v3318
    %v3320 = vsub.f32 1.0, %v3319
    %v3321 = vmul.f32 %v3318, %v3320
    %v3322 = vadd.f32 %v3318, %v3321
    %vm3323 = vweird.f32 %v3106
    %vm3324 = vweird.f32 %v3318
    %vm3325 = vmor %vm3323, %vm3324
    %v3326 = vsel %vm3325, %v3318, %v3322
    %v3327 = vand.u32 2147483647, %v3106
    %vm3328 = vcmp.eq.f32.partialorder %v3327, 8.507059e+37
    %v3329 = vand.u32 %v3106, 2147483648
    %v3330 = vor.u32 1.1754944e-38, %v3329
    %v3331 = vsel %vm3328, %v3330, %v3326
    %v3332 = vmul.f32 %v3090, %v3331
    %v3333 = vrcp.pop %v3107
    %v3334 = vmul.f32 %v3107, %v3333
    %v3335 = vsub.f32 1.0, %v3334
    %v3336 = vmul.f32 %v3333, %v3335
    %v3337 = vadd.f32 %v3333, %v3336
    %vm3338 = vweird.f32 %v3107
    %vm3339 = vweird.f32 %v3333
    %vm3340 = vmor %vm3338, %vm3339
    %v3341 = vsel %vm3340, %v3333, %v3337
    %v3342 = vand.u32 2147483647, %v3107
    %vm3343 = vcmp.eq.f32.partialorder %v3342, 8.507059e+37
    %v3344 = vand.u32 %v3107, 2147483648
    %v3345 = vor.u32 1.1754944e-38, %v3344
    %v3346 = vsel %vm3343, %v3345, %v3341
    %v3347 = vmul.f32 %v3091, %v3346
    %v3348 = vmax.f32 %v3122, 0.0
    %v3349 = vmax.f32 %v3137, 0.0
    %v3350 = vmax.f32 %v3152, 0.0
    %v3351 = vmax.f32 %v3167, 0.0
    %v3352 = vmax.f32 %v3182, 0.0
    %v3353 = vmax.f32 %v3197, 0.0
    %v3354 = vmax.f32 %v3212, 0.0
    %v3355 = vmax.f32 %v3227, 0.0
    %v3356 = vmax.f32 %v3242, 0.0
    %v3357 = vmax.f32 %v3257, 0.0
    %v3358 = vmax.f32 %v3272, 0.0
    %v3359 = vmax.f32 %v3287, 0.0
    %v3360 = vmax.f32 %v3302, 0.0
    %v3361 = vmax.f32 %v3317, 0.0
    %v3362 = vmax.f32 %v3332, 0.0
    %v3363 = vmax.f32 %v3347, 0.0
    %v3364 = vmin.f32 %v3348, 1.0
    %v3365 = vmin.f32 %v3349, 1.0
    %v3366 = vmin.f32 %v3350, 1.0
    %v3367 = vmin.f32 %v3351, 1.0
    %v3368 = vmin.f32 %v3352, 1.0
    %v3369 = vmin.f32 %v3353, 1.0
    %v3370 = vmin.f32 %v3354, 1.0
    %v3371 = vmin.f32 %v3355, 1.0
    %v3372 = vmin.f32 %v3356, 1.0
    %v3373 = vmin.f32 %v3357, 1.0
    %v3374 = vmin.f32 %v3358, 1.0
    %v3375 = vmin.f32 %v3359, 1.0
    %v3376 = vmin.f32 %v3360, 1.0
    %v3377 = vmin.f32 %v3361, 1.0
    %v3378 = vmin.f32 %v3362, 1.0
    %v3379 = vmin.f32 %v3363, 1.0
    %v3380 = vmul.f32 %v1953, %v1953
    %v3381 = vmul.f32 %v1956, %v1956
    %v3382 = vmul.f32 %v1959, %v1959
    %v3383 = vmul.f32 %v1962, %v1962
    %v3384 = vmul.f32 %v1965, %v1965
    %v3385 = vmul.f32 %v1968, %v1968
    %v3386 = vmul.f32 %v1971, %v1971
    %v3387 = vmul.f32 %v1974, %v1974
    %v3388 = vmul.f32 %v1977, %v1977
    %v3389 = vmul.f32 %v1980, %v1980
    %v3390 = vmul.f32 %v1983, %v1983
    %v3391 = vmul.f32 %v1986, %v1986
    %v3392 = vmul.f32 %v1989, %v1989
    %v3393 = vmul.f32 %v1992, %v1992
    %v3394 = vmul.f32 %v1995, %v1995
    %v3395 = vmul.f32 %v1998, %v1998
    %3412 = vrot.lane.b32.xlu0 %v3380, 124
    %v3413 = vpop.permute.xlu0 %3412
    %3414 = vrot.lane.b32.xlu0 %v3381, 124
    %v3415 = vpop.permute.xlu0 %3414
    %3416 = vrot.lane.b32.xlu0 %v3382, 124
    %v3417 = vpop.permute.xlu0 %3416
    %3418 = vrot.lane.b32.xlu0 %v3383, 124
    %v3419 = vpop.permute.xlu0 %3418
    %3420 = vrot.lane.b32.xlu0 %v3384, 124
    %v3421 = vpop.permute.xlu0 %3420
    %3422 = vrot.lane.b32.xlu0 %v3385, 124
    %v3423 = vpop.permute.xlu0 %3422
    %3424 = vrot.lane.b32.xlu0 %v3386, 124
    %v3425 = vpop.permute.xlu0 %3424
    %3426 = vrot.lane.b32.xlu0 %v3387, 124
    %v3427 = vpop.permute.xlu0 %3426
    %3428 = vrot.lane.b32.xlu0 %v3388, 124
    %v3429 = vpop.permute.xlu0 %3428
    %3430 = vrot.lane.b32.xlu0 %v3389, 124
    %v3431 = vpop.permute.xlu0 %3430
    %3432 = vrot.lane.b32.xlu0 %v3390, 124
    %v3433 = vpop.permute.xlu0 %3432
    %3434 = vrot.lane.b32.xlu0 %v3391, 124
    %v3435 = vpop.permute.xlu0 %3434
    %3436 = vrot.lane.b32.xlu0 %v3392, 124
    %v3437 = vpop.permute.xlu0 %3436
    %3438 = vrot.lane.b32.xlu0 %v3393, 124
    %v3439 = vpop.permute.xlu0 %3438
    %3440 = vrot.lane.b32.xlu0 %v3394, 124
    %v3441 = vpop.permute.xlu0 %3440
    %3442 = vrot.lane.b32.xlu0 %v3395, 124
    %v3443 = vpop.permute.xlu0 %3442
    %v3460 = vsel %vm1286, %v3413, 0.0
    %3461 = vadd.xlane.f32.xlu0 %v3460
    %v3462 = vpop.xlane.xlu0 %3461
    %v3463 = vsel %vm1286, %v3415, 0.0
    %3464 = vadd.xlane.f32.xlu0 %v3463
    %v3465 = vpop.xlane.xlu0 %3464
    %v3466 = vsel %vm1286, %v3417, 0.0
    %3467 = vadd.xlane.f32.xlu0 %v3466
    %v3468 = vpop.xlane.xlu0 %3467
    %v3469 = vsel %vm1286, %v3419, 0.0
    %3470 = vadd.xlane.f32.xlu0 %v3469
    %v3471 = vpop.xlane.xlu0 %3470
    %v3472 = vsel %vm1286, %v3421, 0.0
    %3473 = vadd.xlane.f32.xlu0 %v3472
    %v3474 = vpop.xlane.xlu0 %3473
    %v3475 = vsel %vm1286, %v3423, 0.0
    %3476 = vadd.xlane.f32.xlu0 %v3475
    %v3477 = vpop.xlane.xlu0 %3476
    %v3478 = vsel %vm1286, %v3425, 0.0
    %3479 = vadd.xlane.f32.xlu0 %v3478
    %v3480 = vpop.xlane.xlu0 %3479
    %v3481 = vsel %vm1286, %v3427, 0.0
    %3482 = vadd.xlane.f32.xlu0 %v3481
    %v3483 = vpop.xlane.xlu0 %3482
    %v3484 = vsel %vm1286, %v3429, 0.0
    %3485 = vadd.xlane.f32.xlu0 %v3484
    %v3486 = vpop.xlane.xlu0 %3485
    %v3487 = vsel %vm1286, %v3431, 0.0
    %3488 = vadd.xlane.f32.xlu0 %v3487
    %v3489 = vpop.xlane.xlu0 %3488
    %v3490 = vsel %vm1286, %v3433, 0.0
    %3491 = vadd.xlane.f32.xlu0 %v3490
    %v3492 = vpop.xlane.xlu0 %3491
    %v3493 = vsel %vm1286, %v3435, 0.0
    %3494 = vadd.xlane.f32.xlu0 %v3493
    %v3495 = vpop.xlane.xlu0 %3494
    %v3496 = vsel %vm1286, %v3437, 0.0
    %3497 = vadd.xlane.f32.xlu0 %v3496
    %v3498 = vpop.xlane.xlu0 %3497
    %v3499 = vsel %vm1286, %v3439, 0.0
    %3500 = vadd.xlane.f32.xlu0 %v3499
    %v3501 = vpop.xlane.xlu0 %3500
    %v3502 = vsel %vm1286, %v3441, 0.0
    %3503 = vadd.xlane.f32.xlu0 %v3502
    %v3504 = vpop.xlane.xlu0 %3503
    %v3505 = vsel %vm1286, %v3443, 0.0
    %3506 = vadd.xlane.f32.xlu0 %v3505
    %v3507 = vpop.xlane.xlu0 %3506
    %v3508 = vrsqrt.pop %v3462
    %v3509 = vmul.f32 %v3508, %v3462
    %v3510 = vmul.f32 %v3509, %v3508
    %v3511 = vmul.f32 0.5, %v3510
    %v3512 = vsub.f32 1.5, %v3511
    %v3513 = vmul.f32 %v3508, %v3512
    %v3514 = vmul.f32 %v3462, %v3513
    %vm3515 = vcmp.eq.f32.partialorder %v3462, inf
    %v3516 = vsel %vm3515, %v3462, %v3514
    %vm3517 = vcmp.eq.f32.partialorder %v3462, 0.0
    %v3518 = vand.u32 %v3462, 2147483648
    %v3519 = vsel %vm3517, %v3518, %v3516
    %v3520 = vrsqrt.pop %v3465
    %v3521 = vmul.f32 %v3520, %v3465
    %v3522 = vmul.f32 %v3521, %v3520
    %v3523 = vmul.f32 0.5, %v3522
    %v3524 = vsub.f32 1.5, %v3523
    %v3525 = vmul.f32 %v3520, %v3524
    %v3526 = vmul.f32 %v3465, %v3525
    %vm3527 = vcmp.eq.f32.partialorder %v3465, inf
    %v3528 = vsel %vm3527, %v3465, %v3526
    %vm3529 = vcmp.eq.f32.partialorder %v3465, 0.0
    %v3530 = vand.u32 %v3465, 2147483648
    %v3531 = vsel %vm3529, %v3530, %v3528
    %v3532 = vrsqrt.pop %v3468
    %v3533 = vmul.f32 %v3532, %v3468
    %v3534 = vmul.f32 %v3533, %v3532
    %v3535 = vmul.f32 0.5, %v3534
    %v3536 = vsub.f32 1.5, %v3535
    %v3537 = vmul.f32 %v3532, %v3536
    %v3538 = vmul.f32 %v3468, %v3537
    %vm3539 = vcmp.eq.f32.partialorder %v3468, inf
    %v3540 = vsel %vm3539, %v3468, %v3538
    %vm3541 = vcmp.eq.f32.partialorder %v3468, 0.0
    %v3542 = vand.u32 %v3468, 2147483648
    %v3543 = vsel %vm3541, %v3542, %v3540
    %v3544 = vrsqrt.pop %v3471
    %v3545 = vmul.f32 %v3544, %v3471
    %v3546 = vmul.f32 %v3545, %v3544
    %v3547 = vmul.f32 0.5, %v3546
    %v3548 = vsub.f32 1.5, %v3547
    %v3549 = vmul.f32 %v3544, %v3548
    %v3550 = vmul.f32 %v3471, %v3549
    %vm3551 = vcmp.eq.f32.partialorder %v3471, inf
    %v3552 = vsel %vm3551, %v3471, %v3550
    %vm3553 = vcmp.eq.f32.partialorder %v3471, 0.0
    %v3554 = vand.u32 %v3471, 2147483648
    %v3555 = vsel %vm3553, %v3554, %v3552
    %v3556 = vrsqrt.pop %v3474
    %v3557 = vmul.f32 %v3556, %v3474
    %v3558 = vmul.f32 %v3557, %v3556
    %v3559 = vmul.f32 0.5, %v3558
    %v3560 = vsub.f32 1.5, %v3559
    %v3561 = vmul.f32 %v3556, %v3560
    %v3562 = vmul.f32 %v3474, %v3561
    %vm3563 = vcmp.eq.f32.partialorder %v3474, inf
    %v3564 = vsel %vm3563, %v3474, %v3562
    %vm3565 = vcmp.eq.f32.partialorder %v3474, 0.0
    %v3566 = vand.u32 %v3474, 2147483648
    %v3567 = vsel %vm3565, %v3566, %v3564
    %v3568 = vrsqrt.pop %v3477
    %v3569 = vmul.f32 %v3568, %v3477
    %v3570 = vmul.f32 %v3569, %v3568
    %v3571 = vmul.f32 0.5, %v3570
    %v3572 = vsub.f32 1.5, %v3571
    %v3573 = vmul.f32 %v3568, %v3572
    %v3574 = vmul.f32 %v3477, %v3573
    %vm3575 = vcmp.eq.f32.partialorder %v3477, inf
    %v3576 = vsel %vm3575, %v3477, %v3574
    %vm3577 = vcmp.eq.f32.partialorder %v3477, 0.0
    %v3578 = vand.u32 %v3477, 2147483648
    %v3579 = vsel %vm3577, %v3578, %v3576
    %v3580 = vrsqrt.pop %v3480
    %v3581 = vmul.f32 %v3580, %v3480
    %v3582 = vmul.f32 %v3581, %v3580
    %v3583 = vmul.f32 0.5, %v3582
    %v3584 = vsub.f32 1.5, %v3583
    %v3585 = vmul.f32 %v3580, %v3584
    %v3586 = vmul.f32 %v3480, %v3585
    %vm3587 = vcmp.eq.f32.partialorder %v3480, inf
    %v3588 = vsel %vm3587, %v3480, %v3586
    %vm3589 = vcmp.eq.f32.partialorder %v3480, 0.0
    %v3590 = vand.u32 %v3480, 2147483648
    %v3591 = vsel %vm3589, %v3590, %v3588
    %v3592 = vrsqrt.pop %v3483
    %v3593 = vmul.f32 %v3592, %v3483
    %v3594 = vmul.f32 %v3593, %v3592
    %v3595 = vmul.f32 0.5, %v3594
    %v3596 = vsub.f32 1.5, %v3595
    %v3597 = vmul.f32 %v3592, %v3596
    %v3598 = vmul.f32 %v3483, %v3597
    %vm3599 = vcmp.eq.f32.partialorder %v3483, inf
    %v3600 = vsel %vm3599, %v3483, %v3598
    %vm3601 = vcmp.eq.f32.partialorder %v3483, 0.0
    %v3602 = vand.u32 %v3483, 2147483648
    %v3603 = vsel %vm3601, %v3602, %v3600
    %v3604 = vrsqrt.pop %v3486
    %v3605 = vmul.f32 %v3604, %v3486
    %v3606 = vmul.f32 %v3605, %v3604
    %v3607 = vmul.f32 0.5, %v3606
    %v3608 = vsub.f32 1.5, %v3607
    %v3609 = vmul.f32 %v3604, %v3608
    %v3610 = vmul.f32 %v3486, %v3609
    %vm3611 = vcmp.eq.f32.partialorder %v3486, inf
    %v3612 = vsel %vm3611, %v3486, %v3610
    %vm3613 = vcmp.eq.f32.partialorder %v3486, 0.0
    %v3614 = vand.u32 %v3486, 2147483648
    %v3615 = vsel %vm3613, %v3614, %v3612
    %v3616 = vrsqrt.pop %v3489
    %v3617 = vmul.f32 %v3616, %v3489
    %v3618 = vmul.f32 %v3617, %v3616
    %v3619 = vmul.f32 0.5, %v3618
    %v3620 = vsub.f32 1.5, %v3619
    %v3621 = vmul.f32 %v3616, %v3620
    %v3622 = vmul.f32 %v3489, %v3621
    %vm3623 = vcmp.eq.f32.partialorder %v3489, inf
    %v3624 = vsel %vm3623, %v3489, %v3622
    %vm3625 = vcmp.eq.f32.partialorder %v3489, 0.0
    %v3626 = vand.u32 %v3489, 2147483648
    %v3627 = vsel %vm3625, %v3626, %v3624
    %v3628 = vrsqrt.pop %v3492
    %v3629 = vmul.f32 %v3628, %v3492
    %v3630 = vmul.f32 %v3629, %v3628
    %v3631 = vmul.f32 0.5, %v3630
    %v3632 = vsub.f32 1.5, %v3631
    %v3633 = vmul.f32 %v3628, %v3632
    %v3634 = vmul.f32 %v3492, %v3633
    %vm3635 = vcmp.eq.f32.partialorder %v3492, inf
    %v3636 = vsel %vm3635, %v3492, %v3634
    %vm3637 = vcmp.eq.f32.partialorder %v3492, 0.0
    %v3638 = vand.u32 %v3492, 2147483648
    %v3639 = vsel %vm3637, %v3638, %v3636
    %v3640 = vrsqrt.pop %v3495
    %v3641 = vmul.f32 %v3640, %v3495
    %v3642 = vmul.f32 %v3641, %v3640
    %v3643 = vmul.f32 0.5, %v3642
    %v3644 = vsub.f32 1.5, %v3643
    %v3645 = vmul.f32 %v3640, %v3644
    %v3646 = vmul.f32 %v3495, %v3645
    %vm3647 = vcmp.eq.f32.partialorder %v3495, inf
    %v3648 = vsel %vm3647, %v3495, %v3646
    %vm3649 = vcmp.eq.f32.partialorder %v3495, 0.0
    %v3650 = vand.u32 %v3495, 2147483648
    %v3651 = vsel %vm3649, %v3650, %v3648
    %v3652 = vrsqrt.pop %v3498
    %v3653 = vmul.f32 %v3652, %v3498
    %v3654 = vmul.f32 %v3653, %v3652
    %v3655 = vmul.f32 0.5, %v3654
    %v3656 = vsub.f32 1.5, %v3655
    %v3657 = vmul.f32 %v3652, %v3656
    %v3658 = vmul.f32 %v3498, %v3657
    %vm3659 = vcmp.eq.f32.partialorder %v3498, inf
    %v3660 = vsel %vm3659, %v3498, %v3658
    %vm3661 = vcmp.eq.f32.partialorder %v3498, 0.0
    %v3662 = vand.u32 %v3498, 2147483648
    %v3663 = vsel %vm3661, %v3662, %v3660
    %v3664 = vrsqrt.pop %v3501
    %v3665 = vmul.f32 %v3664, %v3501
    %v3666 = vmul.f32 %v3665, %v3664
    %v3667 = vmul.f32 0.5, %v3666
    %v3668 = vsub.f32 1.5, %v3667
    %v3669 = vmul.f32 %v3664, %v3668
    %v3670 = vmul.f32 %v3501, %v3669
    %vm3671 = vcmp.eq.f32.partialorder %v3501, inf
    %v3672 = vsel %vm3671, %v3501, %v3670
    %vm3673 = vcmp.eq.f32.partialorder %v3501, 0.0
    %v3674 = vand.u32 %v3501, 2147483648
    %v3675 = vsel %vm3673, %v3674, %v3672
    %v3676 = vrsqrt.pop %v3504
    %v3677 = vmul.f32 %v3676, %v3504
    %v3678 = vmul.f32 %v3677, %v3676
    %v3679 = vmul.f32 0.5, %v3678
    %v3680 = vsub.f32 1.5, %v3679
    %v3681 = vmul.f32 %v3676, %v3680
    %v3682 = vmul.f32 %v3504, %v3681
    %vm3683 = vcmp.eq.f32.partialorder %v3504, inf
    %v3684 = vsel %vm3683, %v3504, %v3682
    %vm3685 = vcmp.eq.f32.partialorder %v3504, 0.0
    %v3686 = vand.u32 %v3504, 2147483648
    %v3687 = vsel %vm3685, %v3686, %v3684
    %v3688 = vrsqrt.pop %v3507
    %v3689 = vmul.f32 %v3688, %v3507
    %v3690 = vmul.f32 %v3689, %v3688
    %v3691 = vmul.f32 0.5, %v3690
    %v3692 = vsub.f32 1.5, %v3691
    %v3693 = vmul.f32 %v3688, %v3692
    %v3694 = vmul.f32 %v3507, %v3693
    %vm3695 = vcmp.eq.f32.partialorder %v3507, inf
    %v3696 = vsel %vm3695, %v3507, %v3694
    %vm3697 = vcmp.eq.f32.partialorder %v3507, 0.0
    %v3698 = vand.u32 %v3507, 2147483648
    %v3699 = vsel %vm3697, %v3698, %v3696
    %v3700 = vsub.f32 %v3519, 1.0
    %v3701 = vsub.f32 %v3531, 1.0
    %v3702 = vsub.f32 %v3543, 1.0
    %v3703 = vsub.f32 %v3555, 1.0
    %v3704 = vsub.f32 %v3567, 1.0
    %v3705 = vsub.f32 %v3579, 1.0
    %v3706 = vsub.f32 %v3591, 1.0
    %v3707 = vsub.f32 %v3603, 1.0
    %v3708 = vsub.f32 %v3615, 1.0
    %v3709 = vsub.f32 %v3627, 1.0
    %v3710 = vsub.f32 %v3639, 1.0
    %v3711 = vsub.f32 %v3651, 1.0
    %v3712 = vsub.f32 %v3663, 1.0
    %v3713 = vsub.f32 %v3675, 1.0
    %v3714 = vsub.f32 %v3687, 1.0
    %v3715 = vsub.f32 %v3699, 1.0
    %v3716 = vmul.f32 %v3700, %v3700
    %v3717 = vmul.f32 %v3701, %v3701
    %v3718 = vmul.f32 %v3702, %v3702
    %v3719 = vmul.f32 %v3703, %v3703
    %v3720 = vmul.f32 %v3704, %v3704
    %v3721 = vmul.f32 %v3705, %v3705
    %v3722 = vmul.f32 %v3706, %v3706
    %v3723 = vmul.f32 %v3707, %v3707
    %v3724 = vmul.f32 %v3708, %v3708
    %v3725 = vmul.f32 %v3709, %v3709
    %v3726 = vmul.f32 %v3710, %v3710
    %v3727 = vmul.f32 %v3711, %v3711
    %v3728 = vmul.f32 %v3712, %v3712
    %v3729 = vmul.f32 %v3713, %v3713
    %v3730 = vmul.f32 %v3714, %v3714
    %v3731 = vmul.f32 %v3715, %v3715
    %3748 = vrot.lane.b32.xlu0 %v3364, 1
    %v3749 = vpop.permute.xlu0 %3748
    %3750 = vrot.lane.b32.xlu0 %v3365, 1
    %v3751 = vpop.permute.xlu0 %3750
    %3752 = vrot.lane.b32.xlu0 %v3366, 1
    %v3753 = vpop.permute.xlu0 %3752
    %3754 = vrot.lane.b32.xlu0 %v3367, 1
    %v3755 = vpop.permute.xlu0 %3754
    %3756 = vrot.lane.b32.xlu0 %v3368, 1
    %v3757 = vpop.permute.xlu0 %3756
    %3758 = vrot.lane.b32.xlu0 %v3369, 1
    %v3759 = vpop.permute.xlu0 %3758
    %3760 = vrot.lane.b32.xlu0 %v3370, 1
    %v3761 = vpop.permute.xlu0 %3760
    %3762 = vrot.lane.b32.xlu0 %v3371, 1
    %v3763 = vpop.permute.xlu0 %3762
    %3764 = vrot.lane.b32.xlu0 %v3372, 1
    %v3765 = vpop.permute.xlu0 %3764
    %3766 = vrot.lane.b32.xlu0 %v3373, 1
    %v3767 = vpop.permute.xlu0 %3766
    %3768 = vrot.lane.b32.xlu0 %v3374, 1
    %v3769 = vpop.permute.xlu0 %3768
    %3770 = vrot.lane.b32.xlu0 %v3375, 1
    %v3771 = vpop.permute.xlu0 %3770
    %3772 = vrot.lane.b32.xlu0 %v3376, 1
    %v3773 = vpop.permute.xlu0 %3772
    %3774 = vrot.lane.b32.xlu0 %v3377, 1
    %v3775 = vpop.permute.xlu0 %3774
    %3776 = vrot.lane.b32.xlu0 %v3378, 1
    %v3777 = vpop.permute.xlu0 %3776
    %3778 = vrot.lane.b32.xlu0 %v3379, 1
    %v3779 = vpop.permute.xlu0 %3778
    %vm3796 = vcmask 31744
    %v3797 = vsel %vm3796, %v1953, %v3749
    %v3798 = vsel %vm3796, %v1956, %v3751
    %v3799 = vsel %vm3796, %v1959, %v3753
    %v3800 = vsel %vm3796, %v1962, %v3755
    %v3801 = vsel %vm3796, %v1965, %v3757
    %v3802 = vsel %vm3796, %v1968, %v3759
    %v3803 = vsel %vm3796, %v1971, %v3761
    %v3804 = vsel %vm3796, %v1974, %v3763
    %v3805 = vsel %vm3796, %v1977, %v3765
    %v3806 = vsel %vm3796, %v1980, %v3767
    %v3807 = vsel %vm3796, %v1983, %v3769
    %v3808 = vsel %vm3796, %v1986, %v3771
    %v3809 = vsel %vm3796, %v1989, %v3773
    %v3810 = vsel %vm3796, %v1992, %v3775
    %v3811 = vsel %vm3796, %v1995, %v3777
    %v3812 = vsel %vm3796, %v1998, %v3779
    %vm3813 = vcmask 39936
    %v3814 = vsel %vm3813, %v3797, %v3716
    %v3815 = vsel %vm3813, %v3798, %v3717
    %v3816 = vsel %vm3813, %v3799, %v3718
    %v3817 = vsel %vm3813, %v3800, %v3719
    %v3818 = vsel %vm3813, %v3801, %v3720
    %v3819 = vsel %vm3813, %v3802, %v3721
    %v3820 = vsel %vm3813, %v3803, %v3722
    %v3821 = vsel %vm3813, %v3804, %v3723
    %v3822 = vsel %vm3813, %v3805, %v3724
    %v3823 = vsel %vm3813, %v3806, %v3725
    %v3824 = vsel %vm3813, %v3807, %v3726
    %v3825 = vsel %vm3813, %v3808, %v3727
    %v3826 = vsel %vm3813, %v3809, %v3728
    %v3827 = vsel %vm3813, %v3810, %v3729
    %v3828 = vsel %vm3813, %v3811, %v3730
    %v3829 = vsel %vm3813, %v3812, %v3731
    %vm3830 = vcmask 48128
    %3831 = vst.msk [vmem:[%s8] sm:$0xff] %vm3830, %v3814
    %3832 = vst.msk [vmem:[%s8 + $0x8] sm:$0xff] %vm3830, %v3815
    %3833 = vst.msk [vmem:[%s8 + $0x10] sm:$0xff] %vm3830, %v3816
    %3834 = vst.msk [vmem:[%s8 + $0x18] sm:$0xff] %vm3830, %v3817
    %3835 = vst.msk [vmem:[%s8 + $0x20] sm:$0xff] %vm3830, %v3818
    %3836 = vst.msk [vmem:[%s8 + $0x28] sm:$0xff] %vm3830, %v3819
    %3837 = vst.msk [vmem:[%s8 + $0x30] sm:$0xff] %vm3830, %v3820
    %3838 = vst.msk [vmem:[%s8 + $0x38] sm:$0xff] %vm3830, %v3821
    %3839 = vst.msk [vmem:[%s8 + $0x40] sm:$0xff] %vm3830, %v3822
    %3840 = vst.msk [vmem:[%s8 + $0x48] sm:$0xff] %vm3830, %v3823
    %3841 = vst.msk [vmem:[%s8 + $0x50] sm:$0xff] %vm3830, %v3824
    %3842 = vst.msk [vmem:[%s8 + $0x58] sm:$0xff] %vm3830, %v3825
    %3843 = vst.msk [vmem:[%s8 + $0x60] sm:$0xff] %vm3830, %v3826
    %3844 = vst.msk [vmem:[%s8 + $0x68] sm:$0xff] %vm3830, %v3827
    %3845 = vst.msk [vmem:[%s8 + $0x70] sm:$0xff] %vm3830, %v3828
    %3846 = vst.msk [vmem:[%s8 + $0x78] sm:$0xff] %vm3830, %v3829
    // Predicated region
    $region38: #{neus_aggregation_forward.1} parent=1 // pred_check
      _
    $region39: #{neus_aggregation_forward.1} parent=1 // pred_check_branch
      %3848 = sbr.rel (0) target = $region41
    $region40: #{neus_aggregation_forward.1} parent=1 // pred_region
      _
    $region41: #{neus_aggregation_forward.1} parent=1 // pred_fallthru
      _
    // Predicated region
    $region42: #{neus_aggregation_forward.1} parent=1 // pred_check
      _
    $region43: #{neus_aggregation_forward.1} parent=1 // pred_check_branch
      %3850 = sbr.rel (0) target = $region45
    $region44: #{neus_aggregation_forward.1} parent=1 // pred_region
      _
    $region45: #{neus_aggregation_forward.1} parent=1 // pred_fallthru
      _
    %3851 = vsyncpa [#allocation3], 1

</llo_original>
